<compile_context>
chip_gen: v7x
topology: tpu7x:2x2x1
jax: 0.10.0
libtpu: 0.0.40
codegen_flags: <defaults>
</compile_context>

<pallas_src>
import functools
import math

import jax
import jax.numpy as jnp
from jax.experimental import pallas as pl
from jax.experimental.pallas import tpu as pltpu


# ----------------------------- Pallas kernels -------------------------------


def _conv1_pool_kernel(p1_ref, w1_ref, b1_ref, o_ref):
    """conv1 + bias + 2x2 max-pool + relu, transposed (lane-dense) layout.

    p1_ref : (32, 4*NCOL) im2col patches (K=25 padded to 32 on sublanes); the
             4 pool-window corners are stacked along lanes, each corner slab
             has NCOL = n_pad*144 columns ordered (image, ph, pw).
    o_ref  : (10, NCOL) pooled / relu'd conv1 activation (lane-dense).
    """
    ncol = o_ref.shape[1]
    # ONE MXU push for all 4 pool corners, then a VPU max over lane slabs.
    acc = jnp.dot(w1_ref[...], p1_ref[...], preferred_element_type=jnp.float32)
    pooled = jnp.maximum(
        jnp.maximum(acc[:, 0 * ncol:1 * ncol], acc[:, 1 * ncol:2 * ncol]),
        jnp.maximum(acc[:, 2 * ncol:3 * ncol], acc[:, 3 * ncol:4 * ncol]))
    o_ref[...] = jnp.maximum(pooled + b1_ref[...], 0.0)


def _tail_kernel(p2_ref, w2_ref, b2_ref, fw1_ref, fb1_ref, fw2_ref, fb2_ref,
                 out_ref, flat_ref, *, batch_first):
    """conv2 + bias + maxpool2x2 + relu + flatten + fc1 + relu + fc2
    + row-masked log_softmax (only the first `batch_first` rows = func(x)).

    p2_ref  : (4*16*n_pad, 256) conv2 im2col patches, rows ordered
              (pool-corner, spatial-position, image); K=250 padded to 256.
    flat_ref: (n_pad, 320) VMEM scratch for the NCHW-flattened features.
    out_ref : (n_pad, 10) final logits / log-probs.
    """
    n_pad = out_ref.shape[0]
    npr = p2_ref.shape[0] // 4          # rows per pool corner = 16 * n_pad

    # conv2 as ONE matmul, then 2x2 max-pool over the 4 corner row slabs
    # (slab offsets are multiples of 8 because the batch was padded to 8).
    acc = jnp.dot(p2_ref[...], w2_ref[...], preferred_element_type=jnp.float32)
    pooled = jnp.maximum(
        jnp.maximum(acc[0 * npr:1 * npr], acc[1 * npr:2 * npr]),
        jnp.maximum(acc[2 * npr:3 * npr], acc[3 * npr:4 * npr]))
    pooled = jnp.maximum(pooled + b2_ref[...], 0.0)      # (16*n_pad, 20)

    # NCHW flatten -> (n_pad, 320): 16 aligned (n_pad, 20) slab copies into
    # lane blocks of the scratch (replaces the former 16-matmul fc1 loop;
    # fc1's weight rows were permuted host-side to match this order).
    for p in range(16):
        flat_ref[:, p * 20:(p + 1) * 20] = pooled[p * n_pad:(p + 1) * n_pad, :]

    # fc1 as ONE matmul + relu, then fc2.
    h = jnp.dot(flat_ref[...], fw1_ref[...],
                preferred_element_type=jnp.float32) + fb1_ref[...]
    h = jnp.maximum(h, 0.0)                              # (n_pad, 50)
    logits = jnp.dot(h, fw2_ref[...],
                     preferred_element_type=jnp.float32) + fb2_ref[...]

    # log_softmax only for the first `batch_first` rows (func(x)); funcy /
    # funcz return raw logits, matching the PyTorch reference.
    m = jnp.max(logits, axis=-1, keepdims=True)
    lse = m + jnp.log(jnp.sum(jnp.exp(logits - m), axis=-1, keepdims=True))
    row = jax.lax.broadcasted_iota(jnp.int32, logits.shape, 0)
    out_ref[...] = jnp.where(row < batch_first, logits - lse, logits)


# ------------------------- XLA-side (jit-fused) glue -------------------------


def _build_conv1_patches_t(x):
    """x: (N, 28, 28) -> (32, 4*N*144) transposed im2col patches for conv1.

    Columns ordered (pool-corner, image, ph, pw); K (=25) padded to 32."""
    n = x.shape[0]
    cols = [x[:, i:i + 24, j:j + 24] for i in range(5) for j in range(5)]
    p = jnp.stack(cols, axis=-1)                  # (N, 24, 24, 25)
    p = p.reshape(n, 12, 2, 12, 2, 25)            # (N, ph, di, pw, dj, K)
    p = p.transpose(2, 4, 0, 1, 3, 5)             # (di, dj, N, ph, pw, K)
    p = p.reshape(4 * n * 144, 25)
    p = jnp.pad(p, ((0, 0), (0, 7)))              # K: 25 -> 32
    return p.T                                    # (32, 4*N*144)


def _build_conv2_patches(a):
    """a: (N, 12, 12, 10) -> (4*16*N, 256) im2col patches for conv2.

    Row order (pool-corner, ph, pw, image); column order (ci, di, dj) matches
    PyTorch's w2.reshape(20, 250). K (=250) padded to 256."""
    n = a.shape[0]
    cols = [a[:, i:i + 8, j:j + 8, :] for i in range(5) for j in range(5)]
    p = jnp.stack(cols, axis=-2)                  # (N, 8, 8, 25, 10)
    p = p.transpose(0, 1, 2, 4, 3)                # (N, 8, 8, 10, 25)
    p = p.reshape(n, 4, 2, 4, 2, 250)             # (N, ph, di, pw, dj, 250)
    p = p.transpose(2, 4, 1, 3, 0, 5)             # (di, dj, ph, pw, N, 250)
    p = p.reshape(4 * 16 * n, 250)
    return jnp.pad(p, ((0, 0), (0, 6)))           # K: 250 -> 256


@jax.jit
def net_forward(x, y, z, params):
    """Returns [log_softmax(trunk(x)), trunk(y), trunk(z)] (PyTorch eval mode)."""
    w1, b1, w2, b2, fw1, fb1, fw2, fb2 = params
    bsz = x.shape[0]
    xb = jnp.concatenate([x, y, z], axis=0)       # (3B, 1, 28, 28)
    n = xb.shape[0]
    n_pad = -(-n // 8) * 8                        # pad batch to a multiple of 8
    xb = xb.reshape(n, 28, 28)                    # Cin = 1
    xb = jnp.pad(xb, ((0, n_pad - n), (0, 0), (0, 0)))

    # ---- weight prep (tiny, fused into the jit) ----
    w1t = jnp.pad(w1.reshape(10, 25), ((0, 0), (0, 7)))       # (10, 32)
    b1c = b1.reshape(10, 1)
    w2m = jnp.pad(w2.reshape(20, 250).T, ((0, 6), (0, 0)))    # (256, 20)
    b2r = b2.reshape(1, 20)
    # Permute fc1 rows so block p (= ph*4+pw) of 20 rows matches the channels
    # of the pooled conv2 activation at spatial position p.
    fw1b = fw1.T.reshape(20, 16, 50).transpose(1, 0, 2).reshape(320, 50)
    fb1r = fb1.reshape(1, 50)
    fw2m = fw2.T                                              # (50, 10)
    fb2r = fb2.reshape(1, 10)

    ncol = n_pad * 144

    # ---- Kernel A: conv1 + bias + 2x2 max-pool + relu (single program) ----
    p1t = _build_conv1_patches_t(xb)                          # (32, 4*ncol)
    act1t = pl.pallas_call(
        _conv1_pool_kernel,
        out_shape=jax.ShapeDtypeStruct((10, ncol), jnp.float32),
        in_specs=[pl.BlockSpec(memory_space=pltpu.MemorySpace.VMEM)] * 3,
        out_specs=pl.BlockSpec(memory_space=pltpu.MemorySpace.VMEM),
        cost_estimate=pl.CostEstimate(
            flops=2 * 10 * 32 * 4 * ncol,
            transcendentals=0,
            bytes_accessed=4 * (32 * 4 * ncol + 10 * 32 + 10 + 10 * ncol)),
    )(p1t, w1t, b1c)                                          # (10, ncol)

    # ---- Kernel B: conv2 + pool + relu + fc1 + relu + fc2 + log_softmax ----
    a1 = act1t.reshape(10, n_pad, 12, 12).transpose(1, 2, 3, 0)  # (n_pad,12,12,10)
    p2 = _build_conv2_patches(a1)                             # (4*16*n_pad, 256)
    out = pl.pallas_call(
        functools.partial(_tail_kernel, batch_first=bsz),
        out_shape=jax.ShapeDtypeStruct((n_pad, 10), jnp.float32),
        in_specs=[pl.BlockSpec(memory_space=pltpu.MemorySpace.VMEM)] * 7,
        out_specs=pl.BlockSpec(memory_space=pltpu.MemorySpace.VMEM),
        scratch_shapes=[pltpu.VMEM((n_pad, 320), jnp.float32)],
        cost_estimate=pl.CostEstimate(
            flops=2 * (64 * n_pad * 256 * 20 + n_pad * 320 * 50
                       + n_pad * 50 * 10),
            transcendentals=11 * n_pad,
            bytes_accessed=4 * (64 * n_pad * 256 + 256 * 20 + 20 + 320 * 50
                                + 50 + 50 * 10 + 10 + n_pad * 10)),
    )(p2, w2m, b2r, fw1b, fb1r, fw2m, fb2r)                   # (n_pad, 10)

    return [out[:bsz], out[bsz:2 * bsz], out[2 * bsz:3 * bsz]]


# ----------------------------- parameters & reference ------------------------


def init_params(key):
    ks = jax.random.split(key, 8)

    def u(k, shape, fan_in):
        bound = 1.0 / math.sqrt(fan_in)
        return jax.random.uniform(k, shape, jnp.float32, -bound, bound)

    w1 = u(ks[0], (10, 1, 5, 5), 1 * 5 * 5)
    b1 = u(ks[1], (10,), 1 * 5 * 5)
    w2 = u(ks[2], (20, 10, 5, 5), 10 * 5 * 5)
    b2 = u(ks[3], (20,), 10 * 5 * 5)
    fw1 = u(ks[4], (50, 320), 320)
    fb1 = u(ks[5], (50,), 320)
    fw2 = u(ks[6], (10, 50), 50)
    fb2 = u(ks[7], (10,), 50)
    return (w1, b1, w2, b2, fw1, fb1, fw2, fb2)


def _ref_trunk(x, params):
    """Pure-JAX reference of the shared trunk (eval mode), raw logits out."""
    w1, b1, w2, b2, fw1, fb1, fw2, fb2 = params

    def conv(v, w, b):
        o = jax.lax.conv_general_dilated(
            v, w, (1, 1), "VALID", dimension_numbers=("NCHW", "OIHW", "NCHW"))
        return o + b.reshape(1, -1, 1, 1)

    def pool(v):
        nb, c, hh, ww = v.shape
        return jnp.max(v.reshape(nb, c, hh // 2, 2, ww // 2, 2), axis=(3, 5))

    a = jax.nn.relu(pool(conv(x, w1, b1)))
    a = jax.nn.relu(pool(conv(a, w2, b2)))
    a = a.reshape(a.shape[0], 320)
    h = jax.nn.relu(a @ fw1.T + fb1)
    return h @ fw2.T + fb2


if __name__ == "__main__":
    key = jax.random.PRNGKey(0)
    pkey, xkey, ykey, zkey = jax.random.split(key, 4)
    params = init_params(pkey)

    # MNIST-style inputs: (batch=2, channels=1, 28, 28) -- required so the
    # flatten produces exactly 320 features for fc1.
    x = jax.random.normal(xkey, (2, 1, 28, 28), jnp.float32)
    y = jax.random.normal(ykey, (2, 1, 28, 28), jnp.float32)
    z = jax.random.normal(zkey, (2, 1, 28, 28), jnp.float32)

    out = net_forward(x, y, z, params)
    out = [jax.block_until_ready(o) for o in out]
    assert out[0].shape == (2, 10) and out[1].shape == (2, 10) \
        and out[2].shape == (2, 10)

    # Sanity check vs a pure-JAX reference (loose tol: MXU vs XLA matmul paths).
    ref = [jax.nn.log_softmax(_ref_trunk(x, params), axis=-1),
           _ref_trunk(y, params), _ref_trunk(z, params)]
    for got, want in zip(out, ref):
        err = float(jnp.max(jnp.abs(got - want)))
        assert err < 5e-2, f"mismatch vs reference: max abs err {err}"

    print("KERNEL_OK")
</pallas_src>

<mosaic_0001>
module attributes {stable_mosaic.version = 11 : i64} {
  func.func @_conv1_pool_kernel(%arg0: memref<32x4608xf32, #tpu.memory_space<vmem>>, %arg1: memref<10x32xf32, #tpu.memory_space<vmem>>, %arg2: memref<10x1xf32, #tpu.memory_space<vmem>>, %arg3: memref<10x1152xf32, #tpu.memory_space<vmem>>) attributes {dimension_semantics = [], scalar_prefetch = 0 : i64, scratch_operands = 0 : i64, tpu.core_type = #tpu.core_type<tc>} {
    %c0 = arith.constant 0 : index
    %c0_0 = arith.constant 0 : index
    %0 = vector.load %arg1[%c0, %c0_0] : memref<10x32xf32, #tpu.memory_space<vmem>>, vector<10x32xf32>
    %c0_1 = arith.constant 0 : index
    %c0_2 = arith.constant 0 : index
    %1 = vector.load %arg0[%c0_1, %c0_2] : memref<32x4608xf32, #tpu.memory_space<vmem>>, vector<32x4608xf32>
    %cst = arith.constant dense<0.000000e+00> : vector<10x4608xf32>
    %2 = tpu.matmul %0, %1, %cst {dimension_numbers = #tpu.dot_dimension_numbers<[1], [0], [0], [1], [0, 0, 1, 1], [], []>} : vector<10x32xf32>, vector<32x4608xf32>, vector<10x4608xf32> -> vector<10x4608xf32>
    %3 = vector.extract_strided_slice %2 {offsets = [0, 0], sizes = [10, 1152], strides = [1, 1]} : vector<10x4608xf32> to vector<10x1152xf32>
    %4 = vector.extract_strided_slice %2 {offsets = [0, 1152], sizes = [10, 1152], strides = [1, 1]} : vector<10x4608xf32> to vector<10x1152xf32>
    %5 = arith.maximumf %3, %4 : vector<10x1152xf32>
    %6 = vector.extract_strided_slice %2 {offsets = [0, 2304], sizes = [10, 1152], strides = [1, 1]} : vector<10x4608xf32> to vector<10x1152xf32>
    %7 = vector.extract_strided_slice %2 {offsets = [0, 3456], sizes = [10, 1152], strides = [1, 1]} : vector<10x4608xf32> to vector<10x1152xf32>
    %8 = arith.maximumf %6, %7 : vector<10x1152xf32>
    %9 = arith.maximumf %5, %8 : vector<10x1152xf32>
    %c0_3 = arith.constant 0 : index
    %c0_4 = arith.constant 0 : index
    %10 = vector.load %arg2[%c0_3, %c0_4] : memref<10x1xf32, #tpu.memory_space<vmem>>, vector<10x1xf32>
    %11 = vector.broadcast %10 : vector<10x1xf32> to vector<10x1152xf32>
    %12 = arith.addf %9, %11 : vector<10x1152xf32>
    %cst_5 = arith.constant 0.000000e+00 : f32
    %13 = vector.broadcast %cst_5 : f32 to vector<10x1152xf32>
    %14 = arith.maximumf %12, %13 : vector<10x1152xf32>
    %c0_6 = arith.constant 0 : index
    %c0_7 = arith.constant 0 : index
    %15 = vector.load %arg3[%c0_6, %c0_7] : memref<10x1152xf32, #tpu.memory_space<vmem>>, vector<10x1152xf32>
    tpu.vector_store %arg3[%c0_6, %c0_7], %14 {strides = array<i32>} : memref<10x1152xf32, #tpu.memory_space<vmem>>, vector<10x1152xf32>,
    return
  }
}

module attributes {stable_mosaic.version = 11 : i64} {
  func.func @_tail_kernel(%arg0: memref<512x256xf32, #tpu.memory_space<vmem>>, %arg1: memref<256x20xf32, #tpu.memory_space<vmem>>, %arg2: memref<1x20xf32, #tpu.memory_space<vmem>>, %arg3: memref<320x50xf32, #tpu.memory_space<vmem>>, %arg4: memref<1x50xf32, #tpu.memory_space<vmem>>, %arg5: memref<50x10xf32, #tpu.memory_space<vmem>>, %arg6: memref<1x10xf32, #tpu.memory_space<vmem>>, %arg7: memref<8x10xf32, #tpu.memory_space<vmem>>, %arg8: memref<8x320xf32, #tpu.memory_space<vmem>>) attributes {dimension_semantics = [], scalar_prefetch = 0 : i64, scratch_operands = 1 : i64, tpu.core_type = #tpu.core_type<tc>} {
    %c0 = arith.constant 0 : index
    %c0_0 = arith.constant 0 : index
    %0 = vector.load %arg0[%c0, %c0_0] : memref<512x256xf32, #tpu.memory_space<vmem>>, vector<512x256xf32>
    %c0_1 = arith.constant 0 : index
    %c0_2 = arith.constant 0 : index
    %1 = vector.load %arg1[%c0_1, %c0_2] : memref<256x20xf32, #tpu.memory_space<vmem>>, vector<256x20xf32>
    %cst = arith.constant dense<0.000000e+00> : vector<512x20xf32>
    %2 = tpu.matmul %0, %1, %cst {dimension_numbers = #tpu.dot_dimension_numbers<[1], [0], [0], [1], [0, 0, 1, 1], [], []>} : vector<512x256xf32>, vector<256x20xf32>, vector<512x20xf32> -> vector<512x20xf32>
    %3 = vector.extract_strided_slice %2 {offsets = [0, 0], sizes = [128, 20], strides = [1, 1]} : vector<512x20xf32> to vector<128x20xf32>
    %4 = vector.extract_strided_slice %2 {offsets = [128, 0], sizes = [128, 20], strides = [1, 1]} : vector<512x20xf32> to vector<128x20xf32>
    %5 = arith.maximumf %3, %4 : vector<128x20xf32>
    %6 = vector.extract_strided_slice %2 {offsets = [256, 0], sizes = [128, 20], strides = [1, 1]} : vector<512x20xf32> to vector<128x20xf32>
    %7 = vector.extract_strided_slice %2 {offsets = [384, 0], sizes = [128, 20], strides = [1, 1]} : vector<512x20xf32> to vector<128x20xf32>
    %8 = arith.maximumf %6, %7 : vector<128x20xf32>
    %9 = arith.maximumf %5, %8 : vector<128x20xf32>
    %c0_3 = arith.constant 0 : index
    %c0_4 = arith.constant 0 : index
    %10 = vector.load %arg2[%c0_3, %c0_4] : memref<1x20xf32, #tpu.memory_space<vmem>>, vector<1x20xf32>
    %11 = vector.broadcast %10 : vector<1x20xf32> to vector<128x20xf32>
    %12 = arith.addf %9, %11 : vector<128x20xf32>
    %cst_5 = arith.constant 0.000000e+00 : f32
    %13 = vector.broadcast %cst_5 : f32 to vector<128x20xf32>
    %14 = arith.maximumf %12, %13 : vector<128x20xf32>
    %15 = vector.extract_strided_slice %14 {offsets = [0, 0], sizes = [8, 20], strides = [1, 1]} : vector<128x20xf32> to vector<8x20xf32>
    %c0_6 = arith.constant 0 : index
    %c0_7 = arith.constant 0 : index
    %16 = vector.load %arg8[%c0_6, %c0_7] : memref<8x320xf32, #tpu.memory_space<vmem>>, vector<8x20xf32>
    tpu.vector_store %arg8[%c0_6, %c0_7], %15 {strides = array<i32>} : memref<8x320xf32, #tpu.memory_space<vmem>>, vector<8x20xf32>,
    %17 = vector.extract_strided_slice %14 {offsets = [8, 0], sizes = [8, 20], strides = [1, 1]} : vector<128x20xf32> to vector<8x20xf32>
    %c0_8 = arith.constant 0 : index
    %c20 = arith.constant 20 : index
    %18 = vector.load %arg8[%c0_8, %c20] : memref<8x320xf32, #tpu.memory_space<vmem>>, vector<8x20xf32>
    tpu.vector_store %arg8[%c0_8, %c20], %17 {strides = array<i32>} : memref<8x320xf32, #tpu.memory_space<vmem>>, vector<8x20xf32>,
    %19 = vector.extract_strided_slice %14 {offsets = [16, 0], sizes = [8, 20], strides = [1, 1]} : vector<128x20xf32> to vector<8x20xf32>
    %c0_9 = arith.constant 0 : index
    %c40 = arith.constant 40 : index
    %20 = vector.load %arg8[%c0_9, %c40] : memref<8x320xf32, #tpu.memory_space<vmem>>, vector<8x20xf32>
    tpu.vector_store %arg8[%c0_9, %c40], %19 {strides = array<i32>} : memref<8x320xf32, #tpu.memory_space<vmem>>, vector<8x20xf32>,
    %21 = vector.extract_strided_slice %14 {offsets = [24, 0], sizes = [8, 20], strides = [1, 1]} : vector<128x20xf32> to vector<8x20xf32>
    %c0_10 = arith.constant 0 : index
    %c60 = arith.constant 60 : index
    %22 = vector.load %arg8[%c0_10, %c60] : memref<8x320xf32, #tpu.memory_space<vmem>>, vector<8x20xf32>
    tpu.vector_store %arg8[%c0_10, %c60], %21 {strides = array<i32>} : memref<8x320xf32, #tpu.memory_space<vmem>>, vector<8x20xf32>,
    %23 = vector.extract_strided_slice %14 {offsets = [32, 0], sizes = [8, 20], strides = [1, 1]} : vector<128x20xf32> to vector<8x20xf32>
    %c0_11 = arith.constant 0 : index
    %c80 = arith.constant 80 : index
    %24 = vector.load %arg8[%c0_11, %c80] : memref<8x320xf32, #tpu.memory_space<vmem>>, vector<8x20xf32>
    tpu.vector_store %arg8[%c0_11, %c80], %23 {strides = array<i32>} : memref<8x320xf32, #tpu.memory_space<vmem>>, vector<8x20xf32>,
    %25 = vector.extract_strided_slice %14 {offsets = [40, 0], sizes = [8, 20], strides = [1, 1]} : vector<128x20xf32> to vector<8x20xf32>
    %c0_12 = arith.constant 0 : index
    %c100 = arith.constant 100 : index
    %26 = vector.load %arg8[%c0_12, %c100] : memref<8x320xf32, #tpu.memory_space<vmem>>, vector<8x20xf32>
    tpu.vector_store %arg8[%c0_12, %c100], %25 {strides = array<i32>} : memref<8x320xf32, #tpu.memory_space<vmem>>, vector<8x20xf32>,
    %27 = vector.extract_strided_slice %14 {offsets = [48, 0], sizes = [8, 20], strides = [1, 1]} : vector<128x20xf32> to vector<8x20xf32>
    %c0_13 = arith.constant 0 : index
    %c120 = arith.constant 120 : index
    %28 = vector.load %arg8[%c0_13, %c120] : memref<8x320xf32, #tpu.memory_space<vmem>>, vector<8x20xf32>
    tpu.vector_store %arg8[%c0_13, %c120], %27 {strides = array<i32>} : memref<8x320xf32, #tpu.memory_space<vmem>>, vector<8x20xf32>,
    %29 = vector.extract_strided_slice %14 {offsets = [56, 0], sizes = [8, 20], strides = [1, 1]} : vector<128x20xf32> to vector<8x20xf32>
    %c0_14 = arith.constant 0 : index
    %c140 = arith.constant 140 : index
    %30 = vector.load %arg8[%c0_14, %c140] : memref<8x320xf32, #tpu.memory_space<vmem>>, vector<8x20xf32>
    tpu.vector_store %arg8[%c0_14, %c140], %29 {strides = array<i32>} : memref<8x320xf32, #tpu.memory_space<vmem>>, vector<8x20xf32>,
    %31 = vector.extract_strided_slice %14 {offsets = [64, 0], sizes = [8, 20], strides = [1, 1]} : vector<128x20xf32> to vector<8x20xf32>
    %c0_15 = arith.constant 0 : index
    %c160 = arith.constant 160 : index
    %32 = vector.load %arg8[%c0_15, %c160] : memref<8x320xf32, #tpu.memory_space<vmem>>, vector<8x20xf32>
    tpu.vector_store %arg8[%c0_15, %c160], %31 {strides = array<i32>} : memref<8x320xf32, #tpu.memory_space<vmem>>, vector<8x20xf32>,
    %33 = vector.extract_strided_slice %14 {offsets = [72, 0], sizes = [8, 20], strides = [1, 1]} : vector<128x20xf32> to vector<8x20xf32>
    %c0_16 = arith.constant 0 : index
    %c180 = arith.constant 180 : index
    %34 = vector.load %arg8[%c0_16, %c180] : memref<8x320xf32, #tpu.memory_space<vmem>>, vector<8x20xf32>
    tpu.vector_store %arg8[%c0_16, %c180], %33 {strides = array<i32>} : memref<8x320xf32, #tpu.memory_space<vmem>>, vector<8x20xf32>,
    %35 = vector.extract_strided_slice %14 {offsets = [80, 0], sizes = [8, 20], strides = [1, 1]} : vector<128x20xf32> to vector<8x20xf32>
    %c0_17 = arith.constant 0 : index
    %c200 = arith.constant 200 : index
    %36 = vector.load %arg8[%c0_17, %c200] : memref<8x320xf32, #tpu.memory_space<vmem>>, vector<8x20xf32>
    tpu.vector_store %arg8[%c0_17, %c200], %35 {strides = array<i32>} : memref<8x320xf32, #tpu.memory_space<vmem>>, vector<8x20xf32>,
    %37 = vector.extract_strided_slice %14 {offsets = [88, 0], sizes = [8, 20], strides = [1, 1]} : vector<128x20xf32> to vector<8x20xf32>
    %c0_18 = arith.constant 0 : index
    %c220 = arith.constant 220 : index
    %38 = vector.load %arg8[%c0_18, %c220] : memref<8x320xf32, #tpu.memory_space<vmem>>, vector<8x20xf32>
    tpu.vector_store %arg8[%c0_18, %c220], %37 {strides = array<i32>} : memref<8x320xf32, #tpu.memory_space<vmem>>, vector<8x20xf32>,
    %39 = vector.extract_strided_slice %14 {offsets = [96, 0], sizes = [8, 20], strides = [1, 1]} : vector<128x20xf32> to vector<8x20xf32>
    %c0_19 = arith.constant 0 : index
    %c240 = arith.constant 240 : index
    %40 = vector.load %arg8[%c0_19, %c240] : memref<8x320xf32, #tpu.memory_space<vmem>>, vector<8x20xf32>
    tpu.vector_store %arg8[%c0_19, %c240], %39 {strides = array<i32>} : memref<8x320xf32, #tpu.memory_space<vmem>>, vector<8x20xf32>,
    %41 = vector.extract_strided_slice %14 {offsets = [104, 0], sizes = [8, 20], strides = [1, 1]} : vector<128x20xf32> to vector<8x20xf32>
    %c0_20 = arith.constant 0 : index
    %c260 = arith.constant 260 : index
    %42 = vector.load %arg8[%c0_20, %c260] : memref<8x320xf32, #tpu.memory_space<vmem>>, vector<8x20xf32>
    tpu.vector_store %arg8[%c0_20, %c260], %41 {strides = array<i32>} : memref<8x320xf32, #tpu.memory_space<vmem>>, vector<8x20xf32>,
    %43 = vector.extract_strided_slice %14 {offsets = [112, 0], sizes = [8, 20], strides = [1, 1]} : vector<128x20xf32> to vector<8x20xf32>
    %c0_21 = arith.constant 0 : index
    %c280 = arith.constant 280 : index
    %44 = vector.load %arg8[%c0_21, %c280] : memref<8x320xf32, #tpu.memory_space<vmem>>, vector<8x20xf32>
    tpu.vector_store %arg8[%c0_21, %c280], %43 {strides = array<i32>} : memref<8x320xf32, #tpu.memory_space<vmem>>, vector<8x20xf32>,
    %45 = vector.extract_strided_slice %14 {offsets = [120, 0], sizes = [8, 20], strides = [1, 1]} : vector<128x20xf32> to vector<8x20xf32>
    %c0_22 = arith.constant 0 : index
    %c300 = arith.constant 300 : index
    %46 = vector.load %arg8[%c0_22, %c300] : memref<8x320xf32, #tpu.memory_space<vmem>>, vector<8x20xf32>
    tpu.vector_store %arg8[%c0_22, %c300], %45 {strides = array<i32>} : memref<8x320xf32, #tpu.memory_space<vmem>>, vector<8x20xf32>,
    %c0_23 = arith.constant 0 : index
    %c0_24 = arith.constant 0 : index
    %47 = vector.load %arg8[%c0_23, %c0_24] : memref<8x320xf32, #tpu.memory_space<vmem>>, vector<8x320xf32>
    %c0_25 = arith.constant 0 : index
    %c0_26 = arith.constant 0 : index
    %48 = vector.load %arg3[%c0_25, %c0_26] : memref<320x50xf32, #tpu.memory_space<vmem>>, vector<320x50xf32>
    %cst_27 = arith.constant dense<0.000000e+00> : vector<8x50xf32>
    %49 = tpu.matmul %47, %48, %cst_27 {dimension_numbers = #tpu.dot_dimension_numbers<[1], [0], [0], [1], [0, 0, 1, 1], [], []>} : vector<8x320xf32>, vector<320x50xf32>, vector<8x50xf32> -> vector<8x50xf32>
    %c0_28 = arith.constant 0 : index
    %c0_29 = arith.constant 0 : index
    %50 = vector.load %arg4[%c0_28, %c0_29] : memref<1x50xf32, #tpu.memory_space<vmem>>, vector<1x50xf32>
    %51 = vector.broadcast %50 : vector<1x50xf32> to vector<8x50xf32>
    %52 = arith.addf %49, %51 : vector<8x50xf32>
    %cst_30 = arith.constant 0.000000e+00 : f32
    %53 = vector.broadcast %cst_30 : f32 to vector<8x50xf32>
    %54 = arith.maximumf %52, %53 : vector<8x50xf32>
    %c0_31 = arith.constant 0 : index
    %c0_32 = arith.constant 0 : index
    %55 = vector.load %arg5[%c0_31, %c0_32] : memref<50x10xf32, #tpu.memory_space<vmem>>, vector<50x10xf32>
    %cst_33 = arith.constant dense<0.000000e+00> : vector<8x10xf32>
    %56 = tpu.matmul %54, %55, %cst_33 {dimension_numbers = #tpu.dot_dimension_numbers<[1], [0], [0], [1], [0, 0, 1, 1], [], []>} : vector<8x50xf32>, vector<50x10xf32>, vector<8x10xf32> -> vector<8x10xf32>
    %c0_34 = arith.constant 0 : index
    %c0_35 = arith.constant 0 : index
    %57 = vector.load %arg6[%c0_34, %c0_35] : memref<1x10xf32, #tpu.memory_space<vmem>>, vector<1x10xf32>
    %58 = vector.broadcast %57 : vector<1x10xf32> to vector<8x10xf32>
    %59 = arith.addf %56, %58 : vector<8x10xf32>
    %cst_36 = arith.constant dense<0xFF800000> : vector<8xf32>
    %60 = vector.multi_reduction <maximumf>, %59, %cst_36 [1] : vector<8x10xf32> to vector<8xf32>
    %61 = vector.shape_cast %60 : vector<8xf32> to vector<8x1xf32>
    %62 = vector.broadcast %61 : vector<8x1xf32> to vector<8x10xf32>
    %63 = arith.subf %59, %62 : vector<8x10xf32>
    %64 = math.exp %63 : vector<8x10xf32>
    %cst_37 = arith.constant dense<0.000000e+00> : vector<8xf32>
    %65 = vector.multi_reduction <add>, %64, %cst_37 [1] : vector<8x10xf32> to vector<8xf32>
    %66 = vector.shape_cast %65 : vector<8xf32> to vector<8x1xf32>
    %67 = math.log %66 : vector<8x1xf32>
    %68 = arith.addf %61, %67 : vector<8x1xf32>
    %69 = tpu.iota {dimensions = array<i32: 0>} : vector<8x10xi32>
    %c2_i32 = arith.constant 2 : i32
    %70 = vector.broadcast %c2_i32 : i32 to vector<8x10xi32>
    %71 = arith.cmpi slt, %69, %70 : vector<8x10xi32>
    %72 = vector.broadcast %68 : vector<8x1xf32> to vector<8x10xf32>
    %73 = arith.subf %59, %72 : vector<8x10xf32>
    %74 = arith.select %71, %73, %59 : vector<8x10xi1>, vector<8x10xf32>
    %c0_38 = arith.constant 0 : index
    %c0_39 = arith.constant 0 : index
    %75 = vector.load %arg7[%c0_38, %c0_39] : memref<8x10xf32, #tpu.memory_space<vmem>>, vector<8x10xf32>
    tpu.vector_store %arg7[%c0_38, %c0_39], %74 {strides = array<i32>} : memref<8x10xf32, #tpu.memory_space<vmem>>, vector<8x10xf32>,
    return
  }
}

</mosaic_0001>

<llo_original>
// kernel: net_forward.2
$region0: #{net_forward.2}
  #allocation0 [shape = 'u32[]', space=smem, size = 0x4, offset = 0x4, fixed_abs, tag = 'smem constant byte address 0x4 - core index']
  #allocation1 [shape = 'u32[144,128]{1,0:T(1,128)}', space=vmem, size = 0x12000, scoped, tag = 'internal scratch']
  %s0 = inlined_call_operand.vmem [shape: f32[32,4608], index: 0, kind: input, shape index: {}]
  %s1 = inlined_call_operand.vmem [shape: f32[10,32], index: 1, kind: input, shape index: {}]
  %s2 = inlined_call_operand.vmem [shape: f32[10,1], index: 2, kind: input, shape index: {}]
  %s3 = inlined_call_operand.vmem [shape: f32[10,1152], index: 3, kind: output, shape index: {}]
  %s4 = sld [smem:[#allocation0]]
  $region22: #{net_forward.2} parent=0
    _
  %s6 = ssub.s32 1, %s4
  %s7 = scalar_select 0, %s6, %s4
  // Predicated region
  $region2: #{net_forward.2} parent=0 // pred_check
    _
  $region3: #{net_forward.2} parent=0 // pred_check_branch
    %9 = sbr.rel (0) target = $region5
  $region4: #{net_forward.2} parent=0 // pred_region
    _
  $region5: #{net_forward.2} parent=0 // pred_fallthru
    _
  // Predicated region
  $region6: #{net_forward.2} parent=0 // pred_check
    _
  $region7: #{net_forward.2} parent=0 // pred_check_branch
    %11 = sbr.rel (0) target = $region9
  $region8: #{net_forward.2} parent=0 // pred_region
    _
  $region9: #{net_forward.2} parent=0 // pred_fallthru
    _
  // Predicated region
  $region10: #{net_forward.2} parent=0 // pred_check
    _
  $region11: #{net_forward.2} parent=0 // pred_check_branch
    %13 = sbr.rel (0) target = $region13
  $region12: #{net_forward.2} parent=0 // pred_region
    _
  $region13: #{net_forward.2} parent=0 // pred_fallthru
    _
  %v14 = vld [vmem:[%s1] sm:$0xff]
  %v15 = vld [vmem:[%s1 + $0x8] sm:$0x3]
  %v16 = vld [vmem:[%s0] sm:$0xff]
  %v17 = vld [vmem:[%s0 + $0x8] sm:$0xff]
  %v18 = vld [vmem:[%s0 + $0x10] sm:$0xff]
  %v19 = vld [vmem:[%s0 + $0x18] sm:$0xff]
  %v20 = vld [vmem:[%s0 + $0x20] sm:$0xff]
  %v21 = vld [vmem:[%s0 + $0x28] sm:$0xff]
  %v22 = vld [vmem:[%s0 + $0x30] sm:$0xff]
  %v23 = vld [vmem:[%s0 + $0x38] sm:$0xff]
  %v24 = vld [vmem:[%s0 + $0x40] sm:$0xff]
  %v25 = vld [vmem:[%s0 + $0x48] sm:$0xff]
  %v26 = vld [vmem:[%s0 + $0x50] sm:$0xff]
  %v27 = vld [vmem:[%s0 + $0x58] sm:$0xff]
  %v28 = vld [vmem:[%s0 + $0x60] sm:$0xff]
  %v29 = vld [vmem:[%s0 + $0x68] sm:$0xff]
  %v30 = vld [vmem:[%s0 + $0x70] sm:$0xff]
  %v31 = vld [vmem:[%s0 + $0x78] sm:$0xff]
  %v32 = vld [vmem:[%s0 + $0x80] sm:$0xff]
  %v33 = vld [vmem:[%s0 + $0x88] sm:$0xff]
  %v34 = vld [vmem:[%s0 + $0x90] sm:$0xff]
  %v35 = vld [vmem:[%s0 + $0x98] sm:$0xff]
  %v36 = vld [vmem:[%s0 + $0xa0] sm:$0xff]
  %v37 = vld [vmem:[%s0 + $0xa8] sm:$0xff]
  %v38 = vld [vmem:[%s0 + $0xb0] sm:$0xff]
  %v39 = vld [vmem:[%s0 + $0xb8] sm:$0xff]
  %v40 = vld [vmem:[%s0 + $0xc0] sm:$0xff]
  %v41 = vld [vmem:[%s0 + $0xc8] sm:$0xff]
  %v42 = vld [vmem:[%s0 + $0xd0] sm:$0xff]
  %v43 = vld [vmem:[%s0 + $0xd8] sm:$0xff]
  %v44 = vld [vmem:[%s0 + $0xe0] sm:$0xff]
  %v45 = vld [vmem:[%s0 + $0xe8] sm:$0xff]
  %v46 = vld [vmem:[%s0 + $0xf0] sm:$0xff]
  %v47 = vld [vmem:[%s0 + $0xf8] sm:$0xff]
  %v48 = vld [vmem:[%s0 + $0x100] sm:$0xff]
  %v49 = vld [vmem:[%s0 + $0x108] sm:$0xff]
  %v50 = vld [vmem:[%s0 + $0x110] sm:$0xff]
  %v51 = vld [vmem:[%s0 + $0x118] sm:$0xff]
  %v52 = vld [vmem:[%s0 + $0x120] sm:$0xff]
  %v53 = vld [vmem:[%s0 + $0x128] sm:$0xff]
  %v54 = vld [vmem:[%s0 + $0x130] sm:$0xff]
  %v55 = vld [vmem:[%s0 + $0x138] sm:$0xff]
  %v56 = vld [vmem:[%s0 + $0x140] sm:$0xff]
  %v57 = vld [vmem:[%s0 + $0x148] sm:$0xff]
  %v58 = vld [vmem:[%s0 + $0x150] sm:$0xff]
  %v59 = vld [vmem:[%s0 + $0x158] sm:$0xff]
  %v60 = vld [vmem:[%s0 + $0x160] sm:$0xff]
  %v61 = vld [vmem:[%s0 + $0x168] sm:$0xff]
  %v62 = vld [vmem:[%s0 + $0x170] sm:$0xff]
  %v63 = vld [vmem:[%s0 + $0x178] sm:$0xff]
  %v64 = vld [vmem:[%s0 + $0x180] sm:$0xff]
  %v65 = vld [vmem:[%s0 + $0x188] sm:$0xff]
  %v66 = vld [vmem:[%s0 + $0x190] sm:$0xff]
  %v67 = vld [vmem:[%s0 + $0x198] sm:$0xff]
  %v68 = vld [vmem:[%s0 + $0x1a0] sm:$0xff]
  %v69 = vld [vmem:[%s0 + $0x1a8] sm:$0xff]
  %v70 = vld [vmem:[%s0 + $0x1b0] sm:$0xff]
  %v71 = vld [vmem:[%s0 + $0x1b8] sm:$0xff]
  %v72 = vld [vmem:[%s0 + $0x1c0] sm:$0xff]
  %v73 = vld [vmem:[%s0 + $0x1c8] sm:$0xff]
  %v74 = vld [vmem:[%s0 + $0x1d0] sm:$0xff]
  %v75 = vld [vmem:[%s0 + $0x1d8] sm:$0xff]
  %v76 = vld [vmem:[%s0 + $0x1e0] sm:$0xff]
  %v77 = vld [vmem:[%s0 + $0x1e8] sm:$0xff]
  %v78 = vld [vmem:[%s0 + $0x1f0] sm:$0xff]
  %v79 = vld [vmem:[%s0 + $0x1f8] sm:$0xff]
  %v80 = vld [vmem:[%s0 + $0x200] sm:$0xff]
  %v81 = vld [vmem:[%s0 + $0x208] sm:$0xff]
  %v82 = vld [vmem:[%s0 + $0x210] sm:$0xff]
  %v83 = vld [vmem:[%s0 + $0x218] sm:$0xff]
  %v84 = vld [vmem:[%s0 + $0x220] sm:$0xff]
  %v85 = vld [vmem:[%s0 + $0x228] sm:$0xff]
  %v86 = vld [vmem:[%s0 + $0x230] sm:$0xff]
  %v87 = vld [vmem:[%s0 + $0x238] sm:$0xff]
  %v88 = vld [vmem:[%s0 + $0x240] sm:$0xff]
  %v89 = vld [vmem:[%s0 + $0x248] sm:$0xff]
  %v90 = vld [vmem:[%s0 + $0x250] sm:$0xff]
  %v91 = vld [vmem:[%s0 + $0x258] sm:$0xff]
  %v92 = vld [vmem:[%s0 + $0x260] sm:$0xff]
  %v93 = vld [vmem:[%s0 + $0x268] sm:$0xff]
  %v94 = vld [vmem:[%s0 + $0x270] sm:$0xff]
  %v95 = vld [vmem:[%s0 + $0x278] sm:$0xff]
  %v96 = vld [vmem:[%s0 + $0x280] sm:$0xff]
  %v97 = vld [vmem:[%s0 + $0x288] sm:$0xff]
  %v98 = vld [vmem:[%s0 + $0x290] sm:$0xff]
  %v99 = vld [vmem:[%s0 + $0x298] sm:$0xff]
  %v100 = vld [vmem:[%s0 + $0x2a0] sm:$0xff]
  %v101 = vld [vmem:[%s0 + $0x2a8] sm:$0xff]
  %v102 = vld [vmem:[%s0 + $0x2b0] sm:$0xff]
  %v103 = vld [vmem:[%s0 + $0x2b8] sm:$0xff]
  %v104 = vld [vmem:[%s0 + $0x2c0] sm:$0xff]
  %v105 = vld [vmem:[%s0 + $0x2c8] sm:$0xff]
  %v106 = vld [vmem:[%s0 + $0x2d0] sm:$0xff]
  %v107 = vld [vmem:[%s0 + $0x2d8] sm:$0xff]
  %v108 = vld [vmem:[%s0 + $0x2e0] sm:$0xff]
  %v109 = vld [vmem:[%s0 + $0x2e8] sm:$0xff]
  %v110 = vld [vmem:[%s0 + $0x2f0] sm:$0xff]
  %v111 = vld [vmem:[%s0 + $0x2f8] sm:$0xff]
  %v112 = vld [vmem:[%s0 + $0x300] sm:$0xff]
  %v113 = vld [vmem:[%s0 + $0x308] sm:$0xff]
  %v114 = vld [vmem:[%s0 + $0x310] sm:$0xff]
  %v115 = vld [vmem:[%s0 + $0x318] sm:$0xff]
  %v116 = vld [vmem:[%s0 + $0x320] sm:$0xff]
  %v117 = vld [vmem:[%s0 + $0x328] sm:$0xff]
  %v118 = vld [vmem:[%s0 + $0x330] sm:$0xff]
  %v119 = vld [vmem:[%s0 + $0x338] sm:$0xff]
  %v120 = vld [vmem:[%s0 + $0x340] sm:$0xff]
  %v121 = vld [vmem:[%s0 + $0x348] sm:$0xff]
  %v122 = vld [vmem:[%s0 + $0x350] sm:$0xff]
  %v123 = vld [vmem:[%s0 + $0x358] sm:$0xff]
  %v124 = vld [vmem:[%s0 + $0x360] sm:$0xff]
  %v125 = vld [vmem:[%s0 + $0x368] sm:$0xff]
  %v126 = vld [vmem:[%s0 + $0x370] sm:$0xff]
  %v127 = vld [vmem:[%s0 + $0x378] sm:$0xff]
  %v128 = vld [vmem:[%s0 + $0x380] sm:$0xff]
  %v129 = vld [vmem:[%s0 + $0x388] sm:$0xff]
  %v130 = vld [vmem:[%s0 + $0x390] sm:$0xff]
  %v131 = vld [vmem:[%s0 + $0x398] sm:$0xff]
  %v132 = vld [vmem:[%s0 + $0x3a0] sm:$0xff]
  %v133 = vld [vmem:[%s0 + $0x3a8] sm:$0xff]
  %v134 = vld [vmem:[%s0 + $0x3b0] sm:$0xff]
  %v135 = vld [vmem:[%s0 + $0x3b8] sm:$0xff]
  %v136 = vld [vmem:[%s0 + $0x3c0] sm:$0xff]
  %v137 = vld [vmem:[%s0 + $0x3c8] sm:$0xff]
  %v138 = vld [vmem:[%s0 + $0x3d0] sm:$0xff]
  %v139 = vld [vmem:[%s0 + $0x3d8] sm:$0xff]
  %v140 = vld [vmem:[%s0 + $0x3e0] sm:$0xff]
  %v141 = vld [vmem:[%s0 + $0x3e8] sm:$0xff]
  %v142 = vld [vmem:[%s0 + $0x3f0] sm:$0xff]
  %v143 = vld [vmem:[%s0 + $0x3f8] sm:$0xff]
  %v144 = vld [vmem:[%s0 + $0x400] sm:$0xff]
  %v145 = vld [vmem:[%s0 + $0x408] sm:$0xff]
  %v146 = vld [vmem:[%s0 + $0x410] sm:$0xff]
  %v147 = vld [vmem:[%s0 + $0x418] sm:$0xff]
  %v148 = vld [vmem:[%s0 + $0x420] sm:$0xff]
  %v149 = vld [vmem:[%s0 + $0x428] sm:$0xff]
  %v150 = vld [vmem:[%s0 + $0x430] sm:$0xff]
  %v151 = vld [vmem:[%s0 + $0x438] sm:$0xff]
  %v152 = vld [vmem:[%s0 + $0x440] sm:$0xff]
  %v153 = vld [vmem:[%s0 + $0x448] sm:$0xff]
  %v154 = vld [vmem:[%s0 + $0x450] sm:$0xff]
  %v155 = vld [vmem:[%s0 + $0x458] sm:$0xff]
  %v156 = vld [vmem:[%s0 + $0x460] sm:$0xff]
  %v157 = vld [vmem:[%s0 + $0x468] sm:$0xff]
  %v158 = vld [vmem:[%s0 + $0x470] sm:$0xff]
  %v159 = vld [vmem:[%s0 + $0x478] sm:$0xff]
  %vm160 = vcmask 261120
  %v162 = vsel %vm160, %v14, 0
  %v165 = vsel %vm160, %v15, 0
  %167 = vmatprep.subr.mxu0 %v17
  %168 = vmatpush1.msra.mxu0 %v16
  %169 = vmatprep.subr.mxu0 %v53
  %170 = vmatpush1.msra.mxu0 %v52
  %171 = vmatprep.subr.mxu0 %v89
  %172 = vmatpush1.msra.mxu0 %v88
  %173 = vmatprep.subr.mxu0 %v125
  %174 = vmatpush1.msra.mxu0 %v124
  %175 = vmatprep.subr.mxu0 0.0
  %176 = vmatpush1.msra.mxu0 0.0
  %177 = vmatprep.subr.mxu0 0.0
  %178 = vmatpush1.msra.mxu0 0.0
  %179 = vmatprep.subr.mxu0 0.0
  %180 = vmatpush1.msra.mxu0 0.0
  %181 = vmatprep.subr.mxu0 0.0
  %182 = vmatpush1.msra.mxu0 0.0
  %183 = vmatprep.subr.mxu0 0.0
  %184 = vmatpush1.msra.mxu0 0.0
  %185 = vmatprep.subr.mxu0 0.0
  %186 = vmatpush1.msra.mxu0 0.0
  %187 = vmatprep.subr.mxu0 0.0
  %188 = vmatpush1.msra.mxu0 0.0
  %189 = vmatprep.subr.mxu0 0.0
  %190 = vmatpush1.msra.mxu0 0.0
  %191 = vmatprep.subr.mxu0 0.0
  %192 = vmatpush1.msra.mxu0 0.0
  %193 = vmatprep.subr.mxu0 0.0
  %194 = vmatpush1.msra.mxu0 0.0
  %195 = vmatprep.subr.mxu0 0.0
  %196 = vmatpush1.msra.mxu0 0.0
  %197 = vmatprep.subr.mxu0 0.0
  %198 = vmatpush1.msra.mxu0 0.0
  %199 = vmatprep.subr.mxu0 0.0
  %200 = vmatpush1.msra.mxu0 0.0
  %201 = vmatprep.subr.mxu0 0.0
  %202 = vmatpush1.msra.mxu0 0.0
  %203 = vmatprep.subr.mxu0 0.0
  %204 = vmatpush1.msra.mxu0 0.0
  %205 = vmatprep.subr.mxu0 0.0
  %206 = vmatpush1.msra.mxu0 0.0
  %207 = vmatprep.subr.mxu0 0.0
  %208 = vmatpush1.msra.mxu0 0.0
  %209 = vmatprep.subr.mxu0 0.0
  %210 = vmatpush1.msra.mxu0 0.0
  %211 = vmatprep.subr.mxu0 0.0
  %212 = vmatpush1.msra.mxu0 0.0
  %213 = vmatprep.subr.mxu0 0.0
  %214 = vmatpush1.msra.mxu0 0.0
  %215 = vmatprep.subr.mxu0 0.0
  %216 = vmatpush1.msra.mxu0 0.0
  %217 = vmatprep.subr.mxu0 0.0
  %218 = vmatpush1.msra.mxu0 0.0
  %219 = vmatprep.subr.mxu0 0.0
  %220 = vmatpush1.msra.mxu0 0.0
  %221 = vmatprep.subr.mxu0 0.0
  %222 = vmatpush1.msra.mxu0 0.0
  %223 = vmatprep.subr.mxu0 0.0
  %224 = vmatpush1.msra.mxu0 0.0
  %225 = vmatprep.subr.mxu0 0.0
  %226 = vmatpush1.msra.mxu0 0.0
  %227 = vmatprep.subr.mxu0 0.0
  %228 = vmatpush1.msra.mxu0 0.0
  %229 = vmatprep.subr.mxu0 0.0
  %230 = vmatpush1.msra.mxu0 0.0
  %231 = vmatprep.mubr.f32.mxu0 0.0
  %232 = vmatmul.mubr.f32.gmra.mrb[0].mxu0 %v162
  %v233 = vpop.f32.mrb[0].mxu0
  %v234 = vadd.f32 0.0, %v233
  %v235 = vpop.f32.mrb[0].mxu0
  %v236 = vadd.f32 0.0, %v235
  %237 = vmatprep.mubr.f32.mxu0 0.0
  %238 = vmatmul.mubr.f32.gmra.mrb[0].mxu0 %v165
  %v239 = vpop.f32.mrb[0].mxu0
  %v240 = vadd.f32 0.0, %v239
  %v241 = vpop.f32.mrb[0].mxu0
  %v242 = vadd.f32 0.0, %v241
  %243 = vdwg.mxu0
  %244 = vmatprep.subr.mxu0 %v19
  %245 = vmatpush1.msra.mxu0 %v18
  %246 = vmatprep.subr.mxu0 %v55
  %247 = vmatpush1.msra.mxu0 %v54
  %248 = vmatprep.subr.mxu0 %v91
  %249 = vmatpush1.msra.mxu0 %v90
  %250 = vmatprep.subr.mxu0 %v127
  %251 = vmatpush1.msra.mxu0 %v126
  %252 = vmatprep.subr.mxu0 0.0
  %253 = vmatpush1.msra.mxu0 0.0
  %254 = vmatprep.subr.mxu0 0.0
  %255 = vmatpush1.msra.mxu0 0.0
  %256 = vmatprep.subr.mxu0 0.0
  %257 = vmatpush1.msra.mxu0 0.0
  %258 = vmatprep.subr.mxu0 0.0
  %259 = vmatpush1.msra.mxu0 0.0
  %260 = vmatprep.subr.mxu0 0.0
  %261 = vmatpush1.msra.mxu0 0.0
  %262 = vmatprep.subr.mxu0 0.0
  %263 = vmatpush1.msra.mxu0 0.0
  %264 = vmatprep.subr.mxu0 0.0
  %265 = vmatpush1.msra.mxu0 0.0
  %266 = vmatprep.subr.mxu0 0.0
  %267 = vmatpush1.msra.mxu0 0.0
  %268 = vmatprep.subr.mxu0 0.0
  %269 = vmatpush1.msra.mxu0 0.0
  %270 = vmatprep.subr.mxu0 0.0
  %271 = vmatpush1.msra.mxu0 0.0
  %272 = vmatprep.subr.mxu0 0.0
  %273 = vmatpush1.msra.mxu0 0.0
  %274 = vmatprep.subr.mxu0 0.0
  %275 = vmatpush1.msra.mxu0 0.0
  %276 = vmatprep.subr.mxu0 0.0
  %277 = vmatpush1.msra.mxu0 0.0
  %278 = vmatprep.subr.mxu0 0.0
  %279 = vmatpush1.msra.mxu0 0.0
  %280 = vmatprep.subr.mxu0 0.0
  %281 = vmatpush1.msra.mxu0 0.0
  %282 = vmatprep.subr.mxu0 0.0
  %283 = vmatpush1.msra.mxu0 0.0
  %284 = vmatprep.subr.mxu0 0.0
  %285 = vmatpush1.msra.mxu0 0.0
  %286 = vmatprep.subr.mxu0 0.0
  %287 = vmatpush1.msra.mxu0 0.0
  %288 = vmatprep.subr.mxu0 0.0
  %289 = vmatpush1.msra.mxu0 0.0
  %290 = vmatprep.subr.mxu0 0.0
  %291 = vmatpush1.msra.mxu0 0.0
  %292 = vmatprep.subr.mxu0 0.0
  %293 = vmatpush1.msra.mxu0 0.0
  %294 = vmatprep.subr.mxu0 0.0
  %295 = vmatpush1.msra.mxu0 0.0
  %296 = vmatprep.subr.mxu0 0.0
  %297 = vmatpush1.msra.mxu0 0.0
  %298 = vmatprep.subr.mxu0 0.0
  %299 = vmatpush1.msra.mxu0 0.0
  %300 = vmatprep.subr.mxu0 0.0
  %301 = vmatpush1.msra.mxu0 0.0
  %302 = vmatprep.subr.mxu0 0.0
  %303 = vmatpush1.msra.mxu0 0.0
  %304 = vmatprep.subr.mxu0 0.0
  %305 = vmatpush1.msra.mxu0 0.0
  %306 = vmatprep.subr.mxu0 0.0
  %307 = vmatpush1.msra.mxu0 0.0
  %308 = vmatprep.mubr.f32.mxu0 0.0
  %309 = vmatmul.mubr.f32.gmra.mrb[0].mxu0 %v162
  %v310 = vpop.f32.mrb[0].mxu0
  %v311 = vadd.f32 0.0, %v310
  %v312 = vpop.f32.mrb[0].mxu0
  %v313 = vadd.f32 0.0, %v312
  %314 = vmatprep.mubr.f32.mxu0 0.0
  %315 = vmatmul.mubr.f32.gmra.mrb[0].mxu0 %v165
  %v316 = vpop.f32.mrb[0].mxu0
  %v317 = vadd.f32 0.0, %v316
  %v318 = vpop.f32.mrb[0].mxu0
  %v319 = vadd.f32 0.0, %v318
  %320 = vdwg.mxu0
  %321 = vmatprep.subr.mxu0 %v21
  %322 = vmatpush1.msra.mxu0 %v20
  %323 = vmatprep.subr.mxu0 %v57
  %324 = vmatpush1.msra.mxu0 %v56
  %325 = vmatprep.subr.mxu0 %v93
  %326 = vmatpush1.msra.mxu0 %v92
  %327 = vmatprep.subr.mxu0 %v129
  %328 = vmatpush1.msra.mxu0 %v128
  %329 = vmatprep.subr.mxu0 0.0
  %330 = vmatpush1.msra.mxu0 0.0
  %331 = vmatprep.subr.mxu0 0.0
  %332 = vmatpush1.msra.mxu0 0.0
  %333 = vmatprep.subr.mxu0 0.0
  %334 = vmatpush1.msra.mxu0 0.0
  %335 = vmatprep.subr.mxu0 0.0
  %336 = vmatpush1.msra.mxu0 0.0
  %337 = vmatprep.subr.mxu0 0.0
  %338 = vmatpush1.msra.mxu0 0.0
  %339 = vmatprep.subr.mxu0 0.0
  %340 = vmatpush1.msra.mxu0 0.0
  %341 = vmatprep.subr.mxu0 0.0
  %342 = vmatpush1.msra.mxu0 0.0
  %343 = vmatprep.subr.mxu0 0.0
  %344 = vmatpush1.msra.mxu0 0.0
  %345 = vmatprep.subr.mxu0 0.0
  %346 = vmatpush1.msra.mxu0 0.0
  %347 = vmatprep.subr.mxu0 0.0
  %348 = vmatpush1.msra.mxu0 0.0
  %349 = vmatprep.subr.mxu0 0.0
  %350 = vmatpush1.msra.mxu0 0.0
  %351 = vmatprep.subr.mxu0 0.0
  %352 = vmatpush1.msra.mxu0 0.0
  %353 = vmatprep.subr.mxu0 0.0
  %354 = vmatpush1.msra.mxu0 0.0
  %355 = vmatprep.subr.mxu0 0.0
  %356 = vmatpush1.msra.mxu0 0.0
  %357 = vmatprep.subr.mxu0 0.0
  %358 = vmatpush1.msra.mxu0 0.0
  %359 = vmatprep.subr.mxu0 0.0
  %360 = vmatpush1.msra.mxu0 0.0
  %361 = vmatprep.subr.mxu0 0.0
  %362 = vmatpush1.msra.mxu0 0.0
  %363 = vmatprep.subr.mxu0 0.0
  %364 = vmatpush1.msra.mxu0 0.0
  %365 = vmatprep.subr.mxu0 0.0
  %366 = vmatpush1.msra.mxu0 0.0
  %367 = vmatprep.subr.mxu0 0.0
  %368 = vmatpush1.msra.mxu0 0.0
  %369 = vmatprep.subr.mxu0 0.0
  %370 = vmatpush1.msra.mxu0 0.0
  %371 = vmatprep.subr.mxu0 0.0
  %372 = vmatpush1.msra.mxu0 0.0
  %373 = vmatprep.subr.mxu0 0.0
  %374 = vmatpush1.msra.mxu0 0.0
  %375 = vmatprep.subr.mxu0 0.0
  %376 = vmatpush1.msra.mxu0 0.0
  %377 = vmatprep.subr.mxu0 0.0
  %378 = vmatpush1.msra.mxu0 0.0
  %379 = vmatprep.subr.mxu0 0.0
  %380 = vmatpush1.msra.mxu0 0.0
  %381 = vmatprep.subr.mxu0 0.0
  %382 = vmatpush1.msra.mxu0 0.0
  %383 = vmatprep.subr.mxu0 0.0
  %384 = vmatpush1.msra.mxu0 0.0
  %385 = vmatprep.mubr.f32.mxu0 0.0
  %386 = vmatmul.mubr.f32.gmra.mrb[0].mxu0 %v162
  %v387 = vpop.f32.mrb[0].mxu0
  %v388 = vadd.f32 0.0, %v387
  %v389 = vpop.f32.mrb[0].mxu0
  %v390 = vadd.f32 0.0, %v389
  %391 = vmatprep.mubr.f32.mxu0 0.0
  %392 = vmatmul.mubr.f32.gmra.mrb[0].mxu0 %v165
  %v393 = vpop.f32.mrb[0].mxu0
  %v394 = vadd.f32 0.0, %v393
  %v395 = vpop.f32.mrb[0].mxu0
  %v396 = vadd.f32 0.0, %v395
  %397 = vdwg.mxu0
  %398 = vmatprep.subr.mxu0 %v23
  %399 = vmatpush1.msra.mxu0 %v22
  %400 = vmatprep.subr.mxu0 %v59
  %401 = vmatpush1.msra.mxu0 %v58
  %402 = vmatprep.subr.mxu0 %v95
  %403 = vmatpush1.msra.mxu0 %v94
  %404 = vmatprep.subr.mxu0 %v131
  %405 = vmatpush1.msra.mxu0 %v130
  %406 = vmatprep.subr.mxu0 0.0
  %407 = vmatpush1.msra.mxu0 0.0
  %408 = vmatprep.subr.mxu0 0.0
  %409 = vmatpush1.msra.mxu0 0.0
  %410 = vmatprep.subr.mxu0 0.0
  %411 = vmatpush1.msra.mxu0 0.0
  %412 = vmatprep.subr.mxu0 0.0
  %413 = vmatpush1.msra.mxu0 0.0
  %414 = vmatprep.subr.mxu0 0.0
  %415 = vmatpush1.msra.mxu0 0.0
  %416 = vmatprep.subr.mxu0 0.0
  %417 = vmatpush1.msra.mxu0 0.0
  %418 = vmatprep.subr.mxu0 0.0
  %419 = vmatpush1.msra.mxu0 0.0
  %420 = vmatprep.subr.mxu0 0.0
  %421 = vmatpush1.msra.mxu0 0.0
  %422 = vmatprep.subr.mxu0 0.0
  %423 = vmatpush1.msra.mxu0 0.0
  %424 = vmatprep.subr.mxu0 0.0
  %425 = vmatpush1.msra.mxu0 0.0
  %426 = vmatprep.subr.mxu0 0.0
  %427 = vmatpush1.msra.mxu0 0.0
  %428 = vmatprep.subr.mxu0 0.0
  %429 = vmatpush1.msra.mxu0 0.0
  %430 = vmatprep.subr.mxu0 0.0
  %431 = vmatpush1.msra.mxu0 0.0
  %432 = vmatprep.subr.mxu0 0.0
  %433 = vmatpush1.msra.mxu0 0.0
  %434 = vmatprep.subr.mxu0 0.0
  %435 = vmatpush1.msra.mxu0 0.0
  %436 = vmatprep.subr.mxu0 0.0
  %437 = vmatpush1.msra.mxu0 0.0
  %438 = vmatprep.subr.mxu0 0.0
  %439 = vmatpush1.msra.mxu0 0.0
  %440 = vmatprep.subr.mxu0 0.0
  %441 = vmatpush1.msra.mxu0 0.0
  %442 = vmatprep.subr.mxu0 0.0
  %443 = vmatpush1.msra.mxu0 0.0
  %444 = vmatprep.subr.mxu0 0.0
  %445 = vmatpush1.msra.mxu0 0.0
  %446 = vmatprep.subr.mxu0 0.0
  %447 = vmatpush1.msra.mxu0 0.0
  %448 = vmatprep.subr.mxu0 0.0
  %449 = vmatpush1.msra.mxu0 0.0
  %450 = vmatprep.subr.mxu0 0.0
  %451 = vmatpush1.msra.mxu0 0.0
  %452 = vmatprep.subr.mxu0 0.0
  %453 = vmatpush1.msra.mxu0 0.0
  %454 = vmatprep.subr.mxu0 0.0
  %455 = vmatpush1.msra.mxu0 0.0
  %456 = vmatprep.subr.mxu0 0.0
  %457 = vmatpush1.msra.mxu0 0.0
  %458 = vmatprep.subr.mxu0 0.0
  %459 = vmatpush1.msra.mxu0 0.0
  %460 = vmatprep.subr.mxu0 0.0
  %461 = vmatpush1.msra.mxu0 0.0
  %462 = vmatprep.mubr.f32.mxu0 0.0
  %463 = vmatmul.mubr.f32.gmra.mrb[0].mxu0 %v162
  %v464 = vpop.f32.mrb[0].mxu0
  %v465 = vadd.f32 0.0, %v464
  %v466 = vpop.f32.mrb[0].mxu0
  %v467 = vadd.f32 0.0, %v466
  %468 = vmatprep.mubr.f32.mxu0 0.0
  %469 = vmatmul.mubr.f32.gmra.mrb[0].mxu0 %v165
  %v470 = vpop.f32.mrb[0].mxu0
  %v471 = vadd.f32 0.0, %v470
  %v472 = vpop.f32.mrb[0].mxu0
  %v473 = vadd.f32 0.0, %v472
  %474 = vdwg.mxu0
  %475 = vmatprep.subr.mxu0 %v25
  %476 = vmatpush1.msra.mxu0 %v24
  %477 = vmatprep.subr.mxu0 %v61
  %478 = vmatpush1.msra.mxu0 %v60
  %479 = vmatprep.subr.mxu0 %v97
  %480 = vmatpush1.msra.mxu0 %v96
  %481 = vmatprep.subr.mxu0 %v133
  %482 = vmatpush1.msra.mxu0 %v132
  %483 = vmatprep.subr.mxu0 0.0
  %484 = vmatpush1.msra.mxu0 0.0
  %485 = vmatprep.subr.mxu0 0.0
  %486 = vmatpush1.msra.mxu0 0.0
  %487 = vmatprep.subr.mxu0 0.0
  %488 = vmatpush1.msra.mxu0 0.0
  %489 = vmatprep.subr.mxu0 0.0
  %490 = vmatpush1.msra.mxu0 0.0
  %491 = vmatprep.subr.mxu0 0.0
  %492 = vmatpush1.msra.mxu0 0.0
  %493 = vmatprep.subr.mxu0 0.0
  %494 = vmatpush1.msra.mxu0 0.0
  %495 = vmatprep.subr.mxu0 0.0
  %496 = vmatpush1.msra.mxu0 0.0
  %497 = vmatprep.subr.mxu0 0.0
  %498 = vmatpush1.msra.mxu0 0.0
  %499 = vmatprep.subr.mxu0 0.0
  %500 = vmatpush1.msra.mxu0 0.0
  %501 = vmatprep.subr.mxu0 0.0
  %502 = vmatpush1.msra.mxu0 0.0
  %503 = vmatprep.subr.mxu0 0.0
  %504 = vmatpush1.msra.mxu0 0.0
  %505 = vmatprep.subr.mxu0 0.0
  %506 = vmatpush1.msra.mxu0 0.0
  %507 = vmatprep.subr.mxu0 0.0
  %508 = vmatpush1.msra.mxu0 0.0
  %509 = vmatprep.subr.mxu0 0.0
  %510 = vmatpush1.msra.mxu0 0.0
  %511 = vmatprep.subr.mxu0 0.0
  %512 = vmatpush1.msra.mxu0 0.0
  %513 = vmatprep.subr.mxu0 0.0
  %514 = vmatpush1.msra.mxu0 0.0
  %515 = vmatprep.subr.mxu0 0.0
  %516 = vmatpush1.msra.mxu0 0.0
  %517 = vmatprep.subr.mxu0 0.0
  %518 = vmatpush1.msra.mxu0 0.0
  %519 = vmatprep.subr.mxu0 0.0
  %520 = vmatpush1.msra.mxu0 0.0
  %521 = vmatprep.subr.mxu0 0.0
  %522 = vmatpush1.msra.mxu0 0.0
  %523 = vmatprep.subr.mxu0 0.0
  %524 = vmatpush1.msra.mxu0 0.0
  %525 = vmatprep.subr.mxu0 0.0
  %526 = vmatpush1.msra.mxu0 0.0
  %527 = vmatprep.subr.mxu0 0.0
  %528 = vmatpush1.msra.mxu0 0.0
  %529 = vmatprep.subr.mxu0 0.0
  %530 = vmatpush1.msra.mxu0 0.0
  %531 = vmatprep.subr.mxu0 0.0
  %532 = vmatpush1.msra.mxu0 0.0
  %533 = vmatprep.subr.mxu0 0.0
  %534 = vmatpush1.msra.mxu0 0.0
  %535 = vmatprep.subr.mxu0 0.0
  %536 = vmatpush1.msra.mxu0 0.0
  %537 = vmatprep.subr.mxu0 0.0
  %538 = vmatpush1.msra.mxu0 0.0
  %539 = vmatprep.mubr.f32.mxu0 0.0
  %540 = vmatmul.mubr.f32.gmra.mrb[0].mxu0 %v162
  %v541 = vpop.f32.mrb[0].mxu0
  %v542 = vadd.f32 0.0, %v541
  %v543 = vpop.f32.mrb[0].mxu0
  %v544 = vadd.f32 0.0, %v543
  %545 = vmatprep.mubr.f32.mxu0 0.0
  %546 = vmatmul.mubr.f32.gmra.mrb[0].mxu0 %v165
  %v547 = vpop.f32.mrb[0].mxu0
  %v548 = vadd.f32 0.0, %v547
  %v549 = vpop.f32.mrb[0].mxu0
  %v550 = vadd.f32 0.0, %v549
  %551 = vdwg.mxu0
  %552 = vmatprep.subr.mxu0 %v27
  %553 = vmatpush1.msra.mxu0 %v26
  %554 = vmatprep.subr.mxu0 %v63
  %555 = vmatpush1.msra.mxu0 %v62
  %556 = vmatprep.subr.mxu0 %v99
  %557 = vmatpush1.msra.mxu0 %v98
  %558 = vmatprep.subr.mxu0 %v135
  %559 = vmatpush1.msra.mxu0 %v134
  %560 = vmatprep.subr.mxu0 0.0
  %561 = vmatpush1.msra.mxu0 0.0
  %562 = vmatprep.subr.mxu0 0.0
  %563 = vmatpush1.msra.mxu0 0.0
  %564 = vmatprep.subr.mxu0 0.0
  %565 = vmatpush1.msra.mxu0 0.0
  %566 = vmatprep.subr.mxu0 0.0
  %567 = vmatpush1.msra.mxu0 0.0
  %568 = vmatprep.subr.mxu0 0.0
  %569 = vmatpush1.msra.mxu0 0.0
  %570 = vmatprep.subr.mxu0 0.0
  %571 = vmatpush1.msra.mxu0 0.0
  %572 = vmatprep.subr.mxu0 0.0
  %573 = vmatpush1.msra.mxu0 0.0
  %574 = vmatprep.subr.mxu0 0.0
  %575 = vmatpush1.msra.mxu0 0.0
  %576 = vmatprep.subr.mxu0 0.0
  %577 = vmatpush1.msra.mxu0 0.0
  %578 = vmatprep.subr.mxu0 0.0
  %579 = vmatpush1.msra.mxu0 0.0
  %580 = vmatprep.subr.mxu0 0.0
  %581 = vmatpush1.msra.mxu0 0.0
  %582 = vmatprep.subr.mxu0 0.0
  %583 = vmatpush1.msra.mxu0 0.0
  %584 = vmatprep.subr.mxu0 0.0
  %585 = vmatpush1.msra.mxu0 0.0
  %586 = vmatprep.subr.mxu0 0.0
  %587 = vmatpush1.msra.mxu0 0.0
  %588 = vmatprep.subr.mxu0 0.0
  %589 = vmatpush1.msra.mxu0 0.0
  %590 = vmatprep.subr.mxu0 0.0
  %591 = vmatpush1.msra.mxu0 0.0
  %592 = vmatprep.subr.mxu0 0.0
  %593 = vmatpush1.msra.mxu0 0.0
  %594 = vmatprep.subr.mxu0 0.0
  %595 = vmatpush1.msra.mxu0 0.0
  %596 = vmatprep.subr.mxu0 0.0
  %597 = vmatpush1.msra.mxu0 0.0
  %598 = vmatprep.subr.mxu0 0.0
  %599 = vmatpush1.msra.mxu0 0.0
  %600 = vmatprep.subr.mxu0 0.0
  %601 = vmatpush1.msra.mxu0 0.0
  %602 = vmatprep.subr.mxu0 0.0
  %603 = vmatpush1.msra.mxu0 0.0
  %604 = vmatprep.subr.mxu0 0.0
  %605 = vmatpush1.msra.mxu0 0.0
  %606 = vmatprep.subr.mxu0 0.0
  %607 = vmatpush1.msra.mxu0 0.0
  %608 = vmatprep.subr.mxu0 0.0
  %609 = vmatpush1.msra.mxu0 0.0
  %610 = vmatprep.subr.mxu0 0.0
  %611 = vmatpush1.msra.mxu0 0.0
  %612 = vmatprep.subr.mxu0 0.0
  %613 = vmatpush1.msra.mxu0 0.0
  %614 = vmatprep.subr.mxu0 0.0
  %615 = vmatpush1.msra.mxu0 0.0
  %616 = vmatprep.mubr.f32.mxu0 0.0
  %617 = vmatmul.mubr.f32.gmra.mrb[0].mxu0 %v162
  %v618 = vpop.f32.mrb[0].mxu0
  %v619 = vadd.f32 0.0, %v618
  %v620 = vpop.f32.mrb[0].mxu0
  %v621 = vadd.f32 0.0, %v620
  %622 = vmatprep.mubr.f32.mxu0 0.0
  %623 = vmatmul.mubr.f32.gmra.mrb[0].mxu0 %v165
  %v624 = vpop.f32.mrb[0].mxu0
  %v625 = vadd.f32 0.0, %v624
  %v626 = vpop.f32.mrb[0].mxu0
  %v627 = vadd.f32 0.0, %v626
  %628 = vdwg.mxu0
  %629 = vmatprep.subr.mxu0 %v29
  %630 = vmatpush1.msra.mxu0 %v28
  %631 = vmatprep.subr.mxu0 %v65
  %632 = vmatpush1.msra.mxu0 %v64
  %633 = vmatprep.subr.mxu0 %v101
  %634 = vmatpush1.msra.mxu0 %v100
  %635 = vmatprep.subr.mxu0 %v137
  %636 = vmatpush1.msra.mxu0 %v136
  %637 = vmatprep.subr.mxu0 0.0
  %638 = vmatpush1.msra.mxu0 0.0
  %639 = vmatprep.subr.mxu0 0.0
  %640 = vmatpush1.msra.mxu0 0.0
  %641 = vmatprep.subr.mxu0 0.0
  %642 = vmatpush1.msra.mxu0 0.0
  %643 = vmatprep.subr.mxu0 0.0
  %644 = vmatpush1.msra.mxu0 0.0
  %645 = vmatprep.subr.mxu0 0.0
  %646 = vmatpush1.msra.mxu0 0.0
  %647 = vmatprep.subr.mxu0 0.0
  %648 = vmatpush1.msra.mxu0 0.0
  %649 = vmatprep.subr.mxu0 0.0
  %650 = vmatpush1.msra.mxu0 0.0
  %651 = vmatprep.subr.mxu0 0.0
  %652 = vmatpush1.msra.mxu0 0.0
  %653 = vmatprep.subr.mxu0 0.0
  %654 = vmatpush1.msra.mxu0 0.0
  %655 = vmatprep.subr.mxu0 0.0
  %656 = vmatpush1.msra.mxu0 0.0
  %657 = vmatprep.subr.mxu0 0.0
  %658 = vmatpush1.msra.mxu0 0.0
  %659 = vmatprep.subr.mxu0 0.0
  %660 = vmatpush1.msra.mxu0 0.0
  %661 = vmatprep.subr.mxu0 0.0
  %662 = vmatpush1.msra.mxu0 0.0
  %663 = vmatprep.subr.mxu0 0.0
  %664 = vmatpush1.msra.mxu0 0.0
  %665 = vmatprep.subr.mxu0 0.0
  %666 = vmatpush1.msra.mxu0 0.0
  %667 = vmatprep.subr.mxu0 0.0
  %668 = vmatpush1.msra.mxu0 0.0
  %669 = vmatprep.subr.mxu0 0.0
  %670 = vmatpush1.msra.mxu0 0.0
  %671 = vmatprep.subr.mxu0 0.0
  %672 = vmatpush1.msra.mxu0 0.0
  %673 = vmatprep.subr.mxu0 0.0
  %674 = vmatpush1.msra.mxu0 0.0
  %675 = vmatprep.subr.mxu0 0.0
  %676 = vmatpush1.msra.mxu0 0.0
  %677 = vmatprep.subr.mxu0 0.0
  %678 = vmatpush1.msra.mxu0 0.0
  %679 = vmatprep.subr.mxu0 0.0
  %680 = vmatpush1.msra.mxu0 0.0
  %681 = vmatprep.subr.mxu0 0.0
  %682 = vmatpush1.msra.mxu0 0.0
  %683 = vmatprep.subr.mxu0 0.0
  %684 = vmatpush1.msra.mxu0 0.0
  %685 = vmatprep.subr.mxu0 0.0
  %686 = vmatpush1.msra.mxu0 0.0
  %687 = vmatprep.subr.mxu0 0.0
  %688 = vmatpush1.msra.mxu0 0.0
  %689 = vmatprep.subr.mxu0 0.0
  %690 = vmatpush1.msra.mxu0 0.0
  %691 = vmatprep.subr.mxu0 0.0
  %692 = vmatpush1.msra.mxu0 0.0
  %693 = vmatprep.mubr.f32.mxu0 0.0
  %694 = vmatmul.mubr.f32.gmra.mrb[0].mxu0 %v162
  %v695 = vpop.f32.mrb[0].mxu0
  %v696 = vadd.f32 0.0, %v695
  %v697 = vpop.f32.mrb[0].mxu0
  %v698 = vadd.f32 0.0, %v697
  %699 = vmatprep.mubr.f32.mxu0 0.0
  %700 = vmatmul.mubr.f32.gmra.mrb[0].mxu0 %v165
  %v701 = vpop.f32.mrb[0].mxu0
  %v702 = vadd.f32 0.0, %v701
  %v703 = vpop.f32.mrb[0].mxu0
  %v704 = vadd.f32 0.0, %v703
  %705 = vdwg.mxu0
  %706 = vmatprep.subr.mxu0 %v31
  %707 = vmatpush1.msra.mxu0 %v30
  %708 = vmatprep.subr.mxu0 %v67
  %709 = vmatpush1.msra.mxu0 %v66
  %710 = vmatprep.subr.mxu0 %v103
  %711 = vmatpush1.msra.mxu0 %v102
  %712 = vmatprep.subr.mxu0 %v139
  %713 = vmatpush1.msra.mxu0 %v138
  %714 = vmatprep.subr.mxu0 0.0
  %715 = vmatpush1.msra.mxu0 0.0
  %716 = vmatprep.subr.mxu0 0.0
  %717 = vmatpush1.msra.mxu0 0.0
  %718 = vmatprep.subr.mxu0 0.0
  %719 = vmatpush1.msra.mxu0 0.0
  %720 = vmatprep.subr.mxu0 0.0
  %721 = vmatpush1.msra.mxu0 0.0
  %722 = vmatprep.subr.mxu0 0.0
  %723 = vmatpush1.msra.mxu0 0.0
  %724 = vmatprep.subr.mxu0 0.0
  %725 = vmatpush1.msra.mxu0 0.0
  %726 = vmatprep.subr.mxu0 0.0
  %727 = vmatpush1.msra.mxu0 0.0
  %728 = vmatprep.subr.mxu0 0.0
  %729 = vmatpush1.msra.mxu0 0.0
  %730 = vmatprep.subr.mxu0 0.0
  %731 = vmatpush1.msra.mxu0 0.0
  %732 = vmatprep.subr.mxu0 0.0
  %733 = vmatpush1.msra.mxu0 0.0
  %734 = vmatprep.subr.mxu0 0.0
  %735 = vmatpush1.msra.mxu0 0.0
  %736 = vmatprep.subr.mxu0 0.0
  %737 = vmatpush1.msra.mxu0 0.0
  %738 = vmatprep.subr.mxu0 0.0
  %739 = vmatpush1.msra.mxu0 0.0
  %740 = vmatprep.subr.mxu0 0.0
  %741 = vmatpush1.msra.mxu0 0.0
  %742 = vmatprep.subr.mxu0 0.0
  %743 = vmatpush1.msra.mxu0 0.0
  %744 = vmatprep.subr.mxu0 0.0
  %745 = vmatpush1.msra.mxu0 0.0
  %746 = vmatprep.subr.mxu0 0.0
  %747 = vmatpush1.msra.mxu0 0.0
  %748 = vmatprep.subr.mxu0 0.0
  %749 = vmatpush1.msra.mxu0 0.0
  %750 = vmatprep.subr.mxu0 0.0
  %751 = vmatpush1.msra.mxu0 0.0
  %752 = vmatprep.subr.mxu0 0.0
  %753 = vmatpush1.msra.mxu0 0.0
  %754 = vmatprep.subr.mxu0 0.0
  %755 = vmatpush1.msra.mxu0 0.0
  %756 = vmatprep.subr.mxu0 0.0
  %757 = vmatpush1.msra.mxu0 0.0
  %758 = vmatprep.subr.mxu0 0.0
  %759 = vmatpush1.msra.mxu0 0.0
  %760 = vmatprep.subr.mxu0 0.0
  %761 = vmatpush1.msra.mxu0 0.0
  %762 = vmatprep.subr.mxu0 0.0
  %763 = vmatpush1.msra.mxu0 0.0
  %764 = vmatprep.subr.mxu0 0.0
  %765 = vmatpush1.msra.mxu0 0.0
  %766 = vmatprep.subr.mxu0 0.0
  %767 = vmatpush1.msra.mxu0 0.0
  %768 = vmatprep.subr.mxu0 0.0
  %769 = vmatpush1.msra.mxu0 0.0
  %770 = vmatprep.mubr.f32.mxu0 0.0
  %771 = vmatmul.mubr.f32.gmra.mrb[0].mxu0 %v162
  %v772 = vpop.f32.mrb[0].mxu0
  %v773 = vadd.f32 0.0, %v772
  %v774 = vpop.f32.mrb[0].mxu0
  %v775 = vadd.f32 0.0, %v774
  %776 = vmatprep.mubr.f32.mxu0 0.0
  %777 = vmatmul.mubr.f32.gmra.mrb[0].mxu0 %v165
  %v778 = vpop.f32.mrb[0].mxu0
  %v779 = vadd.f32 0.0, %v778
  %v780 = vpop.f32.mrb[0].mxu0
  %v781 = vadd.f32 0.0, %v780
  %782 = vdwg.mxu0
  %783 = vmatprep.subr.mxu0 %v33
  %784 = vmatpush1.msra.mxu0 %v32
  %785 = vmatprep.subr.mxu0 %v69
  %786 = vmatpush1.msra.mxu0 %v68
  %787 = vmatprep.subr.mxu0 %v105
  %788 = vmatpush1.msra.mxu0 %v104
  %789 = vmatprep.subr.mxu0 %v141
  %790 = vmatpush1.msra.mxu0 %v140
  %791 = vmatprep.subr.mxu0 0.0
  %792 = vmatpush1.msra.mxu0 0.0
  %793 = vmatprep.subr.mxu0 0.0
  %794 = vmatpush1.msra.mxu0 0.0
  %795 = vmatprep.subr.mxu0 0.0
  %796 = vmatpush1.msra.mxu0 0.0
  %797 = vmatprep.subr.mxu0 0.0
  %798 = vmatpush1.msra.mxu0 0.0
  %799 = vmatprep.subr.mxu0 0.0
  %800 = vmatpush1.msra.mxu0 0.0
  %801 = vmatprep.subr.mxu0 0.0
  %802 = vmatpush1.msra.mxu0 0.0
  %803 = vmatprep.subr.mxu0 0.0
  %804 = vmatpush1.msra.mxu0 0.0
  %805 = vmatprep.subr.mxu0 0.0
  %806 = vmatpush1.msra.mxu0 0.0
  %807 = vmatprep.subr.mxu0 0.0
  %808 = vmatpush1.msra.mxu0 0.0
  %809 = vmatprep.subr.mxu0 0.0
  %810 = vmatpush1.msra.mxu0 0.0
  %811 = vmatprep.subr.mxu0 0.0
  %812 = vmatpush1.msra.mxu0 0.0
  %813 = vmatprep.subr.mxu0 0.0
  %814 = vmatpush1.msra.mxu0 0.0
  %815 = vmatprep.subr.mxu0 0.0
  %816 = vmatpush1.msra.mxu0 0.0
  %817 = vmatprep.subr.mxu0 0.0
  %818 = vmatpush1.msra.mxu0 0.0
  %819 = vmatprep.subr.mxu0 0.0
  %820 = vmatpush1.msra.mxu0 0.0
  %821 = vmatprep.subr.mxu0 0.0
  %822 = vmatpush1.msra.mxu0 0.0
  %823 = vmatprep.subr.mxu0 0.0
  %824 = vmatpush1.msra.mxu0 0.0
  %825 = vmatprep.subr.mxu0 0.0
  %826 = vmatpush1.msra.mxu0 0.0
  %827 = vmatprep.subr.mxu0 0.0
  %828 = vmatpush1.msra.mxu0 0.0
  %829 = vmatprep.subr.mxu0 0.0
  %830 = vmatpush1.msra.mxu0 0.0
  %831 = vmatprep.subr.mxu0 0.0
  %832 = vmatpush1.msra.mxu0 0.0
  %833 = vmatprep.subr.mxu0 0.0
  %834 = vmatpush1.msra.mxu0 0.0
  %835 = vmatprep.subr.mxu0 0.0
  %836 = vmatpush1.msra.mxu0 0.0
  %837 = vmatprep.subr.mxu0 0.0
  %838 = vmatpush1.msra.mxu0 0.0
  %839 = vmatprep.subr.mxu0 0.0
  %840 = vmatpush1.msra.mxu0 0.0
  %841 = vmatprep.subr.mxu0 0.0
  %842 = vmatpush1.msra.mxu0 0.0
  %843 = vmatprep.subr.mxu0 0.0
  %844 = vmatpush1.msra.mxu0 0.0
  %845 = vmatprep.subr.mxu0 0.0
  %846 = vmatpush1.msra.mxu0 0.0
  %847 = vmatprep.mubr.f32.mxu0 0.0
  %848 = vmatmul.mubr.f32.gmra.mrb[0].mxu0 %v162
  %v849 = vpop.f32.mrb[0].mxu0
  %v850 = vadd.f32 0.0, %v849
  %v851 = vpop.f32.mrb[0].mxu0
  %v852 = vadd.f32 0.0, %v851
  %853 = vmatprep.mubr.f32.mxu0 0.0
  %854 = vmatmul.mubr.f32.gmra.mrb[0].mxu0 %v165
  %v855 = vpop.f32.mrb[0].mxu0
  %v856 = vadd.f32 0.0, %v855
  %v857 = vpop.f32.mrb[0].mxu0
  %v858 = vadd.f32 0.0, %v857
  %859 = vdwg.mxu0
  %860 = vmatprep.subr.mxu0 %v35
  %861 = vmatpush1.msra.mxu0 %v34
  %862 = vmatprep.subr.mxu0 %v71
  %863 = vmatpush1.msra.mxu0 %v70
  %864 = vmatprep.subr.mxu0 %v107
  %865 = vmatpush1.msra.mxu0 %v106
  %866 = vmatprep.subr.mxu0 %v143
  %867 = vmatpush1.msra.mxu0 %v142
  %868 = vmatprep.subr.mxu0 0.0
  %869 = vmatpush1.msra.mxu0 0.0
  %870 = vmatprep.subr.mxu0 0.0
  %871 = vmatpush1.msra.mxu0 0.0
  %872 = vmatprep.subr.mxu0 0.0
  %873 = vmatpush1.msra.mxu0 0.0
  %874 = vmatprep.subr.mxu0 0.0
  %875 = vmatpush1.msra.mxu0 0.0
  %876 = vmatprep.subr.mxu0 0.0
  %877 = vmatpush1.msra.mxu0 0.0
  %878 = vmatprep.subr.mxu0 0.0
  %879 = vmatpush1.msra.mxu0 0.0
  %880 = vmatprep.subr.mxu0 0.0
  %881 = vmatpush1.msra.mxu0 0.0
  %882 = vmatprep.subr.mxu0 0.0
  %883 = vmatpush1.msra.mxu0 0.0
  %884 = vmatprep.subr.mxu0 0.0
  %885 = vmatpush1.msra.mxu0 0.0
  %886 = vmatprep.subr.mxu0 0.0
  %887 = vmatpush1.msra.mxu0 0.0
  %888 = vmatprep.subr.mxu0 0.0
  %889 = vmatpush1.msra.mxu0 0.0
  %890 = vmatprep.subr.mxu0 0.0
  %891 = vmatpush1.msra.mxu0 0.0
  %892 = vmatprep.subr.mxu0 0.0
  %893 = vmatpush1.msra.mxu0 0.0
  %894 = vmatprep.subr.mxu0 0.0
  %895 = vmatpush1.msra.mxu0 0.0
  %896 = vmatprep.subr.mxu0 0.0
  %897 = vmatpush1.msra.mxu0 0.0
  %898 = vmatprep.subr.mxu0 0.0
  %899 = vmatpush1.msra.mxu0 0.0
  %900 = vmatprep.subr.mxu0 0.0
  %901 = vmatpush1.msra.mxu0 0.0
  %902 = vmatprep.subr.mxu0 0.0
  %903 = vmatpush1.msra.mxu0 0.0
  %904 = vmatprep.subr.mxu0 0.0
  %905 = vmatpush1.msra.mxu0 0.0
  %906 = vmatprep.subr.mxu0 0.0
  %907 = vmatpush1.msra.mxu0 0.0
  %908 = vmatprep.subr.mxu0 0.0
  %909 = vmatpush1.msra.mxu0 0.0
  %910 = vmatprep.subr.mxu0 0.0
  %911 = vmatpush1.msra.mxu0 0.0
  %912 = vmatprep.subr.mxu0 0.0
  %913 = vmatpush1.msra.mxu0 0.0
  %914 = vmatprep.subr.mxu0 0.0
  %915 = vmatpush1.msra.mxu0 0.0
  %916 = vmatprep.subr.mxu0 0.0
  %917 = vmatpush1.msra.mxu0 0.0
  %918 = vmatprep.subr.mxu0 0.0
  %919 = vmatpush1.msra.mxu0 0.0
  %920 = vmatprep.subr.mxu0 0.0
  %921 = vmatpush1.msra.mxu0 0.0
  %922 = vmatprep.subr.mxu0 0.0
  %923 = vmatpush1.msra.mxu0 0.0
  %924 = vmatprep.mubr.f32.mxu0 0.0
  %925 = vmatmul.mubr.f32.gmra.mrb[0].mxu0 %v162
  %v926 = vpop.f32.mrb[0].mxu0
  %v927 = vadd.f32 0.0, %v926
  %v928 = vpop.f32.mrb[0].mxu0
  %v929 = vadd.f32 0.0, %v928
  %930 = vmatprep.mubr.f32.mxu0 0.0
  %931 = vmatmul.mubr.f32.gmra.mrb[0].mxu0 %v165
  %v932 = vpop.f32.mrb[0].mxu0
  %v933 = vadd.f32 0.0, %v932
  %v934 = vpop.f32.mrb[0].mxu0
  %v935 = vadd.f32 0.0, %v934
  %936 = vdwg.mxu0
  %937 = vmatprep.subr.mxu0 %v37
  %938 = vmatpush1.msra.mxu0 %v36
  %939 = vmatprep.subr.mxu0 %v73
  %940 = vmatpush1.msra.mxu0 %v72
  %941 = vmatprep.subr.mxu0 %v109
  %942 = vmatpush1.msra.mxu0 %v108
  %943 = vmatprep.subr.mxu0 %v145
  %944 = vmatpush1.msra.mxu0 %v144
  %945 = vmatprep.subr.mxu0 0.0
  %946 = vmatpush1.msra.mxu0 0.0
  %947 = vmatprep.subr.mxu0 0.0
  %948 = vmatpush1.msra.mxu0 0.0
  %949 = vmatprep.subr.mxu0 0.0
  %950 = vmatpush1.msra.mxu0 0.0
  %951 = vmatprep.subr.mxu0 0.0
  %952 = vmatpush1.msra.mxu0 0.0
  %953 = vmatprep.subr.mxu0 0.0
  %954 = vmatpush1.msra.mxu0 0.0
  %955 = vmatprep.subr.mxu0 0.0
  %956 = vmatpush1.msra.mxu0 0.0
  %957 = vmatprep.subr.mxu0 0.0
  %958 = vmatpush1.msra.mxu0 0.0
  %959 = vmatprep.subr.mxu0 0.0
  %960 = vmatpush1.msra.mxu0 0.0
  %961 = vmatprep.subr.mxu0 0.0
  %962 = vmatpush1.msra.mxu0 0.0
  %963 = vmatprep.subr.mxu0 0.0
  %964 = vmatpush1.msra.mxu0 0.0
  %965 = vmatprep.subr.mxu0 0.0
  %966 = vmatpush1.msra.mxu0 0.0
  %967 = vmatprep.subr.mxu0 0.0
  %968 = vmatpush1.msra.mxu0 0.0
  %969 = vmatprep.subr.mxu0 0.0
  %970 = vmatpush1.msra.mxu0 0.0
  %971 = vmatprep.subr.mxu0 0.0
  %972 = vmatpush1.msra.mxu0 0.0
  %973 = vmatprep.subr.mxu0 0.0
  %974 = vmatpush1.msra.mxu0 0.0
  %975 = vmatprep.subr.mxu0 0.0
  %976 = vmatpush1.msra.mxu0 0.0
  %977 = vmatprep.subr.mxu0 0.0
  %978 = vmatpush1.msra.mxu0 0.0
  %979 = vmatprep.subr.mxu0 0.0
  %980 = vmatpush1.msra.mxu0 0.0
  %981 = vmatprep.subr.mxu0 0.0
  %982 = vmatpush1.msra.mxu0 0.0
  %983 = vmatprep.subr.mxu0 0.0
  %984 = vmatpush1.msra.mxu0 0.0
  %985 = vmatprep.subr.mxu0 0.0
  %986 = vmatpush1.msra.mxu0 0.0
  %987 = vmatprep.subr.mxu0 0.0
  %988 = vmatpush1.msra.mxu0 0.0
  %989 = vmatprep.subr.mxu0 0.0
  %990 = vmatpush1.msra.mxu0 0.0
  %991 = vmatprep.subr.mxu0 0.0
  %992 = vmatpush1.msra.mxu0 0.0
  %993 = vmatprep.subr.mxu0 0.0
  %994 = vmatpush1.msra.mxu0 0.0
  %995 = vmatprep.subr.mxu0 0.0
  %996 = vmatpush1.msra.mxu0 0.0
  %997 = vmatprep.subr.mxu0 0.0
  %998 = vmatpush1.msra.mxu0 0.0
  %999 = vmatprep.subr.mxu0 0.0
  %1000 = vmatpush1.msra.mxu0 0.0
  %1001 = vmatprep.mubr.f32.mxu0 0.0
  %1002 = vmatmul.mubr.f32.gmra.mrb[0].mxu0 %v162
  %v1003 = vpop.f32.mrb[0].mxu0
  %v1004 = vadd.f32 0.0, %v1003
  %v1005 = vpop.f32.mrb[0].mxu0
  %v1006 = vadd.f32 0.0, %v1005
  %1007 = vmatprep.mubr.f32.mxu0 0.0
  %1008 = vmatmul.mubr.f32.gmra.mrb[0].mxu0 %v165
  %v1009 = vpop.f32.mrb[0].mxu0
  %v1010 = vadd.f32 0.0, %v1009
  %v1011 = vpop.f32.mrb[0].mxu0
  %v1012 = vadd.f32 0.0, %v1011
  %1013 = vdwg.mxu0
  %1014 = vmatprep.subr.mxu0 %v39
  %1015 = vmatpush1.msra.mxu0 %v38
  %1016 = vmatprep.subr.mxu0 %v75
  %1017 = vmatpush1.msra.mxu0 %v74
  %1018 = vmatprep.subr.mxu0 %v111
  %1019 = vmatpush1.msra.mxu0 %v110
  %1020 = vmatprep.subr.mxu0 %v147
  %1021 = vmatpush1.msra.mxu0 %v146
  %1022 = vmatprep.subr.mxu0 0.0
  %1023 = vmatpush1.msra.mxu0 0.0
  %1024 = vmatprep.subr.mxu0 0.0
  %1025 = vmatpush1.msra.mxu0 0.0
  %1026 = vmatprep.subr.mxu0 0.0
  %1027 = vmatpush1.msra.mxu0 0.0
  %1028 = vmatprep.subr.mxu0 0.0
  %1029 = vmatpush1.msra.mxu0 0.0
  %1030 = vmatprep.subr.mxu0 0.0
  %1031 = vmatpush1.msra.mxu0 0.0
  %1032 = vmatprep.subr.mxu0 0.0
  %1033 = vmatpush1.msra.mxu0 0.0
  %1034 = vmatprep.subr.mxu0 0.0
  %1035 = vmatpush1.msra.mxu0 0.0
  %1036 = vmatprep.subr.mxu0 0.0
  %1037 = vmatpush1.msra.mxu0 0.0
  %1038 = vmatprep.subr.mxu0 0.0
  %1039 = vmatpush1.msra.mxu0 0.0
  %1040 = vmatprep.subr.mxu0 0.0
  %1041 = vmatpush1.msra.mxu0 0.0
  %1042 = vmatprep.subr.mxu0 0.0
  %1043 = vmatpush1.msra.mxu0 0.0
  %1044 = vmatprep.subr.mxu0 0.0
  %1045 = vmatpush1.msra.mxu0 0.0
  %1046 = vmatprep.subr.mxu0 0.0
  %1047 = vmatpush1.msra.mxu0 0.0
  %1048 = vmatprep.subr.mxu0 0.0
  %1049 = vmatpush1.msra.mxu0 0.0
  %1050 = vmatprep.subr.mxu0 0.0
  %1051 = vmatpush1.msra.mxu0 0.0
  %1052 = vmatprep.subr.mxu0 0.0
  %1053 = vmatpush1.msra.mxu0 0.0
  %1054 = vmatprep.subr.mxu0 0.0
  %1055 = vmatpush1.msra.mxu0 0.0
  %1056 = vmatprep.subr.mxu0 0.0
  %1057 = vmatpush1.msra.mxu0 0.0
  %1058 = vmatprep.subr.mxu0 0.0
  %1059 = vmatpush1.msra.mxu0 0.0
  %1060 = vmatprep.subr.mxu0 0.0
  %1061 = vmatpush1.msra.mxu0 0.0
  %1062 = vmatprep.subr.mxu0 0.0
  %1063 = vmatpush1.msra.mxu0 0.0
  %1064 = vmatprep.subr.mxu0 0.0
  %1065 = vmatpush1.msra.mxu0 0.0
  %1066 = vmatprep.subr.mxu0 0.0
  %1067 = vmatpush1.msra.mxu0 0.0
  %1068 = vmatprep.subr.mxu0 0.0
  %1069 = vmatpush1.msra.mxu0 0.0
  %1070 = vmatprep.subr.mxu0 0.0
  %1071 = vmatpush1.msra.mxu0 0.0
  %1072 = vmatprep.subr.mxu0 0.0
  %1073 = vmatpush1.msra.mxu0 0.0
  %1074 = vmatprep.subr.mxu0 0.0
  %1075 = vmatpush1.msra.mxu0 0.0
  %1076 = vmatprep.subr.mxu0 0.0
  %1077 = vmatpush1.msra.mxu0 0.0
  %1078 = vmatprep.mubr.f32.mxu0 0.0
  %1079 = vmatmul.mubr.f32.gmra.mrb[0].mxu0 %v162
  %v1080 = vpop.f32.mrb[0].mxu0
  %v1081 = vadd.f32 0.0, %v1080
  %v1082 = vpop.f32.mrb[0].mxu0
  %v1083 = vadd.f32 0.0, %v1082
  %1084 = vmatprep.mubr.f32.mxu0 0.0
  %1085 = vmatmul.mubr.f32.gmra.mrb[0].mxu0 %v165
  %v1086 = vpop.f32.mrb[0].mxu0
  %v1087 = vadd.f32 0.0, %v1086
  %v1088 = vpop.f32.mrb[0].mxu0
  %v1089 = vadd.f32 0.0, %v1088
  %1090 = vdwg.mxu0
  %1091 = vmatprep.subr.mxu0 %v41
  %1092 = vmatpush1.msra.mxu0 %v40
  %1093 = vmatprep.subr.mxu0 %v77
  %1094 = vmatpush1.msra.mxu0 %v76
  %1095 = vmatprep.subr.mxu0 %v113
  %1096 = vmatpush1.msra.mxu0 %v112
  %1097 = vmatprep.subr.mxu0 %v149
  %1098 = vmatpush1.msra.mxu0 %v148
  %1099 = vmatprep.subr.mxu0 0.0
  %1100 = vmatpush1.msra.mxu0 0.0
  %1101 = vmatprep.subr.mxu0 0.0
  %1102 = vmatpush1.msra.mxu0 0.0
  %1103 = vmatprep.subr.mxu0 0.0
  %1104 = vmatpush1.msra.mxu0 0.0
  %1105 = vmatprep.subr.mxu0 0.0
  %1106 = vmatpush1.msra.mxu0 0.0
  %1107 = vmatprep.subr.mxu0 0.0
  %1108 = vmatpush1.msra.mxu0 0.0
  %1109 = vmatprep.subr.mxu0 0.0
  %1110 = vmatpush1.msra.mxu0 0.0
  %1111 = vmatprep.subr.mxu0 0.0
  %1112 = vmatpush1.msra.mxu0 0.0
  %1113 = vmatprep.subr.mxu0 0.0
  %1114 = vmatpush1.msra.mxu0 0.0
  %1115 = vmatprep.subr.mxu0 0.0
  %1116 = vmatpush1.msra.mxu0 0.0
  %1117 = vmatprep.subr.mxu0 0.0
  %1118 = vmatpush1.msra.mxu0 0.0
  %1119 = vmatprep.subr.mxu0 0.0
  %1120 = vmatpush1.msra.mxu0 0.0
  %1121 = vmatprep.subr.mxu0 0.0
  %1122 = vmatpush1.msra.mxu0 0.0
  %1123 = vmatprep.subr.mxu0 0.0
  %1124 = vmatpush1.msra.mxu0 0.0
  %1125 = vmatprep.subr.mxu0 0.0
  %1126 = vmatpush1.msra.mxu0 0.0
  %1127 = vmatprep.subr.mxu0 0.0
  %1128 = vmatpush1.msra.mxu0 0.0
  %1129 = vmatprep.subr.mxu0 0.0
  %1130 = vmatpush1.msra.mxu0 0.0
  %1131 = vmatprep.subr.mxu0 0.0
  %1132 = vmatpush1.msra.mxu0 0.0
  %1133 = vmatprep.subr.mxu0 0.0
  %1134 = vmatpush1.msra.mxu0 0.0
  %1135 = vmatprep.subr.mxu0 0.0
  %1136 = vmatpush1.msra.mxu0 0.0
  %1137 = vmatprep.subr.mxu0 0.0
  %1138 = vmatpush1.msra.mxu0 0.0
  %1139 = vmatprep.subr.mxu0 0.0
  %1140 = vmatpush1.msra.mxu0 0.0
  %1141 = vmatprep.subr.mxu0 0.0
  %1142 = vmatpush1.msra.mxu0 0.0
  %1143 = vmatprep.subr.mxu0 0.0
  %1144 = vmatpush1.msra.mxu0 0.0
  %1145 = vmatprep.subr.mxu0 0.0
  %1146 = vmatpush1.msra.mxu0 0.0
  %1147 = vmatprep.subr.mxu0 0.0
  %1148 = vmatpush1.msra.mxu0 0.0
  %1149 = vmatprep.subr.mxu0 0.0
  %1150 = vmatpush1.msra.mxu0 0.0
  %1151 = vmatprep.subr.mxu0 0.0
  %1152 = vmatpush1.msra.mxu0 0.0
  %1153 = vmatprep.subr.mxu0 0.0
  %1154 = vmatpush1.msra.mxu0 0.0
  %1155 = vmatprep.mubr.f32.mxu0 0.0
  %1156 = vmatmul.mubr.f32.gmra.mrb[0].mxu0 %v162
  %v1157 = vpop.f32.mrb[0].mxu0
  %v1158 = vadd.f32 0.0, %v1157
  %v1159 = vpop.f32.mrb[0].mxu0
  %v1160 = vadd.f32 0.0, %v1159
  %1161 = vmatprep.mubr.f32.mxu0 0.0
  %1162 = vmatmul.mubr.f32.gmra.mrb[0].mxu0 %v165
  %v1163 = vpop.f32.mrb[0].mxu0
  %v1164 = vadd.f32 0.0, %v1163
  %v1165 = vpop.f32.mrb[0].mxu0
  %v1166 = vadd.f32 0.0, %v1165
  %1167 = vdwg.mxu0
  %1168 = vmatprep.subr.mxu0 %v43
  %1169 = vmatpush1.msra.mxu0 %v42
  %1170 = vmatprep.subr.mxu0 %v79
  %1171 = vmatpush1.msra.mxu0 %v78
  %1172 = vmatprep.subr.mxu0 %v115
  %1173 = vmatpush1.msra.mxu0 %v114
  %1174 = vmatprep.subr.mxu0 %v151
  %1175 = vmatpush1.msra.mxu0 %v150
  %1176 = vmatprep.subr.mxu0 0.0
  %1177 = vmatpush1.msra.mxu0 0.0
  %1178 = vmatprep.subr.mxu0 0.0
  %1179 = vmatpush1.msra.mxu0 0.0
  %1180 = vmatprep.subr.mxu0 0.0
  %1181 = vmatpush1.msra.mxu0 0.0
  %1182 = vmatprep.subr.mxu0 0.0
  %1183 = vmatpush1.msra.mxu0 0.0
  %1184 = vmatprep.subr.mxu0 0.0
  %1185 = vmatpush1.msra.mxu0 0.0
  %1186 = vmatprep.subr.mxu0 0.0
  %1187 = vmatpush1.msra.mxu0 0.0
  %1188 = vmatprep.subr.mxu0 0.0
  %1189 = vmatpush1.msra.mxu0 0.0
  %1190 = vmatprep.subr.mxu0 0.0
  %1191 = vmatpush1.msra.mxu0 0.0
  %1192 = vmatprep.subr.mxu0 0.0
  %1193 = vmatpush1.msra.mxu0 0.0
  %1194 = vmatprep.subr.mxu0 0.0
  %1195 = vmatpush1.msra.mxu0 0.0
  %1196 = vmatprep.subr.mxu0 0.0
  %1197 = vmatpush1.msra.mxu0 0.0
  %1198 = vmatprep.subr.mxu0 0.0
  %1199 = vmatpush1.msra.mxu0 0.0
  %1200 = vmatprep.subr.mxu0 0.0
  %1201 = vmatpush1.msra.mxu0 0.0
  %1202 = vmatprep.subr.mxu0 0.0
  %1203 = vmatpush1.msra.mxu0 0.0
  %1204 = vmatprep.subr.mxu0 0.0
  %1205 = vmatpush1.msra.mxu0 0.0
  %1206 = vmatprep.subr.mxu0 0.0
  %1207 = vmatpush1.msra.mxu0 0.0
  %1208 = vmatprep.subr.mxu0 0.0
  %1209 = vmatpush1.msra.mxu0 0.0
  %1210 = vmatprep.subr.mxu0 0.0
  %1211 = vmatpush1.msra.mxu0 0.0
  %1212 = vmatprep.subr.mxu0 0.0
  %1213 = vmatpush1.msra.mxu0 0.0
  %1214 = vmatprep.subr.mxu0 0.0
  %1215 = vmatpush1.msra.mxu0 0.0
  %1216 = vmatprep.subr.mxu0 0.0
  %1217 = vmatpush1.msra.mxu0 0.0
  %1218 = vmatprep.subr.mxu0 0.0
  %1219 = vmatpush1.msra.mxu0 0.0
  %1220 = vmatprep.subr.mxu0 0.0
  %1221 = vmatpush1.msra.mxu0 0.0
  %1222 = vmatprep.subr.mxu0 0.0
  %1223 = vmatpush1.msra.mxu0 0.0
  %1224 = vmatprep.subr.mxu0 0.0
  %1225 = vmatpush1.msra.mxu0 0.0
  %1226 = vmatprep.subr.mxu0 0.0
  %1227 = vmatpush1.msra.mxu0 0.0
  %1228 = vmatprep.subr.mxu0 0.0
  %1229 = vmatpush1.msra.mxu0 0.0
  %1230 = vmatprep.subr.mxu0 0.0
  %1231 = vmatpush1.msra.mxu0 0.0
  %1232 = vmatprep.mubr.f32.mxu0 0.0
  %1233 = vmatmul.mubr.f32.gmra.mrb[0].mxu0 %v162
  %v1234 = vpop.f32.mrb[0].mxu0
  %v1235 = vadd.f32 0.0, %v1234
  %v1236 = vpop.f32.mrb[0].mxu0
  %v1237 = vadd.f32 0.0, %v1236
  %1238 = vmatprep.mubr.f32.mxu0 0.0
  %1239 = vmatmul.mubr.f32.gmra.mrb[0].mxu0 %v165
  %v1240 = vpop.f32.mrb[0].mxu0
  %v1241 = vadd.f32 0.0, %v1240
  %v1242 = vpop.f32.mrb[0].mxu0
  %v1243 = vadd.f32 0.0, %v1242
  %1244 = vdwg.mxu0
  %1245 = vmatprep.subr.mxu0 %v45
  %1246 = vmatpush1.msra.mxu0 %v44
  %1247 = vmatprep.subr.mxu0 %v81
  %1248 = vmatpush1.msra.mxu0 %v80
  %1249 = vmatprep.subr.mxu0 %v117
  %1250 = vmatpush1.msra.mxu0 %v116
  %1251 = vmatprep.subr.mxu0 %v153
  %1252 = vmatpush1.msra.mxu0 %v152
  %1253 = vmatprep.subr.mxu0 0.0
  %1254 = vmatpush1.msra.mxu0 0.0
  %1255 = vmatprep.subr.mxu0 0.0
  %1256 = vmatpush1.msra.mxu0 0.0
  %1257 = vmatprep.subr.mxu0 0.0
  %1258 = vmatpush1.msra.mxu0 0.0
  %1259 = vmatprep.subr.mxu0 0.0
  %1260 = vmatpush1.msra.mxu0 0.0
  %1261 = vmatprep.subr.mxu0 0.0
  %1262 = vmatpush1.msra.mxu0 0.0
  %1263 = vmatprep.subr.mxu0 0.0
  %1264 = vmatpush1.msra.mxu0 0.0
  %1265 = vmatprep.subr.mxu0 0.0
  %1266 = vmatpush1.msra.mxu0 0.0
  %1267 = vmatprep.subr.mxu0 0.0
  %1268 = vmatpush1.msra.mxu0 0.0
  %1269 = vmatprep.subr.mxu0 0.0
  %1270 = vmatpush1.msra.mxu0 0.0
  %1271 = vmatprep.subr.mxu0 0.0
  %1272 = vmatpush1.msra.mxu0 0.0
  %1273 = vmatprep.subr.mxu0 0.0
  %1274 = vmatpush1.msra.mxu0 0.0
  %1275 = vmatprep.subr.mxu0 0.0
  %1276 = vmatpush1.msra.mxu0 0.0
  %1277 = vmatprep.subr.mxu0 0.0
  %1278 = vmatpush1.msra.mxu0 0.0
  %1279 = vmatprep.subr.mxu0 0.0
  %1280 = vmatpush1.msra.mxu0 0.0
  %1281 = vmatprep.subr.mxu0 0.0
  %1282 = vmatpush1.msra.mxu0 0.0
  %1283 = vmatprep.subr.mxu0 0.0
  %1284 = vmatpush1.msra.mxu0 0.0
  %1285 = vmatprep.subr.mxu0 0.0
  %1286 = vmatpush1.msra.mxu0 0.0
  %1287 = vmatprep.subr.mxu0 0.0
  %1288 = vmatpush1.msra.mxu0 0.0
  %1289 = vmatprep.subr.mxu0 0.0
  %1290 = vmatpush1.msra.mxu0 0.0
  %1291 = vmatprep.subr.mxu0 0.0
  %1292 = vmatpush1.msra.mxu0 0.0
  %1293 = vmatprep.subr.mxu0 0.0
  %1294 = vmatpush1.msra.mxu0 0.0
  %1295 = vmatprep.subr.mxu0 0.0
  %1296 = vmatpush1.msra.mxu0 0.0
  %1297 = vmatprep.subr.mxu0 0.0
  %1298 = vmatpush1.msra.mxu0 0.0
  %1299 = vmatprep.subr.mxu0 0.0
  %1300 = vmatpush1.msra.mxu0 0.0
  %1301 = vmatprep.subr.mxu0 0.0
  %1302 = vmatpush1.msra.mxu0 0.0
  %1303 = vmatprep.subr.mxu0 0.0
  %1304 = vmatpush1.msra.mxu0 0.0
  %1305 = vmatprep.subr.mxu0 0.0
  %1306 = vmatpush1.msra.mxu0 0.0
  %1307 = vmatprep.subr.mxu0 0.0
  %1308 = vmatpush1.msra.mxu0 0.0
  %1309 = vmatprep.mubr.f32.mxu0 0.0
  %1310 = vmatmul.mubr.f32.gmra.mrb[0].mxu0 %v162
  %v1311 = vpop.f32.mrb[0].mxu0
  %v1312 = vadd.f32 0.0, %v1311
  %v1313 = vpop.f32.mrb[0].mxu0
  %v1314 = vadd.f32 0.0, %v1313
  %1315 = vmatprep.mubr.f32.mxu0 0.0
  %1316 = vmatmul.mubr.f32.gmra.mrb[0].mxu0 %v165
  %v1317 = vpop.f32.mrb[0].mxu0
  %v1318 = vadd.f32 0.0, %v1317
  %v1319 = vpop.f32.mrb[0].mxu0
  %v1320 = vadd.f32 0.0, %v1319
  %1321 = vdwg.mxu0
  %1322 = vmatprep.subr.mxu0 %v47
  %1323 = vmatpush1.msra.mxu0 %v46
  %1324 = vmatprep.subr.mxu0 %v83
  %1325 = vmatpush1.msra.mxu0 %v82
  %1326 = vmatprep.subr.mxu0 %v119
  %1327 = vmatpush1.msra.mxu0 %v118
  %1328 = vmatprep.subr.mxu0 %v155
  %1329 = vmatpush1.msra.mxu0 %v154
  %1330 = vmatprep.subr.mxu0 0.0
  %1331 = vmatpush1.msra.mxu0 0.0
  %1332 = vmatprep.subr.mxu0 0.0
  %1333 = vmatpush1.msra.mxu0 0.0
  %1334 = vmatprep.subr.mxu0 0.0
  %1335 = vmatpush1.msra.mxu0 0.0
  %1336 = vmatprep.subr.mxu0 0.0
  %1337 = vmatpush1.msra.mxu0 0.0
  %1338 = vmatprep.subr.mxu0 0.0
  %1339 = vmatpush1.msra.mxu0 0.0
  %1340 = vmatprep.subr.mxu0 0.0
  %1341 = vmatpush1.msra.mxu0 0.0
  %1342 = vmatprep.subr.mxu0 0.0
  %1343 = vmatpush1.msra.mxu0 0.0
  %1344 = vmatprep.subr.mxu0 0.0
  %1345 = vmatpush1.msra.mxu0 0.0
  %1346 = vmatprep.subr.mxu0 0.0
  %1347 = vmatpush1.msra.mxu0 0.0
  %1348 = vmatprep.subr.mxu0 0.0
  %1349 = vmatpush1.msra.mxu0 0.0
  %1350 = vmatprep.subr.mxu0 0.0
  %1351 = vmatpush1.msra.mxu0 0.0
  %1352 = vmatprep.subr.mxu0 0.0
  %1353 = vmatpush1.msra.mxu0 0.0
  %1354 = vmatprep.subr.mxu0 0.0
  %1355 = vmatpush1.msra.mxu0 0.0
  %1356 = vmatprep.subr.mxu0 0.0
  %1357 = vmatpush1.msra.mxu0 0.0
  %1358 = vmatprep.subr.mxu0 0.0
  %1359 = vmatpush1.msra.mxu0 0.0
  %1360 = vmatprep.subr.mxu0 0.0
  %1361 = vmatpush1.msra.mxu0 0.0
  %1362 = vmatprep.subr.mxu0 0.0
  %1363 = vmatpush1.msra.mxu0 0.0
  %1364 = vmatprep.subr.mxu0 0.0
  %1365 = vmatpush1.msra.mxu0 0.0
  %1366 = vmatprep.subr.mxu0 0.0
  %1367 = vmatpush1.msra.mxu0 0.0
  %1368 = vmatprep.subr.mxu0 0.0
  %1369 = vmatpush1.msra.mxu0 0.0
  %1370 = vmatprep.subr.mxu0 0.0
  %1371 = vmatpush1.msra.mxu0 0.0
  %1372 = vmatprep.subr.mxu0 0.0
  %1373 = vmatpush1.msra.mxu0 0.0
  %1374 = vmatprep.subr.mxu0 0.0
  %1375 = vmatpush1.msra.mxu0 0.0
  %1376 = vmatprep.subr.mxu0 0.0
  %1377 = vmatpush1.msra.mxu0 0.0
  %1378 = vmatprep.subr.mxu0 0.0
  %1379 = vmatpush1.msra.mxu0 0.0
  %1380 = vmatprep.subr.mxu0 0.0
  %1381 = vmatpush1.msra.mxu0 0.0
  %1382 = vmatprep.subr.mxu0 0.0
  %1383 = vmatpush1.msra.mxu0 0.0
  %1384 = vmatprep.subr.mxu0 0.0
  %1385 = vmatpush1.msra.mxu0 0.0
  %1386 = vmatprep.mubr.f32.mxu0 0.0
  %1387 = vmatmul.mubr.f32.gmra.mrb[0].mxu0 %v162
  %v1388 = vpop.f32.mrb[0].mxu0
  %v1389 = vadd.f32 0.0, %v1388
  %v1390 = vpop.f32.mrb[0].mxu0
  %v1391 = vadd.f32 0.0, %v1390
  %1392 = vmatprep.mubr.f32.mxu0 0.0
  %1393 = vmatmul.mubr.f32.gmra.mrb[0].mxu0 %v165
  %v1394 = vpop.f32.mrb[0].mxu0
  %v1395 = vadd.f32 0.0, %v1394
  %v1396 = vpop.f32.mrb[0].mxu0
  %v1397 = vadd.f32 0.0, %v1396
  %1398 = vdwg.mxu0
  %1399 = vmatprep.subr.mxu0 %v49
  %1400 = vmatpush1.msra.mxu0 %v48
  %1401 = vmatprep.subr.mxu0 %v85
  %1402 = vmatpush1.msra.mxu0 %v84
  %1403 = vmatprep.subr.mxu0 %v121
  %1404 = vmatpush1.msra.mxu0 %v120
  %1405 = vmatprep.subr.mxu0 %v157
  %1406 = vmatpush1.msra.mxu0 %v156
  %1407 = vmatprep.subr.mxu0 0.0
  %1408 = vmatpush1.msra.mxu0 0.0
  %1409 = vmatprep.subr.mxu0 0.0
  %1410 = vmatpush1.msra.mxu0 0.0
  %1411 = vmatprep.subr.mxu0 0.0
  %1412 = vmatpush1.msra.mxu0 0.0
  %1413 = vmatprep.subr.mxu0 0.0
  %1414 = vmatpush1.msra.mxu0 0.0
  %1415 = vmatprep.subr.mxu0 0.0
  %1416 = vmatpush1.msra.mxu0 0.0
  %1417 = vmatprep.subr.mxu0 0.0
  %1418 = vmatpush1.msra.mxu0 0.0
  %1419 = vmatprep.subr.mxu0 0.0
  %1420 = vmatpush1.msra.mxu0 0.0
  %1421 = vmatprep.subr.mxu0 0.0
  %1422 = vmatpush1.msra.mxu0 0.0
  %1423 = vmatprep.subr.mxu0 0.0
  %1424 = vmatpush1.msra.mxu0 0.0
  %1425 = vmatprep.subr.mxu0 0.0
  %1426 = vmatpush1.msra.mxu0 0.0
  %1427 = vmatprep.subr.mxu0 0.0
  %1428 = vmatpush1.msra.mxu0 0.0
  %1429 = vmatprep.subr.mxu0 0.0
  %1430 = vmatpush1.msra.mxu0 0.0
  %1431 = vmatprep.subr.mxu0 0.0
  %1432 = vmatpush1.msra.mxu0 0.0
  %1433 = vmatprep.subr.mxu0 0.0
  %1434 = vmatpush1.msra.mxu0 0.0
  %1435 = vmatprep.subr.mxu0 0.0
  %1436 = vmatpush1.msra.mxu0 0.0
  %1437 = vmatprep.subr.mxu0 0.0
  %1438 = vmatpush1.msra.mxu0 0.0
  %1439 = vmatprep.subr.mxu0 0.0
  %1440 = vmatpush1.msra.mxu0 0.0
  %1441 = vmatprep.subr.mxu0 0.0
  %1442 = vmatpush1.msra.mxu0 0.0
  %1443 = vmatprep.subr.mxu0 0.0
  %1444 = vmatpush1.msra.mxu0 0.0
  %1445 = vmatprep.subr.mxu0 0.0
  %1446 = vmatpush1.msra.mxu0 0.0
  %1447 = vmatprep.subr.mxu0 0.0
  %1448 = vmatpush1.msra.mxu0 0.0
  %1449 = vmatprep.subr.mxu0 0.0
  %1450 = vmatpush1.msra.mxu0 0.0
  %1451 = vmatprep.subr.mxu0 0.0
  %1452 = vmatpush1.msra.mxu0 0.0
  %1453 = vmatprep.subr.mxu0 0.0
  %1454 = vmatpush1.msra.mxu0 0.0
  %1455 = vmatprep.subr.mxu0 0.0
  %1456 = vmatpush1.msra.mxu0 0.0
  %1457 = vmatprep.subr.mxu0 0.0
  %1458 = vmatpush1.msra.mxu0 0.0
  %1459 = vmatprep.subr.mxu0 0.0
  %1460 = vmatpush1.msra.mxu0 0.0
  %1461 = vmatprep.subr.mxu0 0.0
  %1462 = vmatpush1.msra.mxu0 0.0
  %1463 = vmatprep.mubr.f32.mxu0 0.0
  %1464 = vmatmul.mubr.f32.gmra.mrb[0].mxu0 %v162
  %v1465 = vpop.f32.mrb[0].mxu0
  %v1466 = vadd.f32 0.0, %v1465
  %v1467 = vpop.f32.mrb[0].mxu0
  %v1468 = vadd.f32 0.0, %v1467
  %1469 = vmatprep.mubr.f32.mxu0 0.0
  %1470 = vmatmul.mubr.f32.gmra.mrb[0].mxu0 %v165
  %v1471 = vpop.f32.mrb[0].mxu0
  %v1472 = vadd.f32 0.0, %v1471
  %v1473 = vpop.f32.mrb[0].mxu0
  %v1474 = vadd.f32 0.0, %v1473
  %1475 = vdwg.mxu0
  %1476 = vmatprep.subr.mxu0 %v51
  %1477 = vmatpush1.msra.mxu0 %v50
  %1478 = vmatprep.subr.mxu0 %v87
  %1479 = vmatpush1.msra.mxu0 %v86
  %1480 = vmatprep.subr.mxu0 %v123
  %1481 = vmatpush1.msra.mxu0 %v122
  %1482 = vmatprep.subr.mxu0 %v159
  %1483 = vmatpush1.msra.mxu0 %v158
  %1484 = vmatprep.subr.mxu0 0.0
  %1485 = vmatpush1.msra.mxu0 0.0
  %1486 = vmatprep.subr.mxu0 0.0
  %1487 = vmatpush1.msra.mxu0 0.0
  %1488 = vmatprep.subr.mxu0 0.0
  %1489 = vmatpush1.msra.mxu0 0.0
  %1490 = vmatprep.subr.mxu0 0.0
  %1491 = vmatpush1.msra.mxu0 0.0
  %1492 = vmatprep.subr.mxu0 0.0
  %1493 = vmatpush1.msra.mxu0 0.0
  %1494 = vmatprep.subr.mxu0 0.0
  %1495 = vmatpush1.msra.mxu0 0.0
  %1496 = vmatprep.subr.mxu0 0.0
  %1497 = vmatpush1.msra.mxu0 0.0
  %1498 = vmatprep.subr.mxu0 0.0
  %1499 = vmatpush1.msra.mxu0 0.0
  %1500 = vmatprep.subr.mxu0 0.0
  %1501 = vmatpush1.msra.mxu0 0.0
  %1502 = vmatprep.subr.mxu0 0.0
  %1503 = vmatpush1.msra.mxu0 0.0
  %1504 = vmatprep.subr.mxu0 0.0
  %1505 = vmatpush1.msra.mxu0 0.0
  %1506 = vmatprep.subr.mxu0 0.0
  %1507 = vmatpush1.msra.mxu0 0.0
  %1508 = vmatprep.subr.mxu0 0.0
  %1509 = vmatpush1.msra.mxu0 0.0
  %1510 = vmatprep.subr.mxu0 0.0
  %1511 = vmatpush1.msra.mxu0 0.0
  %1512 = vmatprep.subr.mxu0 0.0
  %1513 = vmatpush1.msra.mxu0 0.0
  %1514 = vmatprep.subr.mxu0 0.0
  %1515 = vmatpush1.msra.mxu0 0.0
  %1516 = vmatprep.subr.mxu0 0.0
  %1517 = vmatpush1.msra.mxu0 0.0
  %1518 = vmatprep.subr.mxu0 0.0
  %1519 = vmatpush1.msra.mxu0 0.0
  %1520 = vmatprep.subr.mxu0 0.0
  %1521 = vmatpush1.msra.mxu0 0.0
  %1522 = vmatprep.subr.mxu0 0.0
  %1523 = vmatpush1.msra.mxu0 0.0
  %1524 = vmatprep.subr.mxu0 0.0
  %1525 = vmatpush1.msra.mxu0 0.0
  %1526 = vmatprep.subr.mxu0 0.0
  %1527 = vmatpush1.msra.mxu0 0.0
  %1528 = vmatprep.subr.mxu0 0.0
  %1529 = vmatpush1.msra.mxu0 0.0
  %1530 = vmatprep.subr.mxu0 0.0
  %1531 = vmatpush1.msra.mxu0 0.0
  %1532 = vmatprep.subr.mxu0 0.0
  %1533 = vmatpush1.msra.mxu0 0.0
  %1534 = vmatprep.subr.mxu0 0.0
  %1535 = vmatpush1.msra.mxu0 0.0
  %1536 = vmatprep.subr.mxu0 0.0
  %1537 = vmatpush1.msra.mxu0 0.0
  %1538 = vmatprep.subr.mxu0 0.0
  %1539 = vmatpush1.msra.mxu0 0.0
  %1540 = vmatprep.mubr.f32.mxu0 0.0
  %1541 = vmatmul.mubr.f32.gmra.mrb[0].mxu0 %v162
  %v1542 = vpop.f32.mrb[0].mxu0
  %v1543 = vadd.f32 0.0, %v1542
  %v1544 = vpop.f32.mrb[0].mxu0
  %v1545 = vadd.f32 0.0, %v1544
  %1546 = vmatprep.mubr.f32.mxu0 0.0
  %1547 = vmatmul.mubr.f32.gmra.mrb[0].mxu0 %v165
  %v1548 = vpop.f32.mrb[0].mxu0
  %v1549 = vadd.f32 0.0, %v1548
  %v1550 = vpop.f32.mrb[0].mxu0
  %v1551 = vadd.f32 0.0, %v1550
  %1552 = vdwg.mxu0
  %v1553 = vmax.f32 %v234, %v544
  %v1554 = vmax.f32 %v236, %v619
  %v1555 = vmax.f32 %v311, %v621
  %v1556 = vmax.f32 %v313, %v696
  %v1557 = vmax.f32 %v388, %v698
  %v1558 = vmax.f32 %v390, %v773
  %v1559 = vmax.f32 %v465, %v775
  %v1560 = vmax.f32 %v467, %v850
  %v1561 = vmax.f32 %v542, %v852
  %v1562 = vmax.f32 %v240, %v550
  %v1563 = vmax.f32 %v242, %v625
  %v1564 = vmax.f32 %v317, %v627
  %v1565 = vmax.f32 %v319, %v702
  %v1566 = vmax.f32 %v394, %v704
  %v1567 = vmax.f32 %v396, %v779
  %v1568 = vmax.f32 %v471, %v781
  %v1569 = vmax.f32 %v473, %v856
  %v1570 = vmax.f32 %v548, %v858
  %v1571 = vmax.f32 %v927, %v1237
  %v1572 = vmax.f32 %v929, %v1312
  %v1573 = vmax.f32 %v1004, %v1314
  %v1574 = vmax.f32 %v1006, %v1389
  %v1575 = vmax.f32 %v1081, %v1391
  %v1576 = vmax.f32 %v1083, %v1466
  %v1577 = vmax.f32 %v1158, %v1468
  %v1578 = vmax.f32 %v1160, %v1543
  %v1579 = vmax.f32 %v1235, %v1545
  %v1580 = vmax.f32 %v933, %v1243
  %v1581 = vmax.f32 %v935, %v1318
  %v1582 = vmax.f32 %v1010, %v1320
  %v1583 = vmax.f32 %v1012, %v1395
  %v1584 = vmax.f32 %v1087, %v1397
  %v1585 = vmax.f32 %v1089, %v1472
  %v1586 = vmax.f32 %v1164, %v1474
  %v1587 = vmax.f32 %v1166, %v1549
  %v1588 = vmax.f32 %v1241, %v1551
  %v1589 = vmax.f32 %v1553, %v1571
  %v1590 = vmax.f32 %v1554, %v1572
  %v1591 = vmax.f32 %v1555, %v1573
  %v1592 = vmax.f32 %v1556, %v1574
  %v1593 = vmax.f32 %v1557, %v1575
  %v1594 = vmax.f32 %v1558, %v1576
  %v1595 = vmax.f32 %v1559, %v1577
  %v1596 = vmax.f32 %v1560, %v1578
  %v1597 = vmax.f32 %v1561, %v1579
  %v1598 = vmax.f32 %v1562, %v1580
  %v1599 = vmax.f32 %v1563, %v1581
  %v1600 = vmax.f32 %v1564, %v1582
  %v1601 = vmax.f32 %v1565, %v1583
  %v1602 = vmax.f32 %v1566, %v1584
  %v1603 = vmax.f32 %v1567, %v1585
  %v1604 = vmax.f32 %v1568, %v1586
  %v1605 = vmax.f32 %v1569, %v1587
  %v1606 = vmax.f32 %v1570, %v1588
  %v1607 = vld [vmem:[%s2] sm:$0xff]
  %v1608 = vld [vmem:[%s2 + $0x8] sm:$0x3]
  %1610 = vset.pattern.permute.xlu0 0
  %1611 = vperm.xlu0 %1610, %v1607
  %v1612 = vpop.permute.xlu0 %1611
  %1615 = vset.pattern.permute.xlu0 0
  %1616 = vperm.xlu0 %1615, %v1608
  %v1617 = vpop.permute.xlu0 %1616
  %v1619 = vadd.f32 %v1589, %v1612
  %v1620 = vadd.f32 %v1590, %v1612
  %v1621 = vadd.f32 %v1591, %v1612
  %v1622 = vadd.f32 %v1592, %v1612
  %v1623 = vadd.f32 %v1593, %v1612
  %v1624 = vadd.f32 %v1594, %v1612
  %v1625 = vadd.f32 %v1595, %v1612
  %v1626 = vadd.f32 %v1596, %v1612
  %v1627 = vadd.f32 %v1597, %v1612
  %v1628 = vadd.f32 %v1598, %v1617
  %v1629 = vadd.f32 %v1599, %v1617
  %v1630 = vadd.f32 %v1600, %v1617
  %v1631 = vadd.f32 %v1601, %v1617
  %v1632 = vadd.f32 %v1602, %v1617
  %v1633 = vadd.f32 %v1603, %v1617
  %v1634 = vadd.f32 %v1604, %v1617
  %v1635 = vadd.f32 %v1605, %v1617
  %v1636 = vadd.f32 %v1606, %v1617
  %v1637 = vmax.f32 %v1619, 0.0
  %v1638 = vmax.f32 %v1620, 0.0
  %v1639 = vmax.f32 %v1621, 0.0
  %v1640 = vmax.f32 %v1622, 0.0
  %v1641 = vmax.f32 %v1623, 0.0
  %v1642 = vmax.f32 %v1624, 0.0
  %v1643 = vmax.f32 %v1625, 0.0
  %v1644 = vmax.f32 %v1626, 0.0
  %v1645 = vmax.f32 %v1627, 0.0
  %v1646 = vmax.f32 %v1628, 0.0
  %v1647 = vmax.f32 %v1629, 0.0
  %v1648 = vmax.f32 %v1630, 0.0
  %v1649 = vmax.f32 %v1631, 0.0
  %v1650 = vmax.f32 %v1632, 0.0
  %v1651 = vmax.f32 %v1633, 0.0
  %v1652 = vmax.f32 %v1634, 0.0
  %v1653 = vmax.f32 %v1635, 0.0
  %v1654 = vmax.f32 %v1636, 0.0
  %1655 = vst [vmem:[%s3] sm:$0xff] %v1637
  %1656 = vst [vmem:[%s3 + $0x8] sm:$0xff] %v1638
  %1657 = vst [vmem:[%s3 + $0x10] sm:$0xff] %v1639
  %1658 = vst [vmem:[%s3 + $0x18] sm:$0xff] %v1640
  %1659 = vst [vmem:[%s3 + $0x20] sm:$0xff] %v1641
  %1660 = vst [vmem:[%s3 + $0x28] sm:$0xff] %v1642
  %1661 = vst [vmem:[%s3 + $0x30] sm:$0xff] %v1643
  %1662 = vst [vmem:[%s3 + $0x38] sm:$0xff] %v1644
  %1663 = vst [vmem:[%s3 + $0x40] sm:$0xff] %v1645
  %1664 = vst [vmem:[%s3 + $0x48] sm:$0x3] %v1646
  %1665 = vst [vmem:[%s3 + $0x50] sm:$0x3] %v1647
  %1666 = vst [vmem:[%s3 + $0x58] sm:$0x3] %v1648
  %1667 = vst [vmem:[%s3 + $0x60] sm:$0x3] %v1649
  %1668 = vst [vmem:[%s3 + $0x68] sm:$0x3] %v1650
  %1669 = vst [vmem:[%s3 + $0x70] sm:$0x3] %v1651
  %1670 = vst [vmem:[%s3 + $0x78] sm:$0x3] %v1652
  %1671 = vst [vmem:[%s3 + $0x80] sm:$0x3] %v1653
  %1672 = vst [vmem:[%s3 + $0x88] sm:$0x3] %v1654
  // Predicated region
  $region14: #{net_forward.2} parent=0 // pred_check
    _
  $region15: #{net_forward.2} parent=0 // pred_check_branch
    %1674 = sbr.rel (0) target = $region17
  $region16: #{net_forward.2} parent=0 // pred_region
    _
  $region17: #{net_forward.2} parent=0 // pred_fallthru
    _
  // Predicated region
  $region18: #{net_forward.2} parent=0 // pred_check
    _
  $region19: #{net_forward.2} parent=0 // pred_check_branch
    %1676 = sbr.rel (0) target = $region21
  $region20: #{net_forward.2} parent=0 // pred_region
    _
  $region21: #{net_forward.2} parent=0 // pred_fallthru
    _

// kernel: net_forward.3
$region0: #{net_forward.3}
  #allocation0 [shape = 'u32[]', space=smem, size = 0x4, offset = 0x4, fixed_abs, tag = 'smem constant byte address 0x4 - core index']
  #allocation1 [shape = 'u32[144,128]{1,0:T(1,128)}', space=vmem, size = 0x12000, scoped, tag = 'internal scratch']
  #allocation2 [shape = 'f32[8,320]{1,0:T(8,128)}', space=vmem, size = 0x3000, scoped, tag = 'scratch operand']
  %s0 = inlined_call_operand.vmem [shape: f32[512,256], index: 0, kind: input, shape index: {}]
  %s1 = inlined_call_operand.vmem [shape: f32[256,20], index: 1, kind: input, shape index: {}]
  %s2 = inlined_call_operand.vmem [shape: f32[1,20], index: 2, kind: input, shape index: {}]
  %s3 = inlined_call_operand.vmem [shape: f32[320,50], index: 3, kind: input, shape index: {}]
  %s4 = inlined_call_operand.vmem [shape: f32[1,50], index: 4, kind: input, shape index: {}]
  %s5 = inlined_call_operand.vmem [shape: f32[50,10], index: 5, kind: input, shape index: {}]
  %s6 = inlined_call_operand.vmem [shape: f32[1,10], index: 6, kind: input, shape index: {}]
  %s7 = inlined_call_operand.vmem [shape: f32[8,10], index: 7, kind: output, shape index: {}]
  %s8 = sld [smem:[#allocation0]]
  $region38: #{net_forward.3} parent=0
    _
  %s10 = ssub.s32 1, %s8
  %s11 = scalar_select 0, %s10, %s8
  // Predicated region
  $region2: #{net_forward.3} parent=0 // pred_check
    _
  $region3: #{net_forward.3} parent=0 // pred_check_branch
    %13 = sbr.rel (0) target = $region5
  $region4: #{net_forward.3} parent=0 // pred_region
    _
  $region5: #{net_forward.3} parent=0 // pred_fallthru
    _
  // Predicated region
  $region6: #{net_forward.3} parent=0 // pred_check
    _
  $region7: #{net_forward.3} parent=0 // pred_check_branch
    %15 = sbr.rel (0) target = $region9
  $region8: #{net_forward.3} parent=0 // pred_region
    _
  $region9: #{net_forward.3} parent=0 // pred_fallthru
    _
  // Predicated region
  $region10: #{net_forward.3} parent=0 // pred_check
    _
  $region11: #{net_forward.3} parent=0 // pred_check_branch
    %17 = sbr.rel (0) target = $region13
  $region12: #{net_forward.3} parent=0 // pred_region
    _
  $region13: #{net_forward.3} parent=0 // pred_fallthru
    _
  // Predicated region
  $region14: #{net_forward.3} parent=0 // pred_check
    _
  $region15: #{net_forward.3} parent=0 // pred_check_branch
    %19 = sbr.rel (0) target = $region17
  $region16: #{net_forward.3} parent=0 // pred_region
    _
  $region17: #{net_forward.3} parent=0 // pred_fallthru
    _
  // Predicated region
  $region18: #{net_forward.3} parent=0 // pred_check
    _
  $region19: #{net_forward.3} parent=0 // pred_check_branch
    %21 = sbr.rel (0) target = $region21
  $region20: #{net_forward.3} parent=0 // pred_region
    _
  $region21: #{net_forward.3} parent=0 // pred_fallthru
    _
  // Predicated region
  $region22: #{net_forward.3} parent=0 // pred_check
    _
  $region23: #{net_forward.3} parent=0 // pred_check_branch
    %23 = sbr.rel (0) target = $region25
  $region24: #{net_forward.3} parent=0 // pred_region
    _
  $region25: #{net_forward.3} parent=0 // pred_fallthru
    _
  // Predicated region
  $region26: #{net_forward.3} parent=0 // pred_check
    _
  $region27: #{net_forward.3} parent=0 // pred_check_branch
    %25 = sbr.rel (0) target = $region29
  $region28: #{net_forward.3} parent=0 // pred_region
    _
  $region29: #{net_forward.3} parent=0 // pred_fallthru
    _
  %v26 = vld [vmem:[%s0] sm:$0xff]
  %v27 = vld [vmem:[%s0 + $0x8] sm:$0xff]
  %v28 = vld [vmem:[%s0 + $0x10] sm:$0xff]
  %v29 = vld [vmem:[%s0 + $0x18] sm:$0xff]
  %v30 = vld [vmem:[%s0 + $0x20] sm:$0xff]
  %v31 = vld [vmem:[%s0 + $0x28] sm:$0xff]
  %v32 = vld [vmem:[%s0 + $0x30] sm:$0xff]
  %v33 = vld [vmem:[%s0 + $0x38] sm:$0xff]
  %v34 = vld [vmem:[%s0 + $0x40] sm:$0xff]
  %v35 = vld [vmem:[%s0 + $0x48] sm:$0xff]
  %v36 = vld [vmem:[%s0 + $0x50] sm:$0xff]
  %v37 = vld [vmem:[%s0 + $0x58] sm:$0xff]
  %v38 = vld [vmem:[%s0 + $0x60] sm:$0xff]
  %v39 = vld [vmem:[%s0 + $0x68] sm:$0xff]
  %v40 = vld [vmem:[%s0 + $0x70] sm:$0xff]
  %v41 = vld [vmem:[%s0 + $0x78] sm:$0xff]
  %v42 = vld [vmem:[%s0 + $0x80] sm:$0xff]
  %v43 = vld [vmem:[%s0 + $0x88] sm:$0xff]
  %v44 = vld [vmem:[%s0 + $0x90] sm:$0xff]
  %v45 = vld [vmem:[%s0 + $0x98] sm:$0xff]
  %v46 = vld [vmem:[%s0 + $0xa0] sm:$0xff]
  %v47 = vld [vmem:[%s0 + $0xa8] sm:$0xff]
  %v48 = vld [vmem:[%s0 + $0xb0] sm:$0xff]
  %v49 = vld [vmem:[%s0 + $0xb8] sm:$0xff]
  %v50 = vld [vmem:[%s0 + $0xc0] sm:$0xff]
  %v51 = vld [vmem:[%s0 + $0xc8] sm:$0xff]
  %v52 = vld [vmem:[%s0 + $0xd0] sm:$0xff]
  %v53 = vld [vmem:[%s0 + $0xd8] sm:$0xff]
  %v54 = vld [vmem:[%s0 + $0xe0] sm:$0xff]
  %v55 = vld [vmem:[%s0 + $0xe8] sm:$0xff]
  %v56 = vld [vmem:[%s0 + $0xf0] sm:$0xff]
  %v57 = vld [vmem:[%s0 + $0xf8] sm:$0xff]
  %v58 = vld [vmem:[%s0 + $0x100] sm:$0xff]
  %v59 = vld [vmem:[%s0 + $0x108] sm:$0xff]
  %v60 = vld [vmem:[%s0 + $0x110] sm:$0xff]
  %v61 = vld [vmem:[%s0 + $0x118] sm:$0xff]
  %v62 = vld [vmem:[%s0 + $0x120] sm:$0xff]
  %v63 = vld [vmem:[%s0 + $0x128] sm:$0xff]
  %v64 = vld [vmem:[%s0 + $0x130] sm:$0xff]
  %v65 = vld [vmem:[%s0 + $0x138] sm:$0xff]
  %v66 = vld [vmem:[%s0 + $0x140] sm:$0xff]
  %v67 = vld [vmem:[%s0 + $0x148] sm:$0xff]
  %v68 = vld [vmem:[%s0 + $0x150] sm:$0xff]
  %v69 = vld [vmem:[%s0 + $0x158] sm:$0xff]
  %v70 = vld [vmem:[%s0 + $0x160] sm:$0xff]
  %v71 = vld [vmem:[%s0 + $0x168] sm:$0xff]
  %v72 = vld [vmem:[%s0 + $0x170] sm:$0xff]
  %v73 = vld [vmem:[%s0 + $0x178] sm:$0xff]
  %v74 = vld [vmem:[%s0 + $0x180] sm:$0xff]
  %v75 = vld [vmem:[%s0 + $0x188] sm:$0xff]
  %v76 = vld [vmem:[%s0 + $0x190] sm:$0xff]
  %v77 = vld [vmem:[%s0 + $0x198] sm:$0xff]
  %v78 = vld [vmem:[%s0 + $0x1a0] sm:$0xff]
  %v79 = vld [vmem:[%s0 + $0x1a8] sm:$0xff]
  %v80 = vld [vmem:[%s0 + $0x1b0] sm:$0xff]
  %v81 = vld [vmem:[%s0 + $0x1b8] sm:$0xff]
  %v82 = vld [vmem:[%s0 + $0x1c0] sm:$0xff]
  %v83 = vld [vmem:[%s0 + $0x1c8] sm:$0xff]
  %v84 = vld [vmem:[%s0 + $0x1d0] sm:$0xff]
  %v85 = vld [vmem:[%s0 + $0x1d8] sm:$0xff]
  %v86 = vld [vmem:[%s0 + $0x1e0] sm:$0xff]
  %v87 = vld [vmem:[%s0 + $0x1e8] sm:$0xff]
  %v88 = vld [vmem:[%s0 + $0x1f0] sm:$0xff]
  %v89 = vld [vmem:[%s0 + $0x1f8] sm:$0xff]
  %v90 = vld [vmem:[%s0 + $0x200] sm:$0xff]
  %v91 = vld [vmem:[%s0 + $0x208] sm:$0xff]
  %v92 = vld [vmem:[%s0 + $0x210] sm:$0xff]
  %v93 = vld [vmem:[%s0 + $0x218] sm:$0xff]
  %v94 = vld [vmem:[%s0 + $0x220] sm:$0xff]
  %v95 = vld [vmem:[%s0 + $0x228] sm:$0xff]
  %v96 = vld [vmem:[%s0 + $0x230] sm:$0xff]
  %v97 = vld [vmem:[%s0 + $0x238] sm:$0xff]
  %v98 = vld [vmem:[%s0 + $0x240] sm:$0xff]
  %v99 = vld [vmem:[%s0 + $0x248] sm:$0xff]
  %v100 = vld [vmem:[%s0 + $0x250] sm:$0xff]
  %v101 = vld [vmem:[%s0 + $0x258] sm:$0xff]
  %v102 = vld [vmem:[%s0 + $0x260] sm:$0xff]
  %v103 = vld [vmem:[%s0 + $0x268] sm:$0xff]
  %v104 = vld [vmem:[%s0 + $0x270] sm:$0xff]
  %v105 = vld [vmem:[%s0 + $0x278] sm:$0xff]
  %v106 = vld [vmem:[%s0 + $0x280] sm:$0xff]
  %v107 = vld [vmem:[%s0 + $0x288] sm:$0xff]
  %v108 = vld [vmem:[%s0 + $0x290] sm:$0xff]
  %v109 = vld [vmem:[%s0 + $0x298] sm:$0xff]
  %v110 = vld [vmem:[%s0 + $0x2a0] sm:$0xff]
  %v111 = vld [vmem:[%s0 + $0x2a8] sm:$0xff]
  %v112 = vld [vmem:[%s0 + $0x2b0] sm:$0xff]
  %v113 = vld [vmem:[%s0 + $0x2b8] sm:$0xff]
  %v114 = vld [vmem:[%s0 + $0x2c0] sm:$0xff]
  %v115 = vld [vmem:[%s0 + $0x2c8] sm:$0xff]
  %v116 = vld [vmem:[%s0 + $0x2d0] sm:$0xff]
  %v117 = vld [vmem:[%s0 + $0x2d8] sm:$0xff]
  %v118 = vld [vmem:[%s0 + $0x2e0] sm:$0xff]
  %v119 = vld [vmem:[%s0 + $0x2e8] sm:$0xff]
  %v120 = vld [vmem:[%s0 + $0x2f0] sm:$0xff]
  %v121 = vld [vmem:[%s0 + $0x2f8] sm:$0xff]
  %v122 = vld [vmem:[%s0 + $0x300] sm:$0xff]
  %v123 = vld [vmem:[%s0 + $0x308] sm:$0xff]
  %v124 = vld [vmem:[%s0 + $0x310] sm:$0xff]
  %v125 = vld [vmem:[%s0 + $0x318] sm:$0xff]
  %v126 = vld [vmem:[%s0 + $0x320] sm:$0xff]
  %v127 = vld [vmem:[%s0 + $0x328] sm:$0xff]
  %v128 = vld [vmem:[%s0 + $0x330] sm:$0xff]
  %v129 = vld [vmem:[%s0 + $0x338] sm:$0xff]
  %v130 = vld [vmem:[%s0 + $0x340] sm:$0xff]
  %v131 = vld [vmem:[%s0 + $0x348] sm:$0xff]
  %v132 = vld [vmem:[%s0 + $0x350] sm:$0xff]
  %v133 = vld [vmem:[%s0 + $0x358] sm:$0xff]
  %v134 = vld [vmem:[%s0 + $0x360] sm:$0xff]
  %v135 = vld [vmem:[%s0 + $0x368] sm:$0xff]
  %v136 = vld [vmem:[%s0 + $0x370] sm:$0xff]
  %v137 = vld [vmem:[%s0 + $0x378] sm:$0xff]
  %v138 = vld [vmem:[%s0 + $0x380] sm:$0xff]
  %v139 = vld [vmem:[%s0 + $0x388] sm:$0xff]
  %v140 = vld [vmem:[%s0 + $0x390] sm:$0xff]
  %v141 = vld [vmem:[%s0 + $0x398] sm:$0xff]
  %v142 = vld [vmem:[%s0 + $0x3a0] sm:$0xff]
  %v143 = vld [vmem:[%s0 + $0x3a8] sm:$0xff]
  %v144 = vld [vmem:[%s0 + $0x3b0] sm:$0xff]
  %v145 = vld [vmem:[%s0 + $0x3b8] sm:$0xff]
  %v146 = vld [vmem:[%s0 + $0x3c0] sm:$0xff]
  %v147 = vld [vmem:[%s0 + $0x3c8] sm:$0xff]
  %v148 = vld [vmem:[%s0 + $0x3d0] sm:$0xff]
  %v149 = vld [vmem:[%s0 + $0x3d8] sm:$0xff]
  %v150 = vld [vmem:[%s0 + $0x3e0] sm:$0xff]
  %v151 = vld [vmem:[%s0 + $0x3e8] sm:$0xff]
  %v152 = vld [vmem:[%s0 + $0x3f0] sm:$0xff]
  %v153 = vld [vmem:[%s0 + $0x3f8] sm:$0xff]
  %v154 = vld [vmem:[%s1] sm:$0xff]
  %v155 = vld [vmem:[%s1 + $0x8] sm:$0xff]
  %v156 = vld [vmem:[%s1 + $0x10] sm:$0xff]
  %v157 = vld [vmem:[%s1 + $0x18] sm:$0xff]
  %v158 = vld [vmem:[%s1 + $0x20] sm:$0xff]
  %v159 = vld [vmem:[%s1 + $0x28] sm:$0xff]
  %v160 = vld [vmem:[%s1 + $0x30] sm:$0xff]
  %v161 = vld [vmem:[%s1 + $0x38] sm:$0xff]
  %v162 = vld [vmem:[%s1 + $0x40] sm:$0xff]
  %v163 = vld [vmem:[%s1 + $0x48] sm:$0xff]
  %v164 = vld [vmem:[%s1 + $0x50] sm:$0xff]
  %v165 = vld [vmem:[%s1 + $0x58] sm:$0xff]
  %v166 = vld [vmem:[%s1 + $0x60] sm:$0xff]
  %v167 = vld [vmem:[%s1 + $0x68] sm:$0xff]
  %v168 = vld [vmem:[%s1 + $0x70] sm:$0xff]
  %v169 = vld [vmem:[%s1 + $0x78] sm:$0xff]
  %v170 = vld [vmem:[%s1 + $0x80] sm:$0xff]
  %v171 = vld [vmem:[%s1 + $0x88] sm:$0xff]
  %v172 = vld [vmem:[%s1 + $0x90] sm:$0xff]
  %v173 = vld [vmem:[%s1 + $0x98] sm:$0xff]
  %v174 = vld [vmem:[%s1 + $0xa0] sm:$0xff]
  %v175 = vld [vmem:[%s1 + $0xa8] sm:$0xff]
  %v176 = vld [vmem:[%s1 + $0xb0] sm:$0xff]
  %v177 = vld [vmem:[%s1 + $0xb8] sm:$0xff]
  %v178 = vld [vmem:[%s1 + $0xc0] sm:$0xff]
  %v179 = vld [vmem:[%s1 + $0xc8] sm:$0xff]
  %v180 = vld [vmem:[%s1 + $0xd0] sm:$0xff]
  %v181 = vld [vmem:[%s1 + $0xd8] sm:$0xff]
  %v182 = vld [vmem:[%s1 + $0xe0] sm:$0xff]
  %v183 = vld [vmem:[%s1 + $0xe8] sm:$0xff]
  %v184 = vld [vmem:[%s1 + $0xf0] sm:$0xff]
  %v185 = vld [vmem:[%s1 + $0xf8] sm:$0xff]
  %186 = vmatprep.subr.mxu0 0.0
  %187 = vmatpush1.msra.mxu0 %v154
  %188 = vmatprep.subr.mxu0 0.0
  %189 = vmatpush1.msra.mxu0 %v155
  %190 = vmatprep.subr.mxu0 0.0
  %191 = vmatpush1.msra.mxu0 %v156
  %192 = vmatprep.subr.mxu0 0.0
  %193 = vmatpush1.msra.mxu0 %v157
  %194 = vmatprep.subr.mxu0 0.0
  %195 = vmatpush1.msra.mxu0 %v158
  %196 = vmatprep.subr.mxu0 0.0
  %197 = vmatpush1.msra.mxu0 %v159
  %198 = vmatprep.subr.mxu0 0.0
  %199 = vmatpush1.msra.mxu0 %v160
  %200 = vmatprep.subr.mxu0 0.0
  %201 = vmatpush1.msra.mxu0 %v161
  %202 = vmatprep.subr.mxu0 0.0
  %203 = vmatpush1.msra.mxu0 %v162
  %204 = vmatprep.subr.mxu0 0.0
  %205 = vmatpush1.msra.mxu0 %v163
  %206 = vmatprep.subr.mxu0 0.0
  %207 = vmatpush1.msra.mxu0 %v164
  %208 = vmatprep.subr.mxu0 0.0
  %209 = vmatpush1.msra.mxu0 %v165
  %210 = vmatprep.subr.mxu0 0.0
  %211 = vmatpush1.msra.mxu0 %v166
  %212 = vmatprep.subr.mxu0 0.0
  %213 = vmatpush1.msra.mxu0 %v167
  %214 = vmatprep.subr.mxu0 0.0
  %215 = vmatpush1.msra.mxu0 %v168
  %216 = vmatprep.subr.mxu0 0.0
  %217 = vmatpush1.msra.mxu0 %v169
  %218 = vmatprep.subr.mxu0 0.0
  %219 = vmatpush1.msra.mxu0 %v170
  %220 = vmatprep.subr.mxu0 0.0
  %221 = vmatpush1.msra.mxu0 %v171
  %222 = vmatprep.subr.mxu0 0.0
  %223 = vmatpush1.msra.mxu0 %v172
  %224 = vmatprep.subr.mxu0 0.0
  %225 = vmatpush1.msra.mxu0 %v173
  %226 = vmatprep.subr.mxu0 0.0
  %227 = vmatpush1.msra.mxu0 %v174
  %228 = vmatprep.subr.mxu0 0.0
  %229 = vmatpush1.msra.mxu0 %v175
  %230 = vmatprep.subr.mxu0 0.0
  %231 = vmatpush1.msra.mxu0 %v176
  %232 = vmatprep.subr.mxu0 0.0
  %233 = vmatpush1.msra.mxu0 %v177
  %234 = vmatprep.subr.mxu0 0.0
  %235 = vmatpush1.msra.mxu0 %v178
  %236 = vmatprep.subr.mxu0 0.0
  %237 = vmatpush1.msra.mxu0 %v179
  %238 = vmatprep.subr.mxu0 0.0
  %239 = vmatpush1.msra.mxu0 %v180
  %240 = vmatprep.subr.mxu0 0.0
  %241 = vmatpush1.msra.mxu0 %v181
  %242 = vmatprep.subr.mxu0 0.0
  %243 = vmatpush1.msra.mxu0 %v182
  %244 = vmatprep.subr.mxu0 0.0
  %245 = vmatpush1.msra.mxu0 %v183
  %246 = vmatprep.subr.mxu0 0.0
  %247 = vmatpush1.msra.mxu0 %v184
  %248 = vmatprep.subr.mxu0 0.0
  %249 = vmatpush1.msra.mxu0 %v185
  %250 = vmatprep.mubr.f32.mxu0 %v27
  %251 = vmatmul.mubr.f32.gmra.mrb[0].mxu0 %v26
  %v252 = vpop.f32.mrb[0].mxu0
  %v253 = vadd.f32 0.0, %v252
  %v254 = vpop.f32.mrb[0].mxu0
  %255 = vmatprep.mubr.f32.mxu0 %v29
  %256 = vmatmul.mubr.f32.gmra.mrb[0].mxu0 %v28
  %v257 = vpop.f32.mrb[0].mxu0
  %v258 = vadd.f32 0.0, %v257
  %v259 = vpop.f32.mrb[0].mxu0
  %260 = vmatprep.mubr.f32.mxu0 %v31
  %261 = vmatmul.mubr.f32.gmra.mrb[0].mxu0 %v30
  %v262 = vpop.f32.mrb[0].mxu0
  %v263 = vadd.f32 0.0, %v262
  %v264 = vpop.f32.mrb[0].mxu0
  %265 = vmatprep.mubr.f32.mxu0 %v33
  %266 = vmatmul.mubr.f32.gmra.mrb[0].mxu0 %v32
  %v267 = vpop.f32.mrb[0].mxu0
  %v268 = vadd.f32 0.0, %v267
  %v269 = vpop.f32.mrb[0].mxu0
  %270 = vmatprep.mubr.f32.mxu0 %v35
  %271 = vmatmul.mubr.f32.gmra.mrb[0].mxu0 %v34
  %v272 = vpop.f32.mrb[0].mxu0
  %v273 = vadd.f32 0.0, %v272
  %v274 = vpop.f32.mrb[0].mxu0
  %275 = vmatprep.mubr.f32.mxu0 %v37
  %276 = vmatmul.mubr.f32.gmra.mrb[0].mxu0 %v36
  %v277 = vpop.f32.mrb[0].mxu0
  %v278 = vadd.f32 0.0, %v277
  %v279 = vpop.f32.mrb[0].mxu0
  %280 = vmatprep.mubr.f32.mxu0 %v39
  %281 = vmatmul.mubr.f32.gmra.mrb[0].mxu0 %v38
  %v282 = vpop.f32.mrb[0].mxu0
  %v283 = vadd.f32 0.0, %v282
  %v284 = vpop.f32.mrb[0].mxu0
  %285 = vmatprep.mubr.f32.mxu0 %v41
  %286 = vmatmul.mubr.f32.gmra.mrb[0].mxu0 %v40
  %v287 = vpop.f32.mrb[0].mxu0
  %v288 = vadd.f32 0.0, %v287
  %v289 = vpop.f32.mrb[0].mxu0
  %290 = vmatprep.mubr.f32.mxu0 %v43
  %291 = vmatmul.mubr.f32.gmra.mrb[0].mxu0 %v42
  %v292 = vpop.f32.mrb[0].mxu0
  %v293 = vadd.f32 0.0, %v292
  %v294 = vpop.f32.mrb[0].mxu0
  %295 = vmatprep.mubr.f32.mxu0 %v45
  %296 = vmatmul.mubr.f32.gmra.mrb[0].mxu0 %v44
  %v297 = vpop.f32.mrb[0].mxu0
  %v298 = vadd.f32 0.0, %v297
  %v299 = vpop.f32.mrb[0].mxu0
  %300 = vmatprep.mubr.f32.mxu0 %v47
  %301 = vmatmul.mubr.f32.gmra.mrb[0].mxu0 %v46
  %v302 = vpop.f32.mrb[0].mxu0
  %v303 = vadd.f32 0.0, %v302
  %v304 = vpop.f32.mrb[0].mxu0
  %305 = vmatprep.mubr.f32.mxu0 %v49
  %306 = vmatmul.mubr.f32.gmra.mrb[0].mxu0 %v48
  %v307 = vpop.f32.mrb[0].mxu0
  %v308 = vadd.f32 0.0, %v307
  %v309 = vpop.f32.mrb[0].mxu0
  %310 = vmatprep.mubr.f32.mxu0 %v51
  %311 = vmatmul.mubr.f32.gmra.mrb[0].mxu0 %v50
  %v312 = vpop.f32.mrb[0].mxu0
  %v313 = vadd.f32 0.0, %v312
  %v314 = vpop.f32.mrb[0].mxu0
  %315 = vmatprep.mubr.f32.mxu0 %v53
  %316 = vmatmul.mubr.f32.gmra.mrb[0].mxu0 %v52
  %v317 = vpop.f32.mrb[0].mxu0
  %v318 = vadd.f32 0.0, %v317
  %v319 = vpop.f32.mrb[0].mxu0
  %320 = vmatprep.mubr.f32.mxu0 %v55
  %321 = vmatmul.mubr.f32.gmra.mrb[0].mxu0 %v54
  %v322 = vpop.f32.mrb[0].mxu0
  %v323 = vadd.f32 0.0, %v322
  %v324 = vpop.f32.mrb[0].mxu0
  %325 = vmatprep.mubr.f32.mxu0 %v57
  %326 = vmatmul.mubr.f32.gmra.mrb[0].mxu0 %v56
  %v327 = vpop.f32.mrb[0].mxu0
  %v328 = vadd.f32 0.0, %v327
  %v329 = vpop.f32.mrb[0].mxu0
  %330 = vmatprep.mubr.f32.mxu0 %v59
  %331 = vmatmul.mubr.f32.gmra.mrb[0].mxu0 %v58
  %v332 = vpop.f32.mrb[0].mxu0
  %v333 = vadd.f32 0.0, %v332
  %v334 = vpop.f32.mrb[0].mxu0
  %335 = vmatprep.mubr.f32.mxu0 %v61
  %336 = vmatmul.mubr.f32.gmra.mrb[0].mxu0 %v60
  %v337 = vpop.f32.mrb[0].mxu0
  %v338 = vadd.f32 0.0, %v337
  %v339 = vpop.f32.mrb[0].mxu0
  %340 = vmatprep.mubr.f32.mxu0 %v63
  %341 = vmatmul.mubr.f32.gmra.mrb[0].mxu0 %v62
  %v342 = vpop.f32.mrb[0].mxu0
  %v343 = vadd.f32 0.0, %v342
  %v344 = vpop.f32.mrb[0].mxu0
  %345 = vmatprep.mubr.f32.mxu0 %v65
  %346 = vmatmul.mubr.f32.gmra.mrb[0].mxu0 %v64
  %v347 = vpop.f32.mrb[0].mxu0
  %v348 = vadd.f32 0.0, %v347
  %v349 = vpop.f32.mrb[0].mxu0
  %350 = vmatprep.mubr.f32.mxu0 %v67
  %351 = vmatmul.mubr.f32.gmra.mrb[0].mxu0 %v66
  %v352 = vpop.f32.mrb[0].mxu0
  %v353 = vadd.f32 0.0, %v352
  %v354 = vpop.f32.mrb[0].mxu0
  %355 = vmatprep.mubr.f32.mxu0 %v69
  %356 = vmatmul.mubr.f32.gmra.mrb[0].mxu0 %v68
  %v357 = vpop.f32.mrb[0].mxu0
  %v358 = vadd.f32 0.0, %v357
  %v359 = vpop.f32.mrb[0].mxu0
  %360 = vmatprep.mubr.f32.mxu0 %v71
  %361 = vmatmul.mubr.f32.gmra.mrb[0].mxu0 %v70
  %v362 = vpop.f32.mrb[0].mxu0
  %v363 = vadd.f32 0.0, %v362
  %v364 = vpop.f32.mrb[0].mxu0
  %365 = vmatprep.mubr.f32.mxu0 %v73
  %366 = vmatmul.mubr.f32.gmra.mrb[0].mxu0 %v72
  %v367 = vpop.f32.mrb[0].mxu0
  %v368 = vadd.f32 0.0, %v367
  %v369 = vpop.f32.mrb[0].mxu0
  %370 = vmatprep.mubr.f32.mxu0 %v75
  %371 = vmatmul.mubr.f32.gmra.mrb[0].mxu0 %v74
  %v372 = vpop.f32.mrb[0].mxu0
  %v373 = vadd.f32 0.0, %v372
  %v374 = vpop.f32.mrb[0].mxu0
  %375 = vmatprep.mubr.f32.mxu0 %v77
  %376 = vmatmul.mubr.f32.gmra.mrb[0].mxu0 %v76
  %v377 = vpop.f32.mrb[0].mxu0
  %v378 = vadd.f32 0.0, %v377
  %v379 = vpop.f32.mrb[0].mxu0
  %380 = vmatprep.mubr.f32.mxu0 %v79
  %381 = vmatmul.mubr.f32.gmra.mrb[0].mxu0 %v78
  %v382 = vpop.f32.mrb[0].mxu0
  %v383 = vadd.f32 0.0, %v382
  %v384 = vpop.f32.mrb[0].mxu0
  %385 = vmatprep.mubr.f32.mxu0 %v81
  %386 = vmatmul.mubr.f32.gmra.mrb[0].mxu0 %v80
  %v387 = vpop.f32.mrb[0].mxu0
  %v388 = vadd.f32 0.0, %v387
  %v389 = vpop.f32.mrb[0].mxu0
  %390 = vmatprep.mubr.f32.mxu0 %v83
  %391 = vmatmul.mubr.f32.gmra.mrb[0].mxu0 %v82
  %v392 = vpop.f32.mrb[0].mxu0
  %v393 = vadd.f32 0.0, %v392
  %v394 = vpop.f32.mrb[0].mxu0
  %395 = vmatprep.mubr.f32.mxu0 %v85
  %396 = vmatmul.mubr.f32.gmra.mrb[0].mxu0 %v84
  %v397 = vpop.f32.mrb[0].mxu0
  %v398 = vadd.f32 0.0, %v397
  %v399 = vpop.f32.mrb[0].mxu0
  %400 = vmatprep.mubr.f32.mxu0 %v87
  %401 = vmatmul.mubr.f32.gmra.mrb[0].mxu0 %v86
  %v402 = vpop.f32.mrb[0].mxu0
  %v403 = vadd.f32 0.0, %v402
  %v404 = vpop.f32.mrb[0].mxu0
  %405 = vmatprep.mubr.f32.mxu0 %v89
  %406 = vmatmul.mubr.f32.gmra.mrb[0].mxu0 %v88
  %v407 = vpop.f32.mrb[0].mxu0
  %v408 = vadd.f32 0.0, %v407
  %v409 = vpop.f32.mrb[0].mxu0
  %410 = vmatprep.mubr.f32.mxu0 %v91
  %411 = vmatmul.mubr.f32.gmra.mrb[0].mxu0 %v90
  %v412 = vpop.f32.mrb[0].mxu0
  %v413 = vadd.f32 0.0, %v412
  %v414 = vpop.f32.mrb[0].mxu0
  %415 = vmatprep.mubr.f32.mxu0 %v93
  %416 = vmatmul.mubr.f32.gmra.mrb[0].mxu0 %v92
  %v417 = vpop.f32.mrb[0].mxu0
  %v418 = vadd.f32 0.0, %v417
  %v419 = vpop.f32.mrb[0].mxu0
  %420 = vmatprep.mubr.f32.mxu0 %v95
  %421 = vmatmul.mubr.f32.gmra.mrb[0].mxu0 %v94
  %v422 = vpop.f32.mrb[0].mxu0
  %v423 = vadd.f32 0.0, %v422
  %v424 = vpop.f32.mrb[0].mxu0
  %425 = vmatprep.mubr.f32.mxu0 %v97
  %426 = vmatmul.mubr.f32.gmra.mrb[0].mxu0 %v96
  %v427 = vpop.f32.mrb[0].mxu0
  %v428 = vadd.f32 0.0, %v427
  %v429 = vpop.f32.mrb[0].mxu0
  %430 = vmatprep.mubr.f32.mxu0 %v99
  %431 = vmatmul.mubr.f32.gmra.mrb[0].mxu0 %v98
  %v432 = vpop.f32.mrb[0].mxu0
  %v433 = vadd.f32 0.0, %v432
  %v434 = vpop.f32.mrb[0].mxu0
  %435 = vmatprep.mubr.f32.mxu0 %v101
  %436 = vmatmul.mubr.f32.gmra.mrb[0].mxu0 %v100
  %v437 = vpop.f32.mrb[0].mxu0
  %v438 = vadd.f32 0.0, %v437
  %v439 = vpop.f32.mrb[0].mxu0
  %440 = vmatprep.mubr.f32.mxu0 %v103
  %441 = vmatmul.mubr.f32.gmra.mrb[0].mxu0 %v102
  %v442 = vpop.f32.mrb[0].mxu0
  %v443 = vadd.f32 0.0, %v442
  %v444 = vpop.f32.mrb[0].mxu0
  %445 = vmatprep.mubr.f32.mxu0 %v105
  %446 = vmatmul.mubr.f32.gmra.mrb[0].mxu0 %v104
  %v447 = vpop.f32.mrb[0].mxu0
  %v448 = vadd.f32 0.0, %v447
  %v449 = vpop.f32.mrb[0].mxu0
  %450 = vmatprep.mubr.f32.mxu0 %v107
  %451 = vmatmul.mubr.f32.gmra.mrb[0].mxu0 %v106
  %v452 = vpop.f32.mrb[0].mxu0
  %v453 = vadd.f32 0.0, %v452
  %v454 = vpop.f32.mrb[0].mxu0
  %455 = vmatprep.mubr.f32.mxu0 %v109
  %456 = vmatmul.mubr.f32.gmra.mrb[0].mxu0 %v108
  %v457 = vpop.f32.mrb[0].mxu0
  %v458 = vadd.f32 0.0, %v457
  %v459 = vpop.f32.mrb[0].mxu0
  %460 = vmatprep.mubr.f32.mxu0 %v111
  %461 = vmatmul.mubr.f32.gmra.mrb[0].mxu0 %v110
  %v462 = vpop.f32.mrb[0].mxu0
  %v463 = vadd.f32 0.0, %v462
  %v464 = vpop.f32.mrb[0].mxu0
  %465 = vmatprep.mubr.f32.mxu0 %v113
  %466 = vmatmul.mubr.f32.gmra.mrb[0].mxu0 %v112
  %v467 = vpop.f32.mrb[0].mxu0
  %v468 = vadd.f32 0.0, %v467
  %v469 = vpop.f32.mrb[0].mxu0
  %470 = vmatprep.mubr.f32.mxu0 %v115
  %471 = vmatmul.mubr.f32.gmra.mrb[0].mxu0 %v114
  %v472 = vpop.f32.mrb[0].mxu0
  %v473 = vadd.f32 0.0, %v472
  %v474 = vpop.f32.mrb[0].mxu0
  %475 = vmatprep.mubr.f32.mxu0 %v117
  %476 = vmatmul.mubr.f32.gmra.mrb[0].mxu0 %v116
  %v477 = vpop.f32.mrb[0].mxu0
  %v478 = vadd.f32 0.0, %v477
  %v479 = vpop.f32.mrb[0].mxu0
  %480 = vmatprep.mubr.f32.mxu0 %v119
  %481 = vmatmul.mubr.f32.gmra.mrb[0].mxu0 %v118
  %v482 = vpop.f32.mrb[0].mxu0
  %v483 = vadd.f32 0.0, %v482
  %v484 = vpop.f32.mrb[0].mxu0
  %485 = vmatprep.mubr.f32.mxu0 %v121
  %486 = vmatmul.mubr.f32.gmra.mrb[0].mxu0 %v120
  %v487 = vpop.f32.mrb[0].mxu0
  %v488 = vadd.f32 0.0, %v487
  %v489 = vpop.f32.mrb[0].mxu0
  %490 = vmatprep.mubr.f32.mxu0 %v123
  %491 = vmatmul.mubr.f32.gmra.mrb[0].mxu0 %v122
  %v492 = vpop.f32.mrb[0].mxu0
  %v493 = vadd.f32 0.0, %v492
  %v494 = vpop.f32.mrb[0].mxu0
  %495 = vmatprep.mubr.f32.mxu0 %v125
  %496 = vmatmul.mubr.f32.gmra.mrb[0].mxu0 %v124
  %v497 = vpop.f32.mrb[0].mxu0
  %v498 = vadd.f32 0.0, %v497
  %v499 = vpop.f32.mrb[0].mxu0
  %500 = vmatprep.mubr.f32.mxu0 %v127
  %501 = vmatmul.mubr.f32.gmra.mrb[0].mxu0 %v126
  %v502 = vpop.f32.mrb[0].mxu0
  %v503 = vadd.f32 0.0, %v502
  %v504 = vpop.f32.mrb[0].mxu0
  %505 = vmatprep.mubr.f32.mxu0 %v129
  %506 = vmatmul.mubr.f32.gmra.mrb[0].mxu0 %v128
  %v507 = vpop.f32.mrb[0].mxu0
  %v508 = vadd.f32 0.0, %v507
  %v509 = vpop.f32.mrb[0].mxu0
  %510 = vmatprep.mubr.f32.mxu0 %v131
  %511 = vmatmul.mubr.f32.gmra.mrb[0].mxu0 %v130
  %v512 = vpop.f32.mrb[0].mxu0
  %v513 = vadd.f32 0.0, %v512
  %v514 = vpop.f32.mrb[0].mxu0
  %515 = vmatprep.mubr.f32.mxu0 %v133
  %516 = vmatmul.mubr.f32.gmra.mrb[0].mxu0 %v132
  %v517 = vpop.f32.mrb[0].mxu0
  %v518 = vadd.f32 0.0, %v517
  %v519 = vpop.f32.mrb[0].mxu0
  %520 = vmatprep.mubr.f32.mxu0 %v135
  %521 = vmatmul.mubr.f32.gmra.mrb[0].mxu0 %v134
  %v522 = vpop.f32.mrb[0].mxu0
  %v523 = vadd.f32 0.0, %v522
  %v524 = vpop.f32.mrb[0].mxu0
  %525 = vmatprep.mubr.f32.mxu0 %v137
  %526 = vmatmul.mubr.f32.gmra.mrb[0].mxu0 %v136
  %v527 = vpop.f32.mrb[0].mxu0
  %v528 = vadd.f32 0.0, %v527
  %v529 = vpop.f32.mrb[0].mxu0
  %530 = vmatprep.mubr.f32.mxu0 %v139
  %531 = vmatmul.mubr.f32.gmra.mrb[0].mxu0 %v138
  %v532 = vpop.f32.mrb[0].mxu0
  %v533 = vadd.f32 0.0, %v532
  %v534 = vpop.f32.mrb[0].mxu0
  %535 = vmatprep.mubr.f32.mxu0 %v141
  %536 = vmatmul.mubr.f32.gmra.mrb[0].mxu0 %v140
  %v537 = vpop.f32.mrb[0].mxu0
  %v538 = vadd.f32 0.0, %v537
  %v539 = vpop.f32.mrb[0].mxu0
  %540 = vmatprep.mubr.f32.mxu0 %v143
  %541 = vmatmul.mubr.f32.gmra.mrb[0].mxu0 %v142
  %v542 = vpop.f32.mrb[0].mxu0
  %v543 = vadd.f32 0.0, %v542
  %v544 = vpop.f32.mrb[0].mxu0
  %545 = vmatprep.mubr.f32.mxu0 %v145
  %546 = vmatmul.mubr.f32.gmra.mrb[0].mxu0 %v144
  %v547 = vpop.f32.mrb[0].mxu0
  %v548 = vadd.f32 0.0, %v547
  %v549 = vpop.f32.mrb[0].mxu0
  %550 = vmatprep.mubr.f32.mxu0 %v147
  %551 = vmatmul.mubr.f32.gmra.mrb[0].mxu0 %v146
  %v552 = vpop.f32.mrb[0].mxu0
  %v553 = vadd.f32 0.0, %v552
  %v554 = vpop.f32.mrb[0].mxu0
  %555 = vmatprep.mubr.f32.mxu0 %v149
  %556 = vmatmul.mubr.f32.gmra.mrb[0].mxu0 %v148
  %v557 = vpop.f32.mrb[0].mxu0
  %v558 = vadd.f32 0.0, %v557
  %v559 = vpop.f32.mrb[0].mxu0
  %560 = vmatprep.mubr.f32.mxu0 %v151
  %561 = vmatmul.mubr.f32.gmra.mrb[0].mxu0 %v150
  %v562 = vpop.f32.mrb[0].mxu0
  %v563 = vadd.f32 0.0, %v562
  %v564 = vpop.f32.mrb[0].mxu0
  %565 = vmatprep.mubr.f32.mxu0 %v153
  %566 = vmatmul.mubr.f32.gmra.mrb[0].mxu0 %v152
  %v567 = vpop.f32.mrb[0].mxu0
  %v568 = vadd.f32 0.0, %v567
  %v569 = vpop.f32.mrb[0].mxu0
  %570 = vdwg.mxu0
  %v571 = vmax.f32 %v253, %v333
  %v572 = vmax.f32 %v258, %v338
  %v573 = vmax.f32 %v263, %v343
  %v574 = vmax.f32 %v268, %v348
  %v575 = vmax.f32 %v273, %v353
  %v576 = vmax.f32 %v278, %v358
  %v577 = vmax.f32 %v283, %v363
  %v578 = vmax.f32 %v288, %v368
  %v579 = vmax.f32 %v293, %v373
  %v580 = vmax.f32 %v298, %v378
  %v581 = vmax.f32 %v303, %v383
  %v582 = vmax.f32 %v308, %v388
  %v583 = vmax.f32 %v313, %v393
  %v584 = vmax.f32 %v318, %v398
  %v585 = vmax.f32 %v323, %v403
  %v586 = vmax.f32 %v328, %v408
  %v587 = vmax.f32 %v413, %v493
  %v588 = vmax.f32 %v418, %v498
  %v589 = vmax.f32 %v423, %v503
  %v590 = vmax.f32 %v428, %v508
  %v591 = vmax.f32 %v433, %v513
  %v592 = vmax.f32 %v438, %v518
  %v593 = vmax.f32 %v443, %v523
  %v594 = vmax.f32 %v448, %v528
  %v595 = vmax.f32 %v453, %v533
  %v596 = vmax.f32 %v458, %v538
  %v597 = vmax.f32 %v463, %v543
  %v598 = vmax.f32 %v468, %v548
  %v599 = vmax.f32 %v473, %v553
  %v600 = vmax.f32 %v478, %v558
  %v601 = vmax.f32 %v483, %v563
  %v602 = vmax.f32 %v488, %v568
  %v603 = vmax.f32 %v571, %v587
  %v604 = vmax.f32 %v572, %v588
  %v605 = vmax.f32 %v573, %v589
  %v606 = vmax.f32 %v574, %v590
  %v607 = vmax.f32 %v575, %v591
  %v608 = vmax.f32 %v576, %v592
  %v609 = vmax.f32 %v577, %v593
  %v610 = vmax.f32 %v578, %v594
  %v611 = vmax.f32 %v579, %v595
  %v612 = vmax.f32 %v580, %v596
  %v613 = vmax.f32 %v581, %v597
  %v614 = vmax.f32 %v582, %v598
  %v615 = vmax.f32 %v583, %v599
  %v616 = vmax.f32 %v584, %v600
  %v617 = vmax.f32 %v585, %v601
  %v618 = vmax.f32 %v586, %v602
  %v619 = vld [vmem:[%s2] sm:$0x1]
  %v621 = vlaneseq
  %v622 = vshrl.u32 %v621, 7
  %v623 = vsub.s32 0, %v622
  %v624 = vrot.slane %v619, %v623
  %v626 = vadd.f32 %v603, %v624
  %v627 = vadd.f32 %v604, %v624
  %v628 = vadd.f32 %v605, %v624
  %v629 = vadd.f32 %v606, %v624
  %v630 = vadd.f32 %v607, %v624
  %v631 = vadd.f32 %v608, %v624
  %v632 = vadd.f32 %v609, %v624
  %v633 = vadd.f32 %v610, %v624
  %v634 = vadd.f32 %v611, %v624
  %v635 = vadd.f32 %v612, %v624
  %v636 = vadd.f32 %v613, %v624
  %v637 = vadd.f32 %v614, %v624
  %v638 = vadd.f32 %v615, %v624
  %v639 = vadd.f32 %v616, %v624
  %v640 = vadd.f32 %v617, %v624
  %v641 = vadd.f32 %v618, %v624
  %v642 = vmax.f32 %v626, 0.0
  %v643 = vmax.f32 %v627, 0.0
  %v644 = vmax.f32 %v628, 0.0
  %v645 = vmax.f32 %v629, 0.0
  %v646 = vmax.f32 %v630, 0.0
  %v647 = vmax.f32 %v631, 0.0
  %v648 = vmax.f32 %v632, 0.0
  %v649 = vmax.f32 %v633, 0.0
  %v650 = vmax.f32 %v634, 0.0
  %v651 = vmax.f32 %v635, 0.0
  %v652 = vmax.f32 %v636, 0.0
  %v653 = vmax.f32 %v637, 0.0
  %v654 = vmax.f32 %v638, 0.0
  %v655 = vmax.f32 %v639, 0.0
  %v656 = vmax.f32 %v640, 0.0
  %v657 = vmax.f32 %v641, 0.0
  %vm658 = vcmask 162816
  %659 = vst.msk [vmem:[#allocation2] sm:$0xff] %vm658, %v642
  %661 = vrot.lane.b32.xlu0 %v643, 20
  %v662 = vpop.permute.xlu0 %661
  %vm664 = vcmask 326816
  %665 = vst.msk [vmem:[#allocation2] sm:$0xff] %vm664, %v662
  %667 = vrot.lane.b32.xlu0 %v644, 40
  %v668 = vpop.permute.xlu0 %667
  %vm670 = vcmask 490816
  %671 = vst.msk [vmem:[#allocation2] sm:$0xff] %vm670, %v668
  %673 = vrot.lane.b32.xlu0 %v645, 60
  %v674 = vpop.permute.xlu0 %673
  %vm676 = vcmask 654816
  %677 = vst.msk [vmem:[#allocation2] sm:$0xff] %vm676, %v674
  %679 = vrot.lane.b32.xlu0 %v646, 80
  %v680 = vpop.permute.xlu0 %679
  %vm682 = vcmask 818816
  %683 = vst.msk [vmem:[#allocation2] sm:$0xff] %vm682, %v680
  %685 = vrot.lane.b32.xlu0 %v647, 100
  %v686 = vpop.permute.xlu0 %685
  %vm688 = vcmask 982816
  %689 = vst.msk [vmem:[#allocation2] sm:$0xff] %vm688, %v686
  %691 = vrot.lane.b32.xlu0 %v648, 120
  %v692 = vpop.permute.xlu0 %691
  %vm694 = vcmask 1048512
  %695 = vst.msk [vmem:[#allocation2] sm:$0xff] %vm694, %v692
  %vm696 = vcmask 97280
  %697 = vst.msk [vmem:[#allocation2 + $0x8] sm:$0xff] %vm696, %v692
  %699 = vrot.lane.b32.xlu0 %v649, 12
  %v700 = vpop.permute.xlu0 %699
  %vm702 = vcmask 261216
  %703 = vst.msk [vmem:[#allocation2 + $0x8] sm:$0xff] %vm702, %v700
  %705 = vrot.lane.b32.xlu0 %v650, 32
  %v706 = vpop.permute.xlu0 %705
  %vm708 = vcmask 425216
  %709 = vst.msk [vmem:[#allocation2 + $0x8] sm:$0xff] %vm708, %v706
  %711 = vrot.lane.b32.xlu0 %v651, 52
  %v712 = vpop.permute.xlu0 %711
  %vm714 = vcmask 589216
  %715 = vst.msk [vmem:[#allocation2 + $0x8] sm:$0xff] %vm714, %v712
  %717 = vrot.lane.b32.xlu0 %v652, 72
  %v718 = vpop.permute.xlu0 %717
  %vm720 = vcmask 753216
  %721 = vst.msk [vmem:[#allocation2 + $0x8] sm:$0xff] %vm720, %v718
  %723 = vrot.lane.b32.xlu0 %v653, 92
  %v724 = vpop.permute.xlu0 %723
  %vm726 = vcmask 917216
  %727 = vst.msk [vmem:[#allocation2 + $0x8] sm:$0xff] %vm726, %v724
  %729 = vrot.lane.b32.xlu0 %v654, 112
  %v730 = vpop.permute.xlu0 %729
  %vm732 = vcmask 1048448
  %733 = vst.msk [vmem:[#allocation2 + $0x8] sm:$0xff] %vm732, %v730
  %vm734 = vcmask 31744
  %735 = vst.msk [vmem:[#allocation2 + $0x10] sm:$0xff] %vm734, %v730
  %737 = vrot.lane.b32.xlu0 %v655, 4
  %v738 = vpop.permute.xlu0 %737
  %vm740 = vcmask 195616
  %741 = vst.msk [vmem:[#allocation2 + $0x10] sm:$0xff] %vm740, %v738
  %743 = vrot.lane.b32.xlu0 %v656, 24
  %v744 = vpop.permute.xlu0 %743
  %vm746 = vcmask 359616
  %747 = vst.msk [vmem:[#allocation2 + $0x10] sm:$0xff] %vm746, %v744
  %749 = vrot.lane.b32.xlu0 %v657, 44
  %v750 = vpop.permute.xlu0 %749
  %vm752 = vcmask 523616
  %753 = vst.msk [vmem:[#allocation2 + $0x10] sm:$0xff] %vm752, %v750
  %v754 = vld [vmem:[#allocation2] sm:$0xff]
  %v755 = vld [vmem:[#allocation2 + $0x8] sm:$0xff]
  %v756 = vld [vmem:[#allocation2 + $0x10] sm:$0xff]
  %v757 = vld [vmem:[%s3] sm:$0xff]
  %v758 = vld [vmem:[%s3 + $0x8] sm:$0xff]
  %v759 = vld [vmem:[%s3 + $0x10] sm:$0xff]
  %v760 = vld [vmem:[%s3 + $0x18] sm:$0xff]
  %v761 = vld [vmem:[%s3 + $0x20] sm:$0xff]
  %v762 = vld [vmem:[%s3 + $0x28] sm:$0xff]
  %v763 = vld [vmem:[%s3 + $0x30] sm:$0xff]
  %v764 = vld [vmem:[%s3 + $0x38] sm:$0xff]
  %v765 = vld [vmem:[%s3 + $0x40] sm:$0xff]
  %v766 = vld [vmem:[%s3 + $0x48] sm:$0xff]
  %v767 = vld [vmem:[%s3 + $0x50] sm:$0xff]
  %v768 = vld [vmem:[%s3 + $0x58] sm:$0xff]
  %v769 = vld [vmem:[%s3 + $0x60] sm:$0xff]
  %v770 = vld [vmem:[%s3 + $0x68] sm:$0xff]
  %v771 = vld [vmem:[%s3 + $0x70] sm:$0xff]
  %v772 = vld [vmem:[%s3 + $0x78] sm:$0xff]
  %v773 = vld [vmem:[%s3 + $0x80] sm:$0xff]
  %v774 = vld [vmem:[%s3 + $0x88] sm:$0xff]
  %v775 = vld [vmem:[%s3 + $0x90] sm:$0xff]
  %v776 = vld [vmem:[%s3 + $0x98] sm:$0xff]
  %v777 = vld [vmem:[%s3 + $0xa0] sm:$0xff]
  %v778 = vld [vmem:[%s3 + $0xa8] sm:$0xff]
  %v779 = vld [vmem:[%s3 + $0xb0] sm:$0xff]
  %v780 = vld [vmem:[%s3 + $0xb8] sm:$0xff]
  %v781 = vld [vmem:[%s3 + $0xc0] sm:$0xff]
  %v782 = vld [vmem:[%s3 + $0xc8] sm:$0xff]
  %v783 = vld [vmem:[%s3 + $0xd0] sm:$0xff]
  %v784 = vld [vmem:[%s3 + $0xd8] sm:$0xff]
  %v785 = vld [vmem:[%s3 + $0xe0] sm:$0xff]
  %v786 = vld [vmem:[%s3 + $0xe8] sm:$0xff]
  %v787 = vld [vmem:[%s3 + $0xf0] sm:$0xff]
  %v788 = vld [vmem:[%s3 + $0xf8] sm:$0xff]
  %v789 = vld [vmem:[%s3 + $0x100] sm:$0xff]
  %v790 = vld [vmem:[%s3 + $0x108] sm:$0xff]
  %v791 = vld [vmem:[%s3 + $0x110] sm:$0xff]
  %v792 = vld [vmem:[%s3 + $0x118] sm:$0xff]
  %v793 = vld [vmem:[%s3 + $0x120] sm:$0xff]
  %v794 = vld [vmem:[%s3 + $0x128] sm:$0xff]
  %v795 = vld [vmem:[%s3 + $0x130] sm:$0xff]
  %v796 = vld [vmem:[%s3 + $0x138] sm:$0xff]
  %v797 = vld [vmem:[%s4] sm:$0x1]
  %v799 = vlaneseq
  %v800 = vshrl.u32 %v799, 7
  %v801 = vsub.s32 0, %v800
  %v802 = vrot.slane %v797, %v801
  %vm804 = vcmask 523264
  %v806 = vsel %vm804, %v756, 0
  %808 = vmatprep.subr.mxu0 0.0
  %809 = vmatpush1.msra.mxu0 %v757
  %810 = vmatprep.subr.mxu0 0.0
  %811 = vmatpush1.msra.mxu0 %v758
  %812 = vmatprep.subr.mxu0 0.0
  %813 = vmatpush1.msra.mxu0 %v759
  %814 = vmatprep.subr.mxu0 0.0
  %815 = vmatpush1.msra.mxu0 %v760
  %816 = vmatprep.subr.mxu0 0.0
  %817 = vmatpush1.msra.mxu0 %v761
  %818 = vmatprep.subr.mxu0 0.0
  %819 = vmatpush1.msra.mxu0 %v762
  %820 = vmatprep.subr.mxu0 0.0
  %821 = vmatpush1.msra.mxu0 %v763
  %822 = vmatprep.subr.mxu0 0.0
  %823 = vmatpush1.msra.mxu0 %v764
  %824 = vmatprep.subr.mxu0 0.0
  %825 = vmatpush1.msra.mxu0 %v765
  %826 = vmatprep.subr.mxu0 0.0
  %827 = vmatpush1.msra.mxu0 %v766
  %828 = vmatprep.subr.mxu0 0.0
  %829 = vmatpush1.msra.mxu0 %v767
  %830 = vmatprep.subr.mxu0 0.0
  %831 = vmatpush1.msra.mxu0 %v768
  %832 = vmatprep.subr.mxu0 0.0
  %833 = vmatpush1.msra.mxu0 %v769
  %834 = vmatprep.subr.mxu0 0.0
  %835 = vmatpush1.msra.mxu0 %v770
  %836 = vmatprep.subr.mxu0 0.0
  %837 = vmatpush1.msra.mxu0 %v771
  %838 = vmatprep.subr.mxu0 0.0
  %839 = vmatpush1.msra.mxu0 %v772
  %840 = vmatprep.subr.mxu0 0.0
  %841 = vmatpush1.msra.mxu0 %v773
  %842 = vmatprep.subr.mxu0 0.0
  %843 = vmatpush1.msra.mxu0 %v774
  %844 = vmatprep.subr.mxu0 0.0
  %845 = vmatpush1.msra.mxu0 %v775
  %846 = vmatprep.subr.mxu0 0.0
  %847 = vmatpush1.msra.mxu0 %v776
  %848 = vmatprep.subr.mxu0 0.0
  %849 = vmatpush1.msra.mxu0 %v777
  %850 = vmatprep.subr.mxu0 0.0
  %851 = vmatpush1.msra.mxu0 %v778
  %852 = vmatprep.subr.mxu0 0.0
  %853 = vmatpush1.msra.mxu0 %v779
  %854 = vmatprep.subr.mxu0 0.0
  %855 = vmatpush1.msra.mxu0 %v780
  %856 = vmatprep.subr.mxu0 0.0
  %857 = vmatpush1.msra.mxu0 %v781
  %858 = vmatprep.subr.mxu0 0.0
  %859 = vmatpush1.msra.mxu0 %v782
  %860 = vmatprep.subr.mxu0 0.0
  %861 = vmatpush1.msra.mxu0 %v783
  %862 = vmatprep.subr.mxu0 0.0
  %863 = vmatpush1.msra.mxu0 %v784
  %864 = vmatprep.subr.mxu0 0.0
  %865 = vmatpush1.msra.mxu0 %v785
  %866 = vmatprep.subr.mxu0 0.0
  %867 = vmatpush1.msra.mxu0 %v786
  %868 = vmatprep.subr.mxu0 0.0
  %869 = vmatpush1.msra.mxu0 %v787
  %870 = vmatprep.subr.mxu0 0.0
  %871 = vmatpush1.msra.mxu0 %v788
  %872 = vmatprep.mubr.f32.mxu0 %v755
  %873 = vmatmul.mubr.f32.gmra.mrb[0].mxu0 %v754
  %v874 = vpop.f32.mrb[0].mxu0
  %v875 = vadd.f32 %v802, %v874
  %v876 = vpop.f32.mrb[0].mxu0
  %877 = vdwg.mxu0
  %878 = vmatprep.subr.mxu0 0.0
  %879 = vmatpush1.msra.mxu0 %v789
  %880 = vmatprep.subr.mxu0 0.0
  %881 = vmatpush1.msra.mxu0 %v790
  %882 = vmatprep.subr.mxu0 0.0
  %883 = vmatpush1.msra.mxu0 %v791
  %884 = vmatprep.subr.mxu0 0.0
  %885 = vmatpush1.msra.mxu0 %v792
  %886 = vmatprep.subr.mxu0 0.0
  %887 = vmatpush1.msra.mxu0 %v793
  %888 = vmatprep.subr.mxu0 0.0
  %889 = vmatpush1.msra.mxu0 %v794
  %890 = vmatprep.subr.mxu0 0.0
  %891 = vmatpush1.msra.mxu0 %v795
  %892 = vmatprep.subr.mxu0 0.0
  %893 = vmatpush1.msra.mxu0 %v796
  %894 = vmatprep.subr.mxu0 0.0
  %895 = vmatpush1.msra.mxu0 0.0
  %896 = vmatprep.subr.mxu0 0.0
  %897 = vmatpush1.msra.mxu0 0.0
  %898 = vmatprep.subr.mxu0 0.0
  %899 = vmatpush1.msra.mxu0 0.0
  %900 = vmatprep.subr.mxu0 0.0
  %901 = vmatpush1.msra.mxu0 0.0
  %902 = vmatprep.subr.mxu0 0.0
  %903 = vmatpush1.msra.mxu0 0.0
  %904 = vmatprep.subr.mxu0 0.0
  %905 = vmatpush1.msra.mxu0 0.0
  %906 = vmatprep.subr.mxu0 0.0
  %907 = vmatpush1.msra.mxu0 0.0
  %908 = vmatprep.subr.mxu0 0.0
  %909 = vmatpush1.msra.mxu0 0.0
  %910 = vmatprep.subr.mxu0 0.0
  %911 = vmatpush1.msra.mxu0 0.0
  %912 = vmatprep.subr.mxu0 0.0
  %913 = vmatpush1.msra.mxu0 0.0
  %914 = vmatprep.subr.mxu0 0.0
  %915 = vmatpush1.msra.mxu0 0.0
  %916 = vmatprep.subr.mxu0 0.0
  %917 = vmatpush1.msra.mxu0 0.0
  %918 = vmatprep.subr.mxu0 0.0
  %919 = vmatpush1.msra.mxu0 0.0
  %920 = vmatprep.subr.mxu0 0.0
  %921 = vmatpush1.msra.mxu0 0.0
  %922 = vmatprep.subr.mxu0 0.0
  %923 = vmatpush1.msra.mxu0 0.0
  %924 = vmatprep.subr.mxu0 0.0
  %925 = vmatpush1.msra.mxu0 0.0
  %926 = vmatprep.subr.mxu0 0.0
  %927 = vmatpush1.msra.mxu0 0.0
  %928 = vmatprep.subr.mxu0 0.0
  %929 = vmatpush1.msra.mxu0 0.0
  %930 = vmatprep.subr.mxu0 0.0
  %931 = vmatpush1.msra.mxu0 0.0
  %932 = vmatprep.subr.mxu0 0.0
  %933 = vmatpush1.msra.mxu0 0.0
  %934 = vmatprep.subr.mxu0 0.0
  %935 = vmatpush1.msra.mxu0 0.0
  %936 = vmatprep.subr.mxu0 0.0
  %937 = vmatpush1.msra.mxu0 0.0
  %938 = vmatprep.subr.mxu0 0.0
  %939 = vmatpush1.msra.mxu0 0.0
  %940 = vmatprep.subr.mxu0 0.0
  %941 = vmatpush1.msra.mxu0 0.0
  %942 = vmatprep.mubr.f32.mxu0 0.0
  %943 = vmatmul.mubr.f32.gmra.mrb[0].mxu0 %v806
  %v944 = vpop.f32.mrb[0].mxu0
  %v945 = vadd.f32 %v875, %v944
  %v946 = vpop.f32.mrb[0].mxu0
  %947 = vdwg.mxu0
  %v948 = vmax.f32 %v945, 0.0
  %v949 = vld [vmem:[%s5] sm:$0xff]
  %v950 = vld [vmem:[%s5 + $0x8] sm:$0xff]
  %v951 = vld [vmem:[%s5 + $0x10] sm:$0xff]
  %v952 = vld [vmem:[%s5 + $0x18] sm:$0xff]
  %v953 = vld [vmem:[%s5 + $0x20] sm:$0xff]
  %v954 = vld [vmem:[%s5 + $0x28] sm:$0xff]
  %v955 = vld [vmem:[%s5 + $0x30] sm:$0x3]
  %v956 = vld [vmem:[%s6] sm:$0x1]
  %v958 = vlaneseq
  %v959 = vshrl.u32 %v958, 7
  %v960 = vsub.s32 0, %v959
  %v961 = vrot.slane %v956, %v960
  %vm963 = vcmask 408576
  %v965 = vsel %vm963, %v948, 0
  %vm967 = vcmask 1041408
  %v969 = vsel %vm967, %v955, 0
  %971 = vmatprep.subr.mxu0 0.0
  %972 = vmatpush1.msra.mxu0 %v949
  %973 = vmatprep.subr.mxu0 0.0
  %974 = vmatpush1.msra.mxu0 %v950
  %975 = vmatprep.subr.mxu0 0.0
  %976 = vmatpush1.msra.mxu0 %v951
  %977 = vmatprep.subr.mxu0 0.0
  %978 = vmatpush1.msra.mxu0 %v952
  %979 = vmatprep.subr.mxu0 0.0
  %980 = vmatpush1.msra.mxu0 %v953
  %981 = vmatprep.subr.mxu0 0.0
  %982 = vmatpush1.msra.mxu0 %v954
  %983 = vmatprep.subr.mxu0 0.0
  %984 = vmatpush1.msra.mxu0 %v969
  %985 = vmatprep.subr.mxu0 0.0
  %986 = vmatpush1.msra.mxu0 0.0
  %987 = vmatprep.subr.mxu0 0.0
  %988 = vmatpush1.msra.mxu0 0.0
  %989 = vmatprep.subr.mxu0 0.0
  %990 = vmatpush1.msra.mxu0 0.0
  %991 = vmatprep.subr.mxu0 0.0
  %992 = vmatpush1.msra.mxu0 0.0
  %993 = vmatprep.subr.mxu0 0.0
  %994 = vmatpush1.msra.mxu0 0.0
  %995 = vmatprep.subr.mxu0 0.0
  %996 = vmatpush1.msra.mxu0 0.0
  %997 = vmatprep.subr.mxu0 0.0
  %998 = vmatpush1.msra.mxu0 0.0
  %999 = vmatprep.subr.mxu0 0.0
  %1000 = vmatpush1.msra.mxu0 0.0
  %1001 = vmatprep.subr.mxu0 0.0
  %1002 = vmatpush1.msra.mxu0 0.0
  %1003 = vmatprep.subr.mxu0 0.0
  %1004 = vmatpush1.msra.mxu0 0.0
  %1005 = vmatprep.subr.mxu0 0.0
  %1006 = vmatpush1.msra.mxu0 0.0
  %1007 = vmatprep.subr.mxu0 0.0
  %1008 = vmatpush1.msra.mxu0 0.0
  %1009 = vmatprep.subr.mxu0 0.0
  %1010 = vmatpush1.msra.mxu0 0.0
  %1011 = vmatprep.subr.mxu0 0.0
  %1012 = vmatpush1.msra.mxu0 0.0
  %1013 = vmatprep.subr.mxu0 0.0
  %1014 = vmatpush1.msra.mxu0 0.0
  %1015 = vmatprep.subr.mxu0 0.0
  %1016 = vmatpush1.msra.mxu0 0.0
  %1017 = vmatprep.subr.mxu0 0.0
  %1018 = vmatpush1.msra.mxu0 0.0
  %1019 = vmatprep.subr.mxu0 0.0
  %1020 = vmatpush1.msra.mxu0 0.0
  %1021 = vmatprep.subr.mxu0 0.0
  %1022 = vmatpush1.msra.mxu0 0.0
  %1023 = vmatprep.subr.mxu0 0.0
  %1024 = vmatpush1.msra.mxu0 0.0
  %1025 = vmatprep.subr.mxu0 0.0
  %1026 = vmatpush1.msra.mxu0 0.0
  %1027 = vmatprep.subr.mxu0 0.0
  %1028 = vmatpush1.msra.mxu0 0.0
  %1029 = vmatprep.subr.mxu0 0.0
  %1030 = vmatpush1.msra.mxu0 0.0
  %1031 = vmatprep.subr.mxu0 0.0
  %1032 = vmatpush1.msra.mxu0 0.0
  %1033 = vmatprep.subr.mxu0 0.0
  %1034 = vmatpush1.msra.mxu0 0.0
  %1035 = vmatprep.mubr.f32.mxu0 0.0
  %1036 = vmatmul.mubr.f32.gmra.mrb[0].mxu0 %v965
  %v1037 = vpop.f32.mrb[0].mxu0
  %v1038 = vadd.f32 %v961, %v1037
  %v1039 = vpop.f32.mrb[0].mxu0
  %1040 = vdwg.mxu0
  %vm1041 = vcmask 80896
  %v1042 = vsel %vm1041, %v1038, -inf
  %1043 = vmax.xlane.f32.xlu0 %v1042
  %v1044 = vpop.xlane.xlu0 %1043
  %v1045 = vsub.f32 %v1038, %v1044
  %v1046 = vmul.f32 %v1045, 1.442695
  %v1047 = vpow.pop %v1046
  %v1048 = vsel %vm1041, %v1047, 0.0
  %1049 = vadd.xlane.f32.xlu0 %v1048
  %v1050 = vpop.xlane.xlu0 %1049
  %v1051 = vlog2.pop %v1050
  %v1052 = vmul.f32 %v1051, 0.6931472
  %v1053 = vadd.f32 %v1044, %v1052
  %v1054 = vlaneseq
  %v1055 = vshrl.u32 %v1054, 7
  %vm1056 = vcmp.lt.s32.totalorder %v1055, 2
  %v1057 = vsub.f32 %v1038, %v1053
  %v1058 = vsel %vm1056, %v1057, %v1038
  %1059 = vst.msk [vmem:[%s7] sm:$0xff] %vm1041, %v1058
  // Predicated region
  $region30: #{net_forward.3} parent=0 // pred_check
    _
  $region31: #{net_forward.3} parent=0 // pred_check_branch
    %1061 = sbr.rel (0) target = $region33
  $region32: #{net_forward.3} parent=0 // pred_region
    _
  $region33: #{net_forward.3} parent=0 // pred_fallthru
    _
  // Predicated region
  $region34: #{net_forward.3} parent=0 // pred_check
    _
  $region35: #{net_forward.3} parent=0 // pred_check_branch
    %1063 = sbr.rel (0) target = $region37
  $region36: #{net_forward.3} parent=0 // pred_region
    _
  $region37: #{net_forward.3} parent=0 // pred_fallthru
    _

</llo_original>
